<compile_context>
chip_gen: v5e
topology: v5e:2x2
jax: 0.10.0
libtpu: 0.0.40
codegen_flags: <defaults>
</compile_context>

<pallas_src>
import functools

import jax
import jax.numpy as jnp
from jax import lax
from jax.experimental import pallas as pl
from jax.experimental.pallas import tpu as pltpu


# ----------------------------------------------------------------------------
# Input projection kernel: (rows, D) @ (D, 8H) + bias, bf16 MXU, f32 accum.
# Gridded over row chunks (auto double-buffered by BlockSpec pipelining).
# ----------------------------------------------------------------------------
def _proj_kernel(x_ref, w_ref, b_ref, o_ref):
    x = x_ref[...].astype(jnp.bfloat16)
    y = jnp.dot(x, w_ref[...], preferred_element_type=jnp.float32) + b_ref[...]
    o_ref[...] = y


def _input_projection(x_tmaj, w_proj, b_proj):
    """(T, B, D) -> (T, B, 8H): precomputed x@W_ih + (b_ih + b_hh), both dirs."""
    T, B, D = x_tmaj.shape
    G8 = w_proj.shape[1]
    M = T * B
    x_flat = x_tmaj.reshape(M, D)

    # Pick the largest nice row chunk that divides M (keeps (8,128) rules happy).
    bm = M
    for cand in (512, 256, 128, 64, 32, 16, 8):
        if M > cand and M % cand == 0:
            bm = cand
            break

    out = pl.pallas_call(
        _proj_kernel,
        out_shape=jax.ShapeDtypeStruct((M, G8), jnp.float32),
        grid=(M // bm,),
        in_specs=[
            pl.BlockSpec((bm, D), lambda i: (i, 0)),
            pl.BlockSpec((D, G8), lambda i: (0, 0)),
            pl.BlockSpec((1, G8), lambda i: (0, 0)),
        ],
        out_specs=pl.BlockSpec((bm, G8), lambda i: (i, 0)),
        compiler_params=pltpu.CompilerParams(
            dimension_semantics=("parallel",),
            vmem_limit_bytes=32 * 1024 * 1024,
        ),
    )(x_flat, w_proj, b_proj)
    return out.reshape(T, B, G8)


# ----------------------------------------------------------------------------
# Fused bidirectional LSTM recurrence (one layer, whole sequence, one kernel)
# ----------------------------------------------------------------------------
def _bilstm_kernel(xg_ref, whh_f_ref, whh_b_ref, out_ref,
                   hf_sc, cf_sc, hb_sc, cb_sc, *, unroll):
    # xg_ref:  (T, B, 8H) f32   precomputed x@W_ih + b, fwd gates in [:, :, :4H],
    #                           bwd gates in [:, :, 4H:]   (PyTorch i,f,g,o order)
    # whh_*:   (H, 4H)    bf16  hidden-to-hidden weights (transposed)
    # out_ref: (T, B, 2H) f32   fwd hidden in [..., :H], bwd hidden in [..., H:]
    # *_sc:    (B, H)     f32   VMEM scratch state
    T = xg_ref.shape[0]
    H = whh_f_ref.shape[0]
    G = 4 * H

    hf_sc[...] = jnp.zeros_like(hf_sc)
    cf_sc[...] = jnp.zeros_like(cf_sc)
    hb_sc[...] = jnp.zeros_like(hb_sc)
    cb_sc[...] = jnp.zeros_like(cb_sc)

    def cell(gates, c_prev):
        i_g = jax.nn.sigmoid(gates[:, 0 * H:1 * H])
        f_g = jax.nn.sigmoid(gates[:, 1 * H:2 * H])
        g_g = jnp.tanh(gates[:, 2 * H:3 * H])
        o_g = jax.nn.sigmoid(gates[:, 3 * H:4 * H])
        c_new = f_g * c_prev + i_g * g_g
        h_new = o_g * jnp.tanh(c_new)
        return h_new, c_new

    def one_step(t):
        tb = T - 1 - t                      # reversed time index for bwd direction
        xg_t = xg_ref[t]                    # (B, 8H)
        xg_tb = xg_ref[tb]                  # (B, 8H)
        # Only the small h @ W_hh matmuls remain inside the serial loop.
        gf = xg_t[:, :G] + jnp.dot(hf_sc[...].astype(jnp.bfloat16), whh_f_ref[...],
                                   preferred_element_type=jnp.float32)
        gb = xg_tb[:, G:] + jnp.dot(hb_sc[...].astype(jnp.bfloat16), whh_b_ref[...],
                                    preferred_element_type=jnp.float32)
        hf, cf = cell(gf, cf_sc[...])
        hb, cb = cell(gb, cb_sc[...])
        hf_sc[...] = hf
        cf_sc[...] = cf
        hb_sc[...] = hb
        cb_sc[...] = cb
        out_ref[t, :, pl.ds(0, H)] = hf.astype(out_ref.dtype)
        out_ref[tb, :, pl.ds(H, H)] = hb.astype(out_ref.dtype)

    n_outer = T // unroll
    if n_outer <= 1:
        # Fully unrolled (small T): maximum scheduler visibility.
        for t in range(T):
            one_step(t)
    else:
        def outer(k, carry):
            base = k * unroll
            for u in range(unroll):          # manual unroll inside fori body
                one_step(base + u)
            return carry
        lax.fori_loop(0, n_outer, outer, 0)


def _bilstm_layer(xg, whh_f, whh_b):
    """(T, B, 8H) precomputed gates -> (T, B, 2H) bidirectional hidden states."""
    T, B, _ = xg.shape
    H = whh_f.shape[0]

    unroll = 1
    for cand in (8, 4, 2):
        if T % cand == 0:
            unroll = cand
            break

    cost = pl.CostEstimate(
        flops=int(16 * T * B * H * H + 12 * T * B * 2 * H),
        transcendentals=int(10 * T * B * H),
        bytes_accessed=int(xg.size * 4 + T * B * 2 * H * 4
                           + (whh_f.size + whh_b.size) * 2),
    )

    return pl.pallas_call(
        functools.partial(_bilstm_kernel, unroll=unroll),
        out_shape=jax.ShapeDtypeStruct((T, B, 2 * H), jnp.float32),
        in_specs=[pl.BlockSpec(memory_space=pltpu.MemorySpace.VMEM)] * 3,
        out_specs=pl.BlockSpec(memory_space=pltpu.MemorySpace.VMEM),
        scratch_shapes=[
            pltpu.VMEM((B, H), jnp.float32),
            pltpu.VMEM((B, H), jnp.float32),
            pltpu.VMEM((B, H), jnp.float32),
            pltpu.VMEM((B, H), jnp.float32),
        ],
        compiler_params=pltpu.CompilerParams(vmem_limit_bytes=32 * 1024 * 1024),
        cost_estimate=cost,
    )(xg, whh_f, whh_b)


# ----------------------------------------------------------------------------
# Fused FC head: (rnn_feat | trial_vec) -> Linear+ReLU chain -> logits,
# all layers in ONE pallas_call; the concat is replaced by a split weight.
# ----------------------------------------------------------------------------
def _fc_head_kernel(*refs, n_mid):
    rnn_ref, trial_ref, w0a_ref, w0b_ref, b0_ref = refs[0:5]
    out_ref = refs[-1]
    h = (jnp.dot(rnn_ref[...], w0a_ref[...], preferred_element_type=jnp.float32)
         + jnp.dot(trial_ref[...], w0b_ref[...], preferred_element_type=jnp.float32)
         + b0_ref[...])
    h = jnp.maximum(h, 0.0)
    idx = 5
    for _ in range(n_mid):
        w_ref, b_ref = refs[idx], refs[idx + 1]
        idx += 2
        h = jnp.maximum(
            jnp.dot(h, w_ref[...], preferred_element_type=jnp.float32) + b_ref[...], 0.0)
    wl_ref, bl_ref = refs[idx], refs[idx + 1]
    y = jnp.dot(h, wl_ref[...], preferred_element_type=jnp.float32) + bl_ref[...]
    out_ref[...] = y.astype(out_ref.dtype)


def _fc_head(fc_params, rnn_feat, trial_vec):
    B = rnn_feat.shape[0]
    n_class = fc_params["bl"].shape[-1]
    inputs = [rnn_feat, trial_vec,
              fc_params["w0a"], fc_params["w0b"], fc_params["b0"]]
    for w, b in fc_params["mid"]:
        inputs += [w, b]
    inputs += [fc_params["wl"], fc_params["bl"]]

    return pl.pallas_call(
        functools.partial(_fc_head_kernel, n_mid=len(fc_params["mid"])),
        out_shape=jax.ShapeDtypeStruct((B, n_class), jnp.float32),
        in_specs=[pl.BlockSpec(memory_space=pltpu.MemorySpace.VMEM)] * len(inputs),
        out_specs=pl.BlockSpec(memory_space=pltpu.MemorySpace.VMEM),
        compiler_params=pltpu.CompilerParams(vmem_limit_bytes=32 * 1024 * 1024),
    )(*inputs)


# ----------------------------------------------------------------------------
# Parameter init (deterministic, PyTorch-like uniform bounds)
# ----------------------------------------------------------------------------
def init_params(key, input_size, rnn_hidden, rnn_layers, fc_hidden, fc_layers,
                nClass=57, trial_dim=110):
    H = rnn_hidden
    params = {"rnns": [], "fc": None}

    for i in range(rnn_layers):
        d_in = input_size if i == 0 else 2 * H
        bound = 1.0 / float(H) ** 0.5
        key, kf1, kf2, kf3, kf4, kb1, kb2, kb3, kb4 = jax.random.split(key, 9)

        def u(k, shape):
            return jax.random.uniform(k, shape, jnp.float32, -bound, bound)

        wih_f, whh_f = u(kf1, (4 * H, d_in)), u(kf2, (4 * H, H))
        bih_f, bhh_f = u(kf3, (4 * H,)), u(kf4, (4 * H,))
        wih_b, whh_b = u(kb1, (4 * H, d_in)), u(kb2, (4 * H, H))
        bih_b, bhh_b = u(kb3, (4 * H,)), u(kb4, (4 * H,))

        params["rnns"].append({
            # (D, 8H): fwd gate columns then bwd gate columns — one 256-wide matmul.
            "w_proj": jnp.concatenate([wih_f.T, wih_b.T], axis=1).astype(jnp.bfloat16),
            # Combined b_ih + b_hh per direction, folded into the projection.
            "b_proj": jnp.concatenate([bih_f + bhh_f, bih_b + bhh_b]).reshape(1, 8 * H),
            "whh_f": whh_f.T.astype(jnp.bfloat16),   # (H, 4H)
            "whh_b": whh_b.T.astype(jnp.bfloat16),   # (H, 4H)
        })

    # FC head: (fc_layers-1) x [Linear + ReLU], then Linear(fc_hidden, nClass).
    # TODO(synk): fc_layers == 1 (final Linear directly on concat) is not supported.
    assert fc_layers >= 2, "fc_layers >= 2 required"
    d_rnn = rnn_hidden * rnn_layers * 2
    fc = {}

    d_in0 = d_rnn + trial_dim
    bound = 1.0 / float(d_in0) ** 0.5
    key, k1, k2 = jax.random.split(key, 3)
    w0 = jax.random.uniform(k1, (fc_hidden, d_in0), jnp.float32, -bound, bound)
    b0 = jax.random.uniform(k2, (fc_hidden,), jnp.float32, -bound, bound)
    w0t = w0.T
    fc["w0a"] = w0t[:d_rnn]          # (d_rnn, fc_hidden)
    fc["w0b"] = w0t[d_rnn:]          # (trial_dim, fc_hidden)
    fc["b0"] = b0.reshape(1, -1)

    fc["mid"] = []
    for _ in range(fc_layers - 2):
        bound = 1.0 / float(fc_hidden) ** 0.5
        key, k1, k2 = jax.random.split(key, 3)
        w = jax.random.uniform(k1, (fc_hidden, fc_hidden), jnp.float32, -bound, bound)
        b = jax.random.uniform(k2, (fc_hidden,), jnp.float32, -bound, bound)
        fc["mid"].append((w.T, b.reshape(1, -1)))

    bound = 1.0 / float(fc_hidden) ** 0.5
    key, k1, k2 = jax.random.split(key, 3)
    wl = jax.random.uniform(k1, (nClass, fc_hidden), jnp.float32, -bound, bound)
    bl = jax.random.uniform(k2, (nClass,), jnp.float32, -bound, bound)
    fc["wl"] = wl.T
    fc["bl"] = bl.reshape(1, -1)

    params["fc"] = fc
    return params


# ----------------------------------------------------------------------------
# Forward (mirrors StackedBRNN.forward; dropout=0 so no dropout applied)
# ----------------------------------------------------------------------------
def stacked_brnn_forward(params, x, trial_vec):
    # x: (B, T, input_size)  -> time-major (T, B, input_size)
    x_tmaj = jnp.transpose(x, (1, 0, 2)).astype(jnp.float32)
    cur = x_tmaj
    last_steps = []
    for layer in params["rnns"]:
        xg = _input_projection(cur, layer["w_proj"], layer["b_proj"])   # (T, B, 8H)
        cur = _bilstm_layer(xg, layer["whh_f"], layer["whh_b"])         # (T, B, 2H)
        last_steps.append(cur[-1])                                      # (B, 2H)
    output_rnn = jnp.concatenate(last_steps, axis=-1)                   # (B, 2H*L)
    output = _fc_head(params["fc"], output_rnn, trial_vec.astype(jnp.float32))
    return output_rnn, output


if __name__ == "__main__":
    # Small, module-consistent shapes.
    B, T = 2, 8
    input_size = 16
    rnn_hidden = 32
    rnn_layers = 2
    fc_hidden = 64
    fc_layers = 2
    nClass = 57
    trial_dim = 110  # forward implies trial_vec has 110 features

    key = jax.random.PRNGKey(0)
    kp, kx, kt = jax.random.split(key, 3)

    params = init_params(kp, input_size, rnn_hidden, rnn_layers, fc_hidden,
                         fc_layers, nClass, trial_dim)
    x = jax.random.normal(kx, (B, T, input_size), jnp.float32)
    trial_vec = jax.random.normal(kt, (B, trial_dim), jnp.float32)

    fwd = jax.jit(stacked_brnn_forward)
    output_rnn, output = fwd(params, x, trial_vec)
    jax.block_until_ready((output_rnn, output))

    assert output_rnn.shape == (B, rnn_hidden * rnn_layers * 2)
    assert output.shape == (B, nClass)
    print("KERNEL_OK")
</pallas_src>

<mosaic_0001>
module attributes {stable_mosaic.version = 11 : i64} {
  func.func @_proj_kernel(%arg0: i32, %arg1: memref<8x16xf32, #tpu.memory_space<vmem>>, %arg2: memref<16x256xbf16, #tpu.memory_space<vmem>>, %arg3: memref<1x256xf32, #tpu.memory_space<vmem>>, %arg4: memref<8x256xf32, #tpu.memory_space<vmem>>) attributes {dimension_semantics = [#tpu.dimension_semantics<parallel>], iteration_bounds = array<i64: 2>, scalar_prefetch = 0 : i64, scratch_operands = 0 : i64, tpu.core_type = #tpu.core_type<tc>, window_params = [{transform_indices = @transform_0, window_bounds = array<i64: 8, 16>}, {pipeline_mode = #tpu.pipeline_mode<synchronous>, transform_indices = @transform_1, window_bounds = array<i64: 16, 256>}, {pipeline_mode = #tpu.pipeline_mode<synchronous>, transform_indices = @transform_2, window_bounds = array<i64: 1, 256>}, {transform_indices = @transform_3, window_bounds = array<i64: 8, 256>}]} {
    %c0 = arith.constant 0 : index
    %c0_0 = arith.constant 0 : index
    %0 = vector.load %arg1[%c0, %c0_0] : memref<8x16xf32, #tpu.memory_space<vmem>>, vector<8x16xf32>
    %1 = arith.truncf %0 : vector<8x16xf32> to vector<8x16xbf16>
    %c0_1 = arith.constant 0 : index
    %c0_2 = arith.constant 0 : index
    %2 = vector.load %arg2[%c0_1, %c0_2] : memref<16x256xbf16, #tpu.memory_space<vmem>>, vector<16x256xbf16>
    %cst = arith.constant dense<0.000000e+00> : vector<8x256xf32>
    %3 = tpu.matmul %1, %2, %cst {dimension_numbers = #tpu.dot_dimension_numbers<[1], [0], [0], [1], [0, 0, 1, 1], [], []>} : vector<8x16xbf16>, vector<16x256xbf16>, vector<8x256xf32> -> vector<8x256xf32>
    %c0_3 = arith.constant 0 : index
    %c0_4 = arith.constant 0 : index
    %4 = vector.load %arg3[%c0_3, %c0_4] : memref<1x256xf32, #tpu.memory_space<vmem>>, vector<1x256xf32>
    %5 = vector.broadcast %4 : vector<1x256xf32> to vector<8x256xf32>
    %6 = arith.addf %3, %5 : vector<8x256xf32>
    %c0_5 = arith.constant 0 : index
    %c0_6 = arith.constant 0 : index
    %7 = vector.load %arg4[%c0_5, %c0_6] : memref<8x256xf32, #tpu.memory_space<vmem>>, vector<8x256xf32>
    tpu.vector_store %arg4[%c0_5, %c0_6], %6 {strides = array<i32>} : memref<8x256xf32, #tpu.memory_space<vmem>>, vector<8x256xf32>,
    return
  }
  func.func @transform_0(%arg0: i32) -> (i32, i32) {
    %c0_i32 = arith.constant 0 : i32
    %c0_i32_0 = arith.constant 0 : i32
    return %arg0, %c0_i32 : i32, i32
  }
  func.func @transform_1(%arg0: i32) -> (i32, i32) {
    %c0_i32 = arith.constant 0 : i32
    %c0_i32_0 = arith.constant 0 : i32
    %c0_i32_1 = arith.constant 0 : i32
    return %c0_i32, %c0_i32_0 : i32, i32
  }
  func.func @transform_2(%arg0: i32) -> (i32, i32) {
    %c0_i32 = arith.constant 0 : i32
    %c0_i32_0 = arith.constant 0 : i32
    %c0_i32_1 = arith.constant 0 : i32
    return %c0_i32, %c0_i32_0 : i32, i32
  }
  func.func @transform_3(%arg0: i32) -> (i32, i32) {
    %c0_i32 = arith.constant 0 : i32
    %c0_i32_0 = arith.constant 0 : i32
    return %arg0, %c0_i32 : i32, i32
  }
}

module attributes {stable_mosaic.version = 11 : i64} {
  func.func @_bilstm_kernel(%arg0: memref<8x2x256xf32, #tpu.memory_space<vmem>>, %arg1: memref<32x128xbf16, #tpu.memory_space<vmem>>, %arg2: memref<32x128xbf16, #tpu.memory_space<vmem>>, %arg3: memref<8x2x64xf32, #tpu.memory_space<vmem>>, %arg4: memref<2x32xf32, #tpu.memory_space<vmem>>, %arg5: memref<2x32xf32, #tpu.memory_space<vmem>>, %arg6: memref<2x32xf32, #tpu.memory_space<vmem>>, %arg7: memref<2x32xf32, #tpu.memory_space<vmem>>) attributes {dimension_semantics = [], scalar_prefetch = 0 : i64, scratch_operands = 4 : i64, tpu.core_type = #tpu.core_type<tc>} {
    %cst = arith.constant 0.000000e+00 : f32
    %0 = vector.broadcast %cst : f32 to vector<2x32xf32>
    %c0 = arith.constant 0 : index
    %c0_0 = arith.constant 0 : index
    %1 = vector.load %arg4[%c0, %c0_0] : memref<2x32xf32, #tpu.memory_space<vmem>>, vector<2x32xf32>
    tpu.vector_store %arg4[%c0, %c0_0], %0 {strides = array<i32>} : memref<2x32xf32, #tpu.memory_space<vmem>>, vector<2x32xf32>,
    %cst_1 = arith.constant 0.000000e+00 : f32
    %2 = vector.broadcast %cst_1 : f32 to vector<2x32xf32>
    %c0_2 = arith.constant 0 : index
    %c0_3 = arith.constant 0 : index
    %3 = vector.load %arg5[%c0_2, %c0_3] : memref<2x32xf32, #tpu.memory_space<vmem>>, vector<2x32xf32>
    tpu.vector_store %arg5[%c0_2, %c0_3], %2 {strides = array<i32>} : memref<2x32xf32, #tpu.memory_space<vmem>>, vector<2x32xf32>,
    %cst_4 = arith.constant 0.000000e+00 : f32
    %4 = vector.broadcast %cst_4 : f32 to vector<2x32xf32>
    %c0_5 = arith.constant 0 : index
    %c0_6 = arith.constant 0 : index
    %5 = vector.load %arg6[%c0_5, %c0_6] : memref<2x32xf32, #tpu.memory_space<vmem>>, vector<2x32xf32>
    tpu.vector_store %arg6[%c0_5, %c0_6], %4 {strides = array<i32>} : memref<2x32xf32, #tpu.memory_space<vmem>>, vector<2x32xf32>,
    %cst_7 = arith.constant 0.000000e+00 : f32
    %6 = vector.broadcast %cst_7 : f32 to vector<2x32xf32>
    %c0_8 = arith.constant 0 : index
    %c0_9 = arith.constant 0 : index
    %7 = vector.load %arg7[%c0_8, %c0_9] : memref<2x32xf32, #tpu.memory_space<vmem>>, vector<2x32xf32>
    tpu.vector_store %arg7[%c0_8, %c0_9], %6 {strides = array<i32>} : memref<2x32xf32, #tpu.memory_space<vmem>>, vector<2x32xf32>,
    %c0_10 = arith.constant 0 : index
    %c0_11 = arith.constant 0 : index
    %c0_12 = arith.constant 0 : index
    %8 = vector.load %arg0[%c0_10, %c0_11, %c0_12] : memref<8x2x256xf32, #tpu.memory_space<vmem>>, vector<1x2x256xf32>
    %9 = vector.shape_cast %8 : vector<1x2x256xf32> to vector<2x256xf32>
    %c7 = arith.constant 7 : index
    %c0_13 = arith.constant 0 : index
    %c0_14 = arith.constant 0 : index
    %10 = vector.load %arg0[%c7, %c0_13, %c0_14] : memref<8x2x256xf32, #tpu.memory_space<vmem>>, vector<1x2x256xf32>
    %11 = vector.shape_cast %10 : vector<1x2x256xf32> to vector<2x256xf32>
    %12 = vector.extract_strided_slice %9 {offsets = [0, 0], sizes = [2, 128], strides = [1, 1]} : vector<2x256xf32> to vector<2x128xf32>
    %c0_15 = arith.constant 0 : index
    %c0_16 = arith.constant 0 : index
    %13 = vector.load %arg4[%c0_15, %c0_16] : memref<2x32xf32, #tpu.memory_space<vmem>>, vector<2x32xf32>
    %14 = arith.truncf %13 : vector<2x32xf32> to vector<2x32xbf16>
    %c0_17 = arith.constant 0 : index
    %c0_18 = arith.constant 0 : index
    %15 = vector.load %arg1[%c0_17, %c0_18] : memref<32x128xbf16, #tpu.memory_space<vmem>>, vector<32x128xbf16>
    %cst_19 = arith.constant dense<0.000000e+00> : vector<2x128xf32>
    %16 = tpu.matmul %14, %15, %cst_19 {dimension_numbers = #tpu.dot_dimension_numbers<[1], [0], [0], [1], [0, 0, 1, 1], [], []>} : vector<2x32xbf16>, vector<32x128xbf16>, vector<2x128xf32> -> vector<2x128xf32>
    %17 = arith.addf %12, %16 : vector<2x128xf32>
    %18 = vector.extract_strided_slice %11 {offsets = [0, 128], sizes = [2, 128], strides = [1, 1]} : vector<2x256xf32> to vector<2x128xf32>
    %c0_20 = arith.constant 0 : index
    %c0_21 = arith.constant 0 : index
    %19 = vector.load %arg6[%c0_20, %c0_21] : memref<2x32xf32, #tpu.memory_space<vmem>>, vector<2x32xf32>
    %20 = arith.truncf %19 : vector<2x32xf32> to vector<2x32xbf16>
    %c0_22 = arith.constant 0 : index
    %c0_23 = arith.constant 0 : index
    %21 = vector.load %arg2[%c0_22, %c0_23] : memref<32x128xbf16, #tpu.memory_space<vmem>>, vector<32x128xbf16>
    %cst_24 = arith.constant dense<0.000000e+00> : vector<2x128xf32>
    %22 = tpu.matmul %20, %21, %cst_24 {dimension_numbers = #tpu.dot_dimension_numbers<[1], [0], [0], [1], [0, 0, 1, 1], [], []>} : vector<2x32xbf16>, vector<32x128xbf16>, vector<2x128xf32> -> vector<2x128xf32>
    %23 = arith.addf %18, %22 : vector<2x128xf32>
    %c0_25 = arith.constant 0 : index
    %c0_26 = arith.constant 0 : index
    %24 = vector.load %arg5[%c0_25, %c0_26] : memref<2x32xf32, #tpu.memory_space<vmem>>, vector<2x32xf32>
    %25 = vector.extract_strided_slice %17 {offsets = [0, 0], sizes = [2, 32], strides = [1, 1]} : vector<2x128xf32> to vector<2x32xf32>
    %26 = arith.negf %25 : vector<2x32xf32>
    %27 = math.exp %26 : vector<2x32xf32>
    %cst_27 = arith.constant 1.000000e+00 : f32
    %28 = vector.broadcast %cst_27 : f32 to vector<2x32xf32>
    %29 = arith.addf %28, %27 : vector<2x32xf32>
    %30 = arith.divf %28, %29 : vector<2x32xf32>
    %31 = vector.extract_strided_slice %17 {offsets = [0, 32], sizes = [2, 32], strides = [1, 1]} : vector<2x128xf32> to vector<2x32xf32>
    %32 = arith.negf %31 : vector<2x32xf32>
    %33 = math.exp %32 : vector<2x32xf32>
    %cst_28 = arith.constant 1.000000e+00 : f32
    %34 = vector.broadcast %cst_28 : f32 to vector<2x32xf32>
    %35 = arith.addf %34, %33 : vector<2x32xf32>
    %36 = arith.divf %34, %35 : vector<2x32xf32>
    %37 = vector.extract_strided_slice %17 {offsets = [0, 64], sizes = [2, 32], strides = [1, 1]} : vector<2x128xf32> to vector<2x32xf32>
    %38 = math.tanh %37 : vector<2x32xf32>
    %39 = vector.extract_strided_slice %17 {offsets = [0, 96], sizes = [2, 32], strides = [1, 1]} : vector<2x128xf32> to vector<2x32xf32>
    %40 = arith.negf %39 : vector<2x32xf32>
    %41 = math.exp %40 : vector<2x32xf32>
    %cst_29 = arith.constant 1.000000e+00 : f32
    %42 = vector.broadcast %cst_29 : f32 to vector<2x32xf32>
    %43 = arith.addf %42, %41 : vector<2x32xf32>
    %44 = arith.divf %42, %43 : vector<2x32xf32>
    %45 = arith.mulf %36, %24 : vector<2x32xf32>
    %46 = arith.mulf %30, %38 : vector<2x32xf32>
    %47 = arith.addf %45, %46 : vector<2x32xf32>
    %48 = math.tanh %47 : vector<2x32xf32>
    %49 = arith.mulf %44, %48 : vector<2x32xf32>
    %c0_30 = arith.constant 0 : index
    %c0_31 = arith.constant 0 : index
    %50 = vector.load %arg7[%c0_30, %c0_31] : memref<2x32xf32, #tpu.memory_space<vmem>>, vector<2x32xf32>
    %51 = vector.extract_strided_slice %23 {offsets = [0, 0], sizes = [2, 32], strides = [1, 1]} : vector<2x128xf32> to vector<2x32xf32>
    %52 = arith.negf %51 : vector<2x32xf32>
    %53 = math.exp %52 : vector<2x32xf32>
    %cst_32 = arith.constant 1.000000e+00 : f32
    %54 = vector.broadcast %cst_32 : f32 to vector<2x32xf32>
    %55 = arith.addf %54, %53 : vector<2x32xf32>
    %56 = arith.divf %54, %55 : vector<2x32xf32>
    %57 = vector.extract_strided_slice %23 {offsets = [0, 32], sizes = [2, 32], strides = [1, 1]} : vector<2x128xf32> to vector<2x32xf32>
    %58 = arith.negf %57 : vector<2x32xf32>
    %59 = math.exp %58 : vector<2x32xf32>
    %cst_33 = arith.constant 1.000000e+00 : f32
    %60 = vector.broadcast %cst_33 : f32 to vector<2x32xf32>
    %61 = arith.addf %60, %59 : vector<2x32xf32>
    %62 = arith.divf %60, %61 : vector<2x32xf32>
    %63 = vector.extract_strided_slice %23 {offsets = [0, 64], sizes = [2, 32], strides = [1, 1]} : vector<2x128xf32> to vector<2x32xf32>
    %64 = math.tanh %63 : vector<2x32xf32>
    %65 = vector.extract_strided_slice %23 {offsets = [0, 96], sizes = [2, 32], strides = [1, 1]} : vector<2x128xf32> to vector<2x32xf32>
    %66 = arith.negf %65 : vector<2x32xf32>
    %67 = math.exp %66 : vector<2x32xf32>
    %cst_34 = arith.constant 1.000000e+00 : f32
    %68 = vector.broadcast %cst_34 : f32 to vector<2x32xf32>
    %69 = arith.addf %68, %67 : vector<2x32xf32>
    %70 = arith.divf %68, %69 : vector<2x32xf32>
    %71 = arith.mulf %62, %50 : vector<2x32xf32>
    %72 = arith.mulf %56, %64 : vector<2x32xf32>
    %73 = arith.addf %71, %72 : vector<2x32xf32>
    %74 = math.tanh %73 : vector<2x32xf32>
    %75 = arith.mulf %70, %74 : vector<2x32xf32>
    %c0_35 = arith.constant 0 : index
    %c0_36 = arith.constant 0 : index
    %76 = vector.load %arg4[%c0_35, %c0_36] : memref<2x32xf32, #tpu.memory_space<vmem>>, vector<2x32xf32>
    tpu.vector_store %arg4[%c0_35, %c0_36], %49 {strides = array<i32>} : memref<2x32xf32, #tpu.memory_space<vmem>>, vector<2x32xf32>,
    %c0_37 = arith.constant 0 : index
    %c0_38 = arith.constant 0 : index
    %77 = vector.load %arg5[%c0_37, %c0_38] : memref<2x32xf32, #tpu.memory_space<vmem>>, vector<2x32xf32>
    tpu.vector_store %arg5[%c0_37, %c0_38], %47 {strides = array<i32>} : memref<2x32xf32, #tpu.memory_space<vmem>>, vector<2x32xf32>,
    %c0_39 = arith.constant 0 : index
    %c0_40 = arith.constant 0 : index
    %78 = vector.load %arg6[%c0_39, %c0_40] : memref<2x32xf32, #tpu.memory_space<vmem>>, vector<2x32xf32>
    tpu.vector_store %arg6[%c0_39, %c0_40], %75 {strides = array<i32>} : memref<2x32xf32, #tpu.memory_space<vmem>>, vector<2x32xf32>,
    %c0_41 = arith.constant 0 : index
    %c0_42 = arith.constant 0 : index
    %79 = vector.load %arg7[%c0_41, %c0_42] : memref<2x32xf32, #tpu.memory_space<vmem>>, vector<2x32xf32>
    tpu.vector_store %arg7[%c0_41, %c0_42], %73 {strides = array<i32>} : memref<2x32xf32, #tpu.memory_space<vmem>>, vector<2x32xf32>,
    %c0_43 = arith.constant 0 : index
    %c0_44 = arith.constant 0 : index
    %c0_45 = arith.constant 0 : index
    %80 = vector.load %arg3[%c0_43, %c0_44, %c0_45] : memref<8x2x64xf32, #tpu.memory_space<vmem>>, vector<1x2x32xf32>
    %81 = vector.shape_cast %80 : vector<1x2x32xf32> to vector<2x32xf32>
    %82 = vector.shape_cast %49 : vector<2x32xf32> to vector<1x2x32xf32>
    tpu.vector_store %arg3[%c0_43, %c0_44, %c0_45], %82 {strides = array<i32>} : memref<8x2x64xf32, #tpu.memory_space<vmem>>, vector<1x2x32xf32>,
    %c7_46 = arith.constant 7 : index
    %c0_47 = arith.constant 0 : index
    %c32 = arith.constant 32 : index
    %83 = vector.load %arg3[%c7_46, %c0_47, %c32] : memref<8x2x64xf32, #tpu.memory_space<vmem>>, vector<1x2x32xf32>
    %84 = vector.shape_cast %83 : vector<1x2x32xf32> to vector<2x32xf32>
    %85 = vector.shape_cast %75 : vector<2x32xf32> to vector<1x2x32xf32>
    tpu.vector_store %arg3[%c7_46, %c0_47, %c32], %85 {strides = array<i32>} : memref<8x2x64xf32, #tpu.memory_space<vmem>>, vector<1x2x32xf32>,
    %c1 = arith.constant 1 : index
    %c0_48 = arith.constant 0 : index
    %c0_49 = arith.constant 0 : index
    %86 = vector.load %arg0[%c1, %c0_48, %c0_49] : memref<8x2x256xf32, #tpu.memory_space<vmem>>, vector<1x2x256xf32>
    %87 = vector.shape_cast %86 : vector<1x2x256xf32> to vector<2x256xf32>
    %c6 = arith.constant 6 : index
    %c0_50 = arith.constant 0 : index
    %c0_51 = arith.constant 0 : index
    %88 = vector.load %arg0[%c6, %c0_50, %c0_51] : memref<8x2x256xf32, #tpu.memory_space<vmem>>, vector<1x2x256xf32>
    %89 = vector.shape_cast %88 : vector<1x2x256xf32> to vector<2x256xf32>
    %90 = vector.extract_strided_slice %87 {offsets = [0, 0], sizes = [2, 128], strides = [1, 1]} : vector<2x256xf32> to vector<2x128xf32>
    %c0_52 = arith.constant 0 : index
    %c0_53 = arith.constant 0 : index
    %91 = vector.load %arg4[%c0_52, %c0_53] : memref<2x32xf32, #tpu.memory_space<vmem>>, vector<2x32xf32>
    %92 = arith.truncf %91 : vector<2x32xf32> to vector<2x32xbf16>
    %c0_54 = arith.constant 0 : index
    %c0_55 = arith.constant 0 : index
    %93 = vector.load %arg1[%c0_54, %c0_55] : memref<32x128xbf16, #tpu.memory_space<vmem>>, vector<32x128xbf16>
    %cst_56 = arith.constant dense<0.000000e+00> : vector<2x128xf32>
    %94 = tpu.matmul %92, %93, %cst_56 {dimension_numbers = #tpu.dot_dimension_numbers<[1], [0], [0], [1], [0, 0, 1, 1], [], []>} : vector<2x32xbf16>, vector<32x128xbf16>, vector<2x128xf32> -> vector<2x128xf32>
    %95 = arith.addf %90, %94 : vector<2x128xf32>
    %96 = vector.extract_strided_slice %89 {offsets = [0, 128], sizes = [2, 128], strides = [1, 1]} : vector<2x256xf32> to vector<2x128xf32>
    %c0_57 = arith.constant 0 : index
    %c0_58 = arith.constant 0 : index
    %97 = vector.load %arg6[%c0_57, %c0_58] : memref<2x32xf32, #tpu.memory_space<vmem>>, vector<2x32xf32>
    %98 = arith.truncf %97 : vector<2x32xf32> to vector<2x32xbf16>
    %c0_59 = arith.constant 0 : index
    %c0_60 = arith.constant 0 : index
    %99 = vector.load %arg2[%c0_59, %c0_60] : memref<32x128xbf16, #tpu.memory_space<vmem>>, vector<32x128xbf16>
    %cst_61 = arith.constant dense<0.000000e+00> : vector<2x128xf32>
    %100 = tpu.matmul %98, %99, %cst_61 {dimension_numbers = #tpu.dot_dimension_numbers<[1], [0], [0], [1], [0, 0, 1, 1], [], []>} : vector<2x32xbf16>, vector<32x128xbf16>, vector<2x128xf32> -> vector<2x128xf32>
    %101 = arith.addf %96, %100 : vector<2x128xf32>
    %c0_62 = arith.constant 0 : index
    %c0_63 = arith.constant 0 : index
    %102 = vector.load %arg5[%c0_62, %c0_63] : memref<2x32xf32, #tpu.memory_space<vmem>>, vector<2x32xf32>
    %103 = vector.extract_strided_slice %95 {offsets = [0, 0], sizes = [2, 32], strides = [1, 1]} : vector<2x128xf32> to vector<2x32xf32>
    %104 = arith.negf %103 : vector<2x32xf32>
    %105 = math.exp %104 : vector<2x32xf32>
    %cst_64 = arith.constant 1.000000e+00 : f32
    %106 = vector.broadcast %cst_64 : f32 to vector<2x32xf32>
    %107 = arith.addf %106, %105 : vector<2x32xf32>
    %108 = arith.divf %106, %107 : vector<2x32xf32>
    %109 = vector.extract_strided_slice %95 {offsets = [0, 32], sizes = [2, 32], strides = [1, 1]} : vector<2x128xf32> to vector<2x32xf32>
    %110 = arith.negf %109 : vector<2x32xf32>
    %111 = math.exp %110 : vector<2x32xf32>
    %cst_65 = arith.constant 1.000000e+00 : f32
    %112 = vector.broadcast %cst_65 : f32 to vector<2x32xf32>
    %113 = arith.addf %112, %111 : vector<2x32xf32>
    %114 = arith.divf %112, %113 : vector<2x32xf32>
    %115 = vector.extract_strided_slice %95 {offsets = [0, 64], sizes = [2, 32], strides = [1, 1]} : vector<2x128xf32> to vector<2x32xf32>
    %116 = math.tanh %115 : vector<2x32xf32>
    %117 = vector.extract_strided_slice %95 {offsets = [0, 96], sizes = [2, 32], strides = [1, 1]} : vector<2x128xf32> to vector<2x32xf32>
    %118 = arith.negf %117 : vector<2x32xf32>
    %119 = math.exp %118 : vector<2x32xf32>
    %cst_66 = arith.constant 1.000000e+00 : f32
    %120 = vector.broadcast %cst_66 : f32 to vector<2x32xf32>
    %121 = arith.addf %120, %119 : vector<2x32xf32>
    %122 = arith.divf %120, %121 : vector<2x32xf32>
    %123 = arith.mulf %114, %102 : vector<2x32xf32>
    %124 = arith.mulf %108, %116 : vector<2x32xf32>
    %125 = arith.addf %123, %124 : vector<2x32xf32>
    %126 = math.tanh %125 : vector<2x32xf32>
    %127 = arith.mulf %122, %126 : vector<2x32xf32>
    %c0_67 = arith.constant 0 : index
    %c0_68 = arith.constant 0 : index
    %128 = vector.load %arg7[%c0_67, %c0_68] : memref<2x32xf32, #tpu.memory_space<vmem>>, vector<2x32xf32>
    %129 = vector.extract_strided_slice %101 {offsets = [0, 0], sizes = [2, 32], strides = [1, 1]} : vector<2x128xf32> to vector<2x32xf32>
    %130 = arith.negf %129 : vector<2x32xf32>
    %131 = math.exp %130 : vector<2x32xf32>
    %cst_69 = arith.constant 1.000000e+00 : f32
    %132 = vector.broadcast %cst_69 : f32 to vector<2x32xf32>
    %133 = arith.addf %132, %131 : vector<2x32xf32>
    %134 = arith.divf %132, %133 : vector<2x32xf32>
    %135 = vector.extract_strided_slice %101 {offsets = [0, 32], sizes = [2, 32], strides = [1, 1]} : vector<2x128xf32> to vector<2x32xf32>
    %136 = arith.negf %135 : vector<2x32xf32>
    %137 = math.exp %136 : vector<2x32xf32>
    %cst_70 = arith.constant 1.000000e+00 : f32
    %138 = vector.broadcast %cst_70 : f32 to vector<2x32xf32>
    %139 = arith.addf %138, %137 : vector<2x32xf32>
    %140 = arith.divf %138, %139 : vector<2x32xf32>
    %141 = vector.extract_strided_slice %101 {offsets = [0, 64], sizes = [2, 32], strides = [1, 1]} : vector<2x128xf32> to vector<2x32xf32>
    %142 = math.tanh %141 : vector<2x32xf32>
    %143 = vector.extract_strided_slice %101 {offsets = [0, 96], sizes = [2, 32], strides = [1, 1]} : vector<2x128xf32> to vector<2x32xf32>
    %144 = arith.negf %143 : vector<2x32xf32>
    %145 = math.exp %144 : vector<2x32xf32>
    %cst_71 = arith.constant 1.000000e+00 : f32
    %146 = vector.broadcast %cst_71 : f32 to vector<2x32xf32>
    %147 = arith.addf %146, %145 : vector<2x32xf32>
    %148 = arith.divf %146, %147 : vector<2x32xf32>
    %149 = arith.mulf %140, %128 : vector<2x32xf32>
    %150 = arith.mulf %134, %142 : vector<2x32xf32>
    %151 = arith.addf %149, %150 : vector<2x32xf32>
    %152 = math.tanh %151 : vector<2x32xf32>
    %153 = arith.mulf %148, %152 : vector<2x32xf32>
    %c0_72 = arith.constant 0 : index
    %c0_73 = arith.constant 0 : index
    %154 = vector.load %arg4[%c0_72, %c0_73] : memref<2x32xf32, #tpu.memory_space<vmem>>, vector<2x32xf32>
    tpu.vector_store %arg4[%c0_72, %c0_73], %127 {strides = array<i32>} : memref<2x32xf32, #tpu.memory_space<vmem>>, vector<2x32xf32>,
    %c0_74 = arith.constant 0 : index
    %c0_75 = arith.constant 0 : index
    %155 = vector.load %arg5[%c0_74, %c0_75] : memref<2x32xf32, #tpu.memory_space<vmem>>, vector<2x32xf32>
    tpu.vector_store %arg5[%c0_74, %c0_75], %125 {strides = array<i32>} : memref<2x32xf32, #tpu.memory_space<vmem>>, vector<2x32xf32>,
    %c0_76 = arith.constant 0 : index
    %c0_77 = arith.constant 0 : index
    %156 = vector.load %arg6[%c0_76, %c0_77] : memref<2x32xf32, #tpu.memory_space<vmem>>, vector<2x32xf32>
    tpu.vector_store %arg6[%c0_76, %c0_77], %153 {strides = array<i32>} : memref<2x32xf32, #tpu.memory_space<vmem>>, vector<2x32xf32>,
    %c0_78 = arith.constant 0 : index
    %c0_79 = arith.constant 0 : index
    %157 = vector.load %arg7[%c0_78, %c0_79] : memref<2x32xf32, #tpu.memory_space<vmem>>, vector<2x32xf32>
    tpu.vector_store %arg7[%c0_78, %c0_79], %151 {strides = array<i32>} : memref<2x32xf32, #tpu.memory_space<vmem>>, vector<2x32xf32>,
    %c1_80 = arith.constant 1 : index
    %c0_81 = arith.constant 0 : index
    %c0_82 = arith.constant 0 : index
    %158 = vector.load %arg3[%c1_80, %c0_81, %c0_82] : memref<8x2x64xf32, #tpu.memory_space<vmem>>, vector<1x2x32xf32>
    %159 = vector.shape_cast %158 : vector<1x2x32xf32> to vector<2x32xf32>
    %160 = vector.shape_cast %127 : vector<2x32xf32> to vector<1x2x32xf32>
    tpu.vector_store %arg3[%c1_80, %c0_81, %c0_82], %160 {strides = array<i32>} : memref<8x2x64xf32, #tpu.memory_space<vmem>>, vector<1x2x32xf32>,
    %c6_83 = arith.constant 6 : index
    %c0_84 = arith.constant 0 : index
    %c32_85 = arith.constant 32 : index
    %161 = vector.load %arg3[%c6_83, %c0_84, %c32_85] : memref<8x2x64xf32, #tpu.memory_space<vmem>>, vector<1x2x32xf32>
    %162 = vector.shape_cast %161 : vector<1x2x32xf32> to vector<2x32xf32>
    %163 = vector.shape_cast %153 : vector<2x32xf32> to vector<1x2x32xf32>
    tpu.vector_store %arg3[%c6_83, %c0_84, %c32_85], %163 {strides = array<i32>} : memref<8x2x64xf32, #tpu.memory_space<vmem>>, vector<1x2x32xf32>,
    %c2 = arith.constant 2 : index
    %c0_86 = arith.constant 0 : index
    %c0_87 = arith.constant 0 : index
    %164 = vector.load %arg0[%c2, %c0_86, %c0_87] : memref<8x2x256xf32, #tpu.memory_space<vmem>>, vector<1x2x256xf32>
    %165 = vector.shape_cast %164 : vector<1x2x256xf32> to vector<2x256xf32>
    %c5 = arith.constant 5 : index
    %c0_88 = arith.constant 0 : index
    %c0_89 = arith.constant 0 : index
    %166 = vector.load %arg0[%c5, %c0_88, %c0_89] : memref<8x2x256xf32, #tpu.memory_space<vmem>>, vector<1x2x256xf32>
    %167 = vector.shape_cast %166 : vector<1x2x256xf32> to vector<2x256xf32>
    %168 = vector.extract_strided_slice %165 {offsets = [0, 0], sizes = [2, 128], strides = [1, 1]} : vector<2x256xf32> to vector<2x128xf32>
    %c0_90 = arith.constant 0 : index
    %c0_91 = arith.constant 0 : index
    %169 = vector.load %arg4[%c0_90, %c0_91] : memref<2x32xf32, #tpu.memory_space<vmem>>, vector<2x32xf32>
    %170 = arith.truncf %169 : vector<2x32xf32> to vector<2x32xbf16>
    %c0_92 = arith.constant 0 : index
    %c0_93 = arith.constant 0 : index
    %171 = vector.load %arg1[%c0_92, %c0_93] : memref<32x128xbf16, #tpu.memory_space<vmem>>, vector<32x128xbf16>
    %cst_94 = arith.constant dense<0.000000e+00> : vector<2x128xf32>
    %172 = tpu.matmul %170, %171, %cst_94 {dimension_numbers = #tpu.dot_dimension_numbers<[1], [0], [0], [1], [0, 0, 1, 1], [], []>} : vector<2x32xbf16>, vector<32x128xbf16>, vector<2x128xf32> -> vector<2x128xf32>
    %173 = arith.addf %168, %172 : vector<2x128xf32>
    %174 = vector.extract_strided_slice %167 {offsets = [0, 128], sizes = [2, 128], strides = [1, 1]} : vector<2x256xf32> to vector<2x128xf32>
    %c0_95 = arith.constant 0 : index
    %c0_96 = arith.constant 0 : index
    %175 = vector.load %arg6[%c0_95, %c0_96] : memref<2x32xf32, #tpu.memory_space<vmem>>, vector<2x32xf32>
    %176 = arith.truncf %175 : vector<2x32xf32> to vector<2x32xbf16>
    %c0_97 = arith.constant 0 : index
    %c0_98 = arith.constant 0 : index
    %177 = vector.load %arg2[%c0_97, %c0_98] : memref<32x128xbf16, #tpu.memory_space<vmem>>, vector<32x128xbf16>
    %cst_99 = arith.constant dense<0.000000e+00> : vector<2x128xf32>
    %178 = tpu.matmul %176, %177, %cst_99 {dimension_numbers = #tpu.dot_dimension_numbers<[1], [0], [0], [1], [0, 0, 1, 1], [], []>} : vector<2x32xbf16>, vector<32x128xbf16>, vector<2x128xf32> -> vector<2x128xf32>
    %179 = arith.addf %174, %178 : vector<2x128xf32>
    %c0_100 = arith.constant 0 : index
    %c0_101 = arith.constant 0 : index
    %180 = vector.load %arg5[%c0_100, %c0_101] : memref<2x32xf32, #tpu.memory_space<vmem>>, vector<2x32xf32>
    %181 = vector.extract_strided_slice %173 {offsets = [0, 0], sizes = [2, 32], strides = [1, 1]} : vector<2x128xf32> to vector<2x32xf32>
    %182 = arith.negf %181 : vector<2x32xf32>
    %183 = math.exp %182 : vector<2x32xf32>
    %cst_102 = arith.constant 1.000000e+00 : f32
    %184 = vector.broadcast %cst_102 : f32 to vector<2x32xf32>
    %185 = arith.addf %184, %183 : vector<2x32xf32>
    %186 = arith.divf %184, %185 : vector<2x32xf32>
    %187 = vector.extract_strided_slice %173 {offsets = [0, 32], sizes = [2, 32], strides = [1, 1]} : vector<2x128xf32> to vector<2x32xf32>
    %188 = arith.negf %187 : vector<2x32xf32>
    %189 = math.exp %188 : vector<2x32xf32>
    %cst_103 = arith.constant 1.000000e+00 : f32
    %190 = vector.broadcast %cst_103 : f32 to vector<2x32xf32>
    %191 = arith.addf %190, %189 : vector<2x32xf32>
    %192 = arith.divf %190, %191 : vector<2x32xf32>
    %193 = vector.extract_strided_slice %173 {offsets = [0, 64], sizes = [2, 32], strides = [1, 1]} : vector<2x128xf32> to vector<2x32xf32>
    %194 = math.tanh %193 : vector<2x32xf32>
    %195 = vector.extract_strided_slice %173 {offsets = [0, 96], sizes = [2, 32], strides = [1, 1]} : vector<2x128xf32> to vector<2x32xf32>
    %196 = arith.negf %195 : vector<2x32xf32>
    %197 = math.exp %196 : vector<2x32xf32>
    %cst_104 = arith.constant 1.000000e+00 : f32
    %198 = vector.broadcast %cst_104 : f32 to vector<2x32xf32>
    %199 = arith.addf %198, %197 : vector<2x32xf32>
    %200 = arith.divf %198, %199 : vector<2x32xf32>
    %201 = arith.mulf %192, %180 : vector<2x32xf32>
    %202 = arith.mulf %186, %194 : vector<2x32xf32>
    %203 = arith.addf %201, %202 : vector<2x32xf32>
    %204 = math.tanh %203 : vector<2x32xf32>
    %205 = arith.mulf %200, %204 : vector<2x32xf32>
    %c0_105 = arith.constant 0 : index
    %c0_106 = arith.constant 0 : index
    %206 = vector.load %arg7[%c0_105, %c0_106] : memref<2x32xf32, #tpu.memory_space<vmem>>, vector<2x32xf32>
    %207 = vector.extract_strided_slice %179 {offsets = [0, 0], sizes = [2, 32], strides = [1, 1]} : vector<2x128xf32> to vector<2x32xf32>
    %208 = arith.negf %207 : vector<2x32xf32>
    %209 = math.exp %208 : vector<2x32xf32>
    %cst_107 = arith.constant 1.000000e+00 : f32
    %210 = vector.broadcast %cst_107 : f32 to vector<2x32xf32>
    %211 = arith.addf %210, %209 : vector<2x32xf32>
    %212 = arith.divf %210, %211 : vector<2x32xf32>
    %213 = vector.extract_strided_slice %179 {offsets = [0, 32], sizes = [2, 32], strides = [1, 1]} : vector<2x128xf32> to vector<2x32xf32>
    %214 = arith.negf %213 : vector<2x32xf32>
    %215 = math.exp %214 : vector<2x32xf32>
    %cst_108 = arith.constant 1.000000e+00 : f32
    %216 = vector.broadcast %cst_108 : f32 to vector<2x32xf32>
    %217 = arith.addf %216, %215 : vector<2x32xf32>
    %218 = arith.divf %216, %217 : vector<2x32xf32>
    %219 = vector.extract_strided_slice %179 {offsets = [0, 64], sizes = [2, 32], strides = [1, 1]} : vector<2x128xf32> to vector<2x32xf32>
    %220 = math.tanh %219 : vector<2x32xf32>
    %221 = vector.extract_strided_slice %179 {offsets = [0, 96], sizes = [2, 32], strides = [1, 1]} : vector<2x128xf32> to vector<2x32xf32>
    %222 = arith.negf %221 : vector<2x32xf32>
    %223 = math.exp %222 : vector<2x32xf32>
    %cst_109 = arith.constant 1.000000e+00 : f32
    %224 = vector.broadcast %cst_109 : f32 to vector<2x32xf32>
    %225 = arith.addf %224, %223 : vector<2x32xf32>
    %226 = arith.divf %224, %225 : vector<2x32xf32>
    %227 = arith.mulf %218, %206 : vector<2x32xf32>
    %228 = arith.mulf %212, %220 : vector<2x32xf32>
    %229 = arith.addf %227, %228 : vector<2x32xf32>
    %230 = math.tanh %229 : vector<2x32xf32>
    %231 = arith.mulf %226, %230 : vector<2x32xf32>
    %c0_110 = arith.constant 0 : index
    %c0_111 = arith.constant 0 : index
    %232 = vector.load %arg4[%c0_110, %c0_111] : memref<2x32xf32, #tpu.memory_space<vmem>>, vector<2x32xf32>
    tpu.vector_store %arg4[%c0_110, %c0_111], %205 {strides = array<i32>} : memref<2x32xf32, #tpu.memory_space<vmem>>, vector<2x32xf32>,
    %c0_112 = arith.constant 0 : index
    %c0_113 = arith.constant 0 : index
    %233 = vector.load %arg5[%c0_112, %c0_113] : memref<2x32xf32, #tpu.memory_space<vmem>>, vector<2x32xf32>
    tpu.vector_store %arg5[%c0_112, %c0_113], %203 {strides = array<i32>} : memref<2x32xf32, #tpu.memory_space<vmem>>, vector<2x32xf32>,
    %c0_114 = arith.constant 0 : index
    %c0_115 = arith.constant 0 : index
    %234 = vector.load %arg6[%c0_114, %c0_115] : memref<2x32xf32, #tpu.memory_space<vmem>>, vector<2x32xf32>
    tpu.vector_store %arg6[%c0_114, %c0_115], %231 {strides = array<i32>} : memref<2x32xf32, #tpu.memory_space<vmem>>, vector<2x32xf32>,
    %c0_116 = arith.constant 0 : index
    %c0_117 = arith.constant 0 : index
    %235 = vector.load %arg7[%c0_116, %c0_117] : memref<2x32xf32, #tpu.memory_space<vmem>>, vector<2x32xf32>
    tpu.vector_store %arg7[%c0_116, %c0_117], %229 {strides = array<i32>} : memref<2x32xf32, #tpu.memory_space<vmem>>, vector<2x32xf32>,
    %c2_118 = arith.constant 2 : index
    %c0_119 = arith.constant 0 : index
    %c0_120 = arith.constant 0 : index
    %236 = vector.load %arg3[%c2_118, %c0_119, %c0_120] : memref<8x2x64xf32, #tpu.memory_space<vmem>>, vector<1x2x32xf32>
    %237 = vector.shape_cast %236 : vector<1x2x32xf32> to vector<2x32xf32>
    %238 = vector.shape_cast %205 : vector<2x32xf32> to vector<1x2x32xf32>
    tpu.vector_store %arg3[%c2_118, %c0_119, %c0_120], %238 {strides = array<i32>} : memref<8x2x64xf32, #tpu.memory_space<vmem>>, vector<1x2x32xf32>,
    %c5_121 = arith.constant 5 : index
    %c0_122 = arith.constant 0 : index
    %c32_123 = arith.constant 32 : index
    %239 = vector.load %arg3[%c5_121, %c0_122, %c32_123] : memref<8x2x64xf32, #tpu.memory_space<vmem>>, vector<1x2x32xf32>
    %240 = vector.shape_cast %239 : vector<1x2x32xf32> to vector<2x32xf32>
    %241 = vector.shape_cast %231 : vector<2x32xf32> to vector<1x2x32xf32>
    tpu.vector_store %arg3[%c5_121, %c0_122, %c32_123], %241 {strides = array<i32>} : memref<8x2x64xf32, #tpu.memory_space<vmem>>, vector<1x2x32xf32>,
    %c3 = arith.constant 3 : index
    %c0_124 = arith.constant 0 : index
    %c0_125 = arith.constant 0 : index
    %242 = vector.load %arg0[%c3, %c0_124, %c0_125] : memref<8x2x256xf32, #tpu.memory_space<vmem>>, vector<1x2x256xf32>
    %243 = vector.shape_cast %242 : vector<1x2x256xf32> to vector<2x256xf32>
    %c4 = arith.constant 4 : index
    %c0_126 = arith.constant 0 : index
    %c0_127 = arith.constant 0 : index
    %244 = vector.load %arg0[%c4, %c0_126, %c0_127] : memref<8x2x256xf32, #tpu.memory_space<vmem>>, vector<1x2x256xf32>
    %245 = vector.shape_cast %244 : vector<1x2x256xf32> to vector<2x256xf32>
    %246 = vector.extract_strided_slice %243 {offsets = [0, 0], sizes = [2, 128], strides = [1, 1]} : vector<2x256xf32> to vector<2x128xf32>
    %c0_128 = arith.constant 0 : index
    %c0_129 = arith.constant 0 : index
    %247 = vector.load %arg4[%c0_128, %c0_129] : memref<2x32xf32, #tpu.memory_space<vmem>>, vector<2x32xf32>
    %248 = arith.truncf %247 : vector<2x32xf32> to vector<2x32xbf16>
    %c0_130 = arith.constant 0 : index
    %c0_131 = arith.constant 0 : index
    %249 = vector.load %arg1[%c0_130, %c0_131] : memref<32x128xbf16, #tpu.memory_space<vmem>>, vector<32x128xbf16>
    %cst_132 = arith.constant dense<0.000000e+00> : vector<2x128xf32>
    %250 = tpu.matmul %248, %249, %cst_132 {dimension_numbers = #tpu.dot_dimension_numbers<[1], [0], [0], [1], [0, 0, 1, 1], [], []>} : vector<2x32xbf16>, vector<32x128xbf16>, vector<2x128xf32> -> vector<2x128xf32>
    %251 = arith.addf %246, %250 : vector<2x128xf32>
    %252 = vector.extract_strided_slice %245 {offsets = [0, 128], sizes = [2, 128], strides = [1, 1]} : vector<2x256xf32> to vector<2x128xf32>
    %c0_133 = arith.constant 0 : index
    %c0_134 = arith.constant 0 : index
    %253 = vector.load %arg6[%c0_133, %c0_134] : memref<2x32xf32, #tpu.memory_space<vmem>>, vector<2x32xf32>
    %254 = arith.truncf %253 : vector<2x32xf32> to vector<2x32xbf16>
    %c0_135 = arith.constant 0 : index
    %c0_136 = arith.constant 0 : index
    %255 = vector.load %arg2[%c0_135, %c0_136] : memref<32x128xbf16, #tpu.memory_space<vmem>>, vector<32x128xbf16>
    %cst_137 = arith.constant dense<0.000000e+00> : vector<2x128xf32>
    %256 = tpu.matmul %254, %255, %cst_137 {dimension_numbers = #tpu.dot_dimension_numbers<[1], [0], [0], [1], [0, 0, 1, 1], [], []>} : vector<2x32xbf16>, vector<32x128xbf16>, vector<2x128xf32> -> vector<2x128xf32>
    %257 = arith.addf %252, %256 : vector<2x128xf32>
    %c0_138 = arith.constant 0 : index
    %c0_139 = arith.constant 0 : index
    %258 = vector.load %arg5[%c0_138, %c0_139] : memref<2x32xf32, #tpu.memory_space<vmem>>, vector<2x32xf32>
    %259 = vector.extract_strided_slice %251 {offsets = [0, 0], sizes = [2, 32], strides = [1, 1]} : vector<2x128xf32> to vector<2x32xf32>
    %260 = arith.negf %259 : vector<2x32xf32>
    %261 = math.exp %260 : vector<2x32xf32>
    %cst_140 = arith.constant 1.000000e+00 : f32
    %262 = vector.broadcast %cst_140 : f32 to vector<2x32xf32>
    %263 = arith.addf %262, %261 : vector<2x32xf32>
    %264 = arith.divf %262, %263 : vector<2x32xf32>
    %265 = vector.extract_strided_slice %251 {offsets = [0, 32], sizes = [2, 32], strides = [1, 1]} : vector<2x128xf32> to vector<2x32xf32>
    %266 = arith.negf %265 : vector<2x32xf32>
    %267 = math.exp %266 : vector<2x32xf32>
    %cst_141 = arith.constant 1.000000e+00 : f32
    %268 = vector.broadcast %cst_141 : f32 to vector<2x32xf32>
    %269 = arith.addf %268, %267 : vector<2x32xf32>
    %270 = arith.divf %268, %269 : vector<2x32xf32>
    %271 = vector.extract_strided_slice %251 {offsets = [0, 64], sizes = [2, 32], strides = [1, 1]} : vector<2x128xf32> to vector<2x32xf32>
    %272 = math.tanh %271 : vector<2x32xf32>
    %273 = vector.extract_strided_slice %251 {offsets = [0, 96], sizes = [2, 32], strides = [1, 1]} : vector<2x128xf32> to vector<2x32xf32>
    %274 = arith.negf %273 : vector<2x32xf32>
    %275 = math.exp %274 : vector<2x32xf32>
    %cst_142 = arith.constant 1.000000e+00 : f32
    %276 = vector.broadcast %cst_142 : f32 to vector<2x32xf32>
    %277 = arith.addf %276, %275 : vector<2x32xf32>
    %278 = arith.divf %276, %277 : vector<2x32xf32>
    %279 = arith.mulf %270, %258 : vector<2x32xf32>
    %280 = arith.mulf %264, %272 : vector<2x32xf32>
    %281 = arith.addf %279, %280 : vector<2x32xf32>
    %282 = math.tanh %281 : vector<2x32xf32>
    %283 = arith.mulf %278, %282 : vector<2x32xf32>
    %c0_143 = arith.constant 0 : index
    %c0_144 = arith.constant 0 : index
    %284 = vector.load %arg7[%c0_143, %c0_144] : memref<2x32xf32, #tpu.memory_space<vmem>>, vector<2x32xf32>
    %285 = vector.extract_strided_slice %257 {offsets = [0, 0], sizes = [2, 32], strides = [1, 1]} : vector<2x128xf32> to vector<2x32xf32>
    %286 = arith.negf %285 : vector<2x32xf32>
    %287 = math.exp %286 : vector<2x32xf32>
    %cst_145 = arith.constant 1.000000e+00 : f32
    %288 = vector.broadcast %cst_145 : f32 to vector<2x32xf32>
    %289 = arith.addf %288, %287 : vector<2x32xf32>
    %290 = arith.divf %288, %289 : vector<2x32xf32>
    %291 = vector.extract_strided_slice %257 {offsets = [0, 32], sizes = [2, 32], strides = [1, 1]} : vector<2x128xf32> to vector<2x32xf32>
    %292 = arith.negf %291 : vector<2x32xf32>
    %293 = math.exp %292 : vector<2x32xf32>
    %cst_146 = arith.constant 1.000000e+00 : f32
    %294 = vector.broadcast %cst_146 : f32 to vector<2x32xf32>
    %295 = arith.addf %294, %293 : vector<2x32xf32>
    %296 = arith.divf %294, %295 : vector<2x32xf32>
    %297 = vector.extract_strided_slice %257 {offsets = [0, 64], sizes = [2, 32], strides = [1, 1]} : vector<2x128xf32> to vector<2x32xf32>
    %298 = math.tanh %297 : vector<2x32xf32>
    %299 = vector.extract_strided_slice %257 {offsets = [0, 96], sizes = [2, 32], strides = [1, 1]} : vector<2x128xf32> to vector<2x32xf32>
    %300 = arith.negf %299 : vector<2x32xf32>
    %301 = math.exp %300 : vector<2x32xf32>
    %cst_147 = arith.constant 1.000000e+00 : f32
    %302 = vector.broadcast %cst_147 : f32 to vector<2x32xf32>
    %303 = arith.addf %302, %301 : vector<2x32xf32>
    %304 = arith.divf %302, %303 : vector<2x32xf32>
    %305 = arith.mulf %296, %284 : vector<2x32xf32>
    %306 = arith.mulf %290, %298 : vector<2x32xf32>
    %307 = arith.addf %305, %306 : vector<2x32xf32>
    %308 = math.tanh %307 : vector<2x32xf32>
    %309 = arith.mulf %304, %308 : vector<2x32xf32>
    %c0_148 = arith.constant 0 : index
    %c0_149 = arith.constant 0 : index
    %310 = vector.load %arg4[%c0_148, %c0_149] : memref<2x32xf32, #tpu.memory_space<vmem>>, vector<2x32xf32>
    tpu.vector_store %arg4[%c0_148, %c0_149], %283 {strides = array<i32>} : memref<2x32xf32, #tpu.memory_space<vmem>>, vector<2x32xf32>,
    %c0_150 = arith.constant 0 : index
    %c0_151 = arith.constant 0 : index
    %311 = vector.load %arg5[%c0_150, %c0_151] : memref<2x32xf32, #tpu.memory_space<vmem>>, vector<2x32xf32>
    tpu.vector_store %arg5[%c0_150, %c0_151], %281 {strides = array<i32>} : memref<2x32xf32, #tpu.memory_space<vmem>>, vector<2x32xf32>,
    %c0_152 = arith.constant 0 : index
    %c0_153 = arith.constant 0 : index
    %312 = vector.load %arg6[%c0_152, %c0_153] : memref<2x32xf32, #tpu.memory_space<vmem>>, vector<2x32xf32>
    tpu.vector_store %arg6[%c0_152, %c0_153], %309 {strides = array<i32>} : memref<2x32xf32, #tpu.memory_space<vmem>>, vector<2x32xf32>,
    %c0_154 = arith.constant 0 : index
    %c0_155 = arith.constant 0 : index
    %313 = vector.load %arg7[%c0_154, %c0_155] : memref<2x32xf32, #tpu.memory_space<vmem>>, vector<2x32xf32>
    tpu.vector_store %arg7[%c0_154, %c0_155], %307 {strides = array<i32>} : memref<2x32xf32, #tpu.memory_space<vmem>>, vector<2x32xf32>,
    %c3_156 = arith.constant 3 : index
    %c0_157 = arith.constant 0 : index
    %c0_158 = arith.constant 0 : index
    %314 = vector.load %arg3[%c3_156, %c0_157, %c0_158] : memref<8x2x64xf32, #tpu.memory_space<vmem>>, vector<1x2x32xf32>
    %315 = vector.shape_cast %314 : vector<1x2x32xf32> to vector<2x32xf32>
    %316 = vector.shape_cast %283 : vector<2x32xf32> to vector<1x2x32xf32>
    tpu.vector_store %arg3[%c3_156, %c0_157, %c0_158], %316 {strides = array<i32>} : memref<8x2x64xf32, #tpu.memory_space<vmem>>, vector<1x2x32xf32>,
    %c4_159 = arith.constant 4 : index
    %c0_160 = arith.constant 0 : index
    %c32_161 = arith.constant 32 : index
    %317 = vector.load %arg3[%c4_159, %c0_160, %c32_161] : memref<8x2x64xf32, #tpu.memory_space<vmem>>, vector<1x2x32xf32>
    %318 = vector.shape_cast %317 : vector<1x2x32xf32> to vector<2x32xf32>
    %319 = vector.shape_cast %309 : vector<2x32xf32> to vector<1x2x32xf32>
    tpu.vector_store %arg3[%c4_159, %c0_160, %c32_161], %319 {strides = array<i32>} : memref<8x2x64xf32, #tpu.memory_space<vmem>>, vector<1x2x32xf32>,
    %c4_162 = arith.constant 4 : index
    %c0_163 = arith.constant 0 : index
    %c0_164 = arith.constant 0 : index
    %320 = vector.load %arg0[%c4_162, %c0_163, %c0_164] : memref<8x2x256xf32, #tpu.memory_space<vmem>>, vector<1x2x256xf32>
    %321 = vector.shape_cast %320 : vector<1x2x256xf32> to vector<2x256xf32>
    %c3_165 = arith.constant 3 : index
    %c0_166 = arith.constant 0 : index
    %c0_167 = arith.constant 0 : index
    %322 = vector.load %arg0[%c3_165, %c0_166, %c0_167] : memref<8x2x256xf32, #tpu.memory_space<vmem>>, vector<1x2x256xf32>
    %323 = vector.shape_cast %322 : vector<1x2x256xf32> to vector<2x256xf32>
    %324 = vector.extract_strided_slice %321 {offsets = [0, 0], sizes = [2, 128], strides = [1, 1]} : vector<2x256xf32> to vector<2x128xf32>
    %c0_168 = arith.constant 0 : index
    %c0_169 = arith.constant 0 : index
    %325 = vector.load %arg4[%c0_168, %c0_169] : memref<2x32xf32, #tpu.memory_space<vmem>>, vector<2x32xf32>
    %326 = arith.truncf %325 : vector<2x32xf32> to vector<2x32xbf16>
    %c0_170 = arith.constant 0 : index
    %c0_171 = arith.constant 0 : index
    %327 = vector.load %arg1[%c0_170, %c0_171] : memref<32x128xbf16, #tpu.memory_space<vmem>>, vector<32x128xbf16>
    %cst_172 = arith.constant dense<0.000000e+00> : vector<2x128xf32>
    %328 = tpu.matmul %326, %327, %cst_172 {dimension_numbers = #tpu.dot_dimension_numbers<[1], [0], [0], [1], [0, 0, 1, 1], [], []>} : vector<2x32xbf16>, vector<32x128xbf16>, vector<2x128xf32> -> vector<2x128xf32>
    %329 = arith.addf %324, %328 : vector<2x128xf32>
    %330 = vector.extract_strided_slice %323 {offsets = [0, 128], sizes = [2, 128], strides = [1, 1]} : vector<2x256xf32> to vector<2x128xf32>
    %c0_173 = arith.constant 0 : index
    %c0_174 = arith.constant 0 : index
    %331 = vector.load %arg6[%c0_173, %c0_174] : memref<2x32xf32, #tpu.memory_space<vmem>>, vector<2x32xf32>
    %332 = arith.truncf %331 : vector<2x32xf32> to vector<2x32xbf16>
    %c0_175 = arith.constant 0 : index
    %c0_176 = arith.constant 0 : index
    %333 = vector.load %arg2[%c0_175, %c0_176] : memref<32x128xbf16, #tpu.memory_space<vmem>>, vector<32x128xbf16>
    %cst_177 = arith.constant dense<0.000000e+00> : vector<2x128xf32>
    %334 = tpu.matmul %332, %333, %cst_177 {dimension_numbers = #tpu.dot_dimension_numbers<[1], [0], [0], [1], [0, 0, 1, 1], [], []>} : vector<2x32xbf16>, vector<32x128xbf16>, vector<2x128xf32> -> vector<2x128xf32>
    %335 = arith.addf %330, %334 : vector<2x128xf32>
    %c0_178 = arith.constant 0 : index
    %c0_179 = arith.constant 0 : index
    %336 = vector.load %arg5[%c0_178, %c0_179] : memref<2x32xf32, #tpu.memory_space<vmem>>, vector<2x32xf32>
    %337 = vector.extract_strided_slice %329 {offsets = [0, 0], sizes = [2, 32], strides = [1, 1]} : vector<2x128xf32> to vector<2x32xf32>
    %338 = arith.negf %337 : vector<2x32xf32>
    %339 = math.exp %338 : vector<2x32xf32>
    %cst_180 = arith.constant 1.000000e+00 : f32
    %340 = vector.broadcast %cst_180 : f32 to vector<2x32xf32>
    %341 = arith.addf %340, %339 : vector<2x32xf32>
    %342 = arith.divf %340, %341 : vector<2x32xf32>
    %343 = vector.extract_strided_slice %329 {offsets = [0, 32], sizes = [2, 32], strides = [1, 1]} : vector<2x128xf32> to vector<2x32xf32>
    %344 = arith.negf %343 : vector<2x32xf32>
    %345 = math.exp %344 : vector<2x32xf32>
    %cst_181 = arith.constant 1.000000e+00 : f32
    %346 = vector.broadcast %cst_181 : f32 to vector<2x32xf32>
    %347 = arith.addf %346, %345 : vector<2x32xf32>
    %348 = arith.divf %346, %347 : vector<2x32xf32>
    %349 = vector.extract_strided_slice %329 {offsets = [0, 64], sizes = [2, 32], strides = [1, 1]} : vector<2x128xf32> to vector<2x32xf32>
    %350 = math.tanh %349 : vector<2x32xf32>
    %351 = vector.extract_strided_slice %329 {offsets = [0, 96], sizes = [2, 32], strides = [1, 1]} : vector<2x128xf32> to vector<2x32xf32>
    %352 = arith.negf %351 : vector<2x32xf32>
    %353 = math.exp %352 : vector<2x32xf32>
    %cst_182 = arith.constant 1.000000e+00 : f32
    %354 = vector.broadcast %cst_182 : f32 to vector<2x32xf32>
    %355 = arith.addf %354, %353 : vector<2x32xf32>
    %356 = arith.divf %354, %355 : vector<2x32xf32>
    %357 = arith.mulf %348, %336 : vector<2x32xf32>
    %358 = arith.mulf %342, %350 : vector<2x32xf32>
    %359 = arith.addf %357, %358 : vector<2x32xf32>
    %360 = math.tanh %359 : vector<2x32xf32>
    %361 = arith.mulf %356, %360 : vector<2x32xf32>
    %c0_183 = arith.constant 0 : index
    %c0_184 = arith.constant 0 : index
    %362 = vector.load %arg7[%c0_183, %c0_184] : memref<2x32xf32, #tpu.memory_space<vmem>>, vector<2x32xf32>
    %363 = vector.extract_strided_slice %335 {offsets = [0, 0], sizes = [2, 32], strides = [1, 1]} : vector<2x128xf32> to vector<2x32xf32>
    %364 = arith.negf %363 : vector<2x32xf32>
    %365 = math.exp %364 : vector<2x32xf32>
    %cst_185 = arith.constant 1.000000e+00 : f32
    %366 = vector.broadcast %cst_185 : f32 to vector<2x32xf32>
    %367 = arith.addf %366, %365 : vector<2x32xf32>
    %368 = arith.divf %366, %367 : vector<2x32xf32>
    %369 = vector.extract_strided_slice %335 {offsets = [0, 32], sizes = [2, 32], strides = [1, 1]} : vector<2x128xf32> to vector<2x32xf32>
    %370 = arith.negf %369 : vector<2x32xf32>
    %371 = math.exp %370 : vector<2x32xf32>
    %cst_186 = arith.constant 1.000000e+00 : f32
    %372 = vector.broadcast %cst_186 : f32 to vector<2x32xf32>
    %373 = arith.addf %372, %371 : vector<2x32xf32>
    %374 = arith.divf %372, %373 : vector<2x32xf32>
    %375 = vector.extract_strided_slice %335 {offsets = [0, 64], sizes = [2, 32], strides = [1, 1]} : vector<2x128xf32> to vector<2x32xf32>
    %376 = math.tanh %375 : vector<2x32xf32>
    %377 = vector.extract_strided_slice %335 {offsets = [0, 96], sizes = [2, 32], strides = [1, 1]} : vector<2x128xf32> to vector<2x32xf32>
    %378 = arith.negf %377 : vector<2x32xf32>
    %379 = math.exp %378 : vector<2x32xf32>
    %cst_187 = arith.constant 1.000000e+00 : f32
    %380 = vector.broadcast %cst_187 : f32 to vector<2x32xf32>
    %381 = arith.addf %380, %379 : vector<2x32xf32>
    %382 = arith.divf %380, %381 : vector<2x32xf32>
    %383 = arith.mulf %374, %362 : vector<2x32xf32>
    %384 = arith.mulf %368, %376 : vector<2x32xf32>
    %385 = arith.addf %383, %384 : vector<2x32xf32>
    %386 = math.tanh %385 : vector<2x32xf32>
    %387 = arith.mulf %382, %386 : vector<2x32xf32>
    %c0_188 = arith.constant 0 : index
    %c0_189 = arith.constant 0 : index
    %388 = vector.load %arg4[%c0_188, %c0_189] : memref<2x32xf32, #tpu.memory_space<vmem>>, vector<2x32xf32>
    tpu.vector_store %arg4[%c0_188, %c0_189], %361 {strides = array<i32>} : memref<2x32xf32, #tpu.memory_space<vmem>>, vector<2x32xf32>,
    %c0_190 = arith.constant 0 : index
    %c0_191 = arith.constant 0 : index
    %389 = vector.load %arg5[%c0_190, %c0_191] : memref<2x32xf32, #tpu.memory_space<vmem>>, vector<2x32xf32>
    tpu.vector_store %arg5[%c0_190, %c0_191], %359 {strides = array<i32>} : memref<2x32xf32, #tpu.memory_space<vmem>>, vector<2x32xf32>,
    %c0_192 = arith.constant 0 : index
    %c0_193 = arith.constant 0 : index
    %390 = vector.load %arg6[%c0_192, %c0_193] : memref<2x32xf32, #tpu.memory_space<vmem>>, vector<2x32xf32>
    tpu.vector_store %arg6[%c0_192, %c0_193], %387 {strides = array<i32>} : memref<2x32xf32, #tpu.memory_space<vmem>>, vector<2x32xf32>,
    %c0_194 = arith.constant 0 : index
    %c0_195 = arith.constant 0 : index
    %391 = vector.load %arg7[%c0_194, %c0_195] : memref<2x32xf32, #tpu.memory_space<vmem>>, vector<2x32xf32>
    tpu.vector_store %arg7[%c0_194, %c0_195], %385 {strides = array<i32>} : memref<2x32xf32, #tpu.memory_space<vmem>>, vector<2x32xf32>,
    %c4_196 = arith.constant 4 : index
    %c0_197 = arith.constant 0 : index
    %c0_198 = arith.constant 0 : index
    %392 = vector.load %arg3[%c4_196, %c0_197, %c0_198] : memref<8x2x64xf32, #tpu.memory_space<vmem>>, vector<1x2x32xf32>
    %393 = vector.shape_cast %392 : vector<1x2x32xf32> to vector<2x32xf32>
    %394 = vector.shape_cast %361 : vector<2x32xf32> to vector<1x2x32xf32>
    tpu.vector_store %arg3[%c4_196, %c0_197, %c0_198], %394 {strides = array<i32>} : memref<8x2x64xf32, #tpu.memory_space<vmem>>, vector<1x2x32xf32>,
    %c3_199 = arith.constant 3 : index
    %c0_200 = arith.constant 0 : index
    %c32_201 = arith.constant 32 : index
    %395 = vector.load %arg3[%c3_199, %c0_200, %c32_201] : memref<8x2x64xf32, #tpu.memory_space<vmem>>, vector<1x2x32xf32>
    %396 = vector.shape_cast %395 : vector<1x2x32xf32> to vector<2x32xf32>
    %397 = vector.shape_cast %387 : vector<2x32xf32> to vector<1x2x32xf32>
    tpu.vector_store %arg3[%c3_199, %c0_200, %c32_201], %397 {strides = array<i32>} : memref<8x2x64xf32, #tpu.memory_space<vmem>>, vector<1x2x32xf32>,
    %c5_202 = arith.constant 5 : index
    %c0_203 = arith.constant 0 : index
    %c0_204 = arith.constant 0 : index
    %398 = vector.load %arg0[%c5_202, %c0_203, %c0_204] : memref<8x2x256xf32, #tpu.memory_space<vmem>>, vector<1x2x256xf32>
    %399 = vector.shape_cast %398 : vector<1x2x256xf32> to vector<2x256xf32>
    %c2_205 = arith.constant 2 : index
    %c0_206 = arith.constant 0 : index
    %c0_207 = arith.constant 0 : index
    %400 = vector.load %arg0[%c2_205, %c0_206, %c0_207] : memref<8x2x256xf32, #tpu.memory_space<vmem>>, vector<1x2x256xf32>
    %401 = vector.shape_cast %400 : vector<1x2x256xf32> to vector<2x256xf32>
    %402 = vector.extract_strided_slice %399 {offsets = [0, 0], sizes = [2, 128], strides = [1, 1]} : vector<2x256xf32> to vector<2x128xf32>
    %c0_208 = arith.constant 0 : index
    %c0_209 = arith.constant 0 : index
    %403 = vector.load %arg4[%c0_208, %c0_209] : memref<2x32xf32, #tpu.memory_space<vmem>>, vector<2x32xf32>
    %404 = arith.truncf %403 : vector<2x32xf32> to vector<2x32xbf16>
    %c0_210 = arith.constant 0 : index
    %c0_211 = arith.constant 0 : index
    %405 = vector.load %arg1[%c0_210, %c0_211] : memref<32x128xbf16, #tpu.memory_space<vmem>>, vector<32x128xbf16>
    %cst_212 = arith.constant dense<0.000000e+00> : vector<2x128xf32>
    %406 = tpu.matmul %404, %405, %cst_212 {dimension_numbers = #tpu.dot_dimension_numbers<[1], [0], [0], [1], [0, 0, 1, 1], [], []>} : vector<2x32xbf16>, vector<32x128xbf16>, vector<2x128xf32> -> vector<2x128xf32>
    %407 = arith.addf %402, %406 : vector<2x128xf32>
    %408 = vector.extract_strided_slice %401 {offsets = [0, 128], sizes = [2, 128], strides = [1, 1]} : vector<2x256xf32> to vector<2x128xf32>
    %c0_213 = arith.constant 0 : index
    %c0_214 = arith.constant 0 : index
    %409 = vector.load %arg6[%c0_213, %c0_214] : memref<2x32xf32, #tpu.memory_space<vmem>>, vector<2x32xf32>
    %410 = arith.truncf %409 : vector<2x32xf32> to vector<2x32xbf16>
    %c0_215 = arith.constant 0 : index
    %c0_216 = arith.constant 0 : index
    %411 = vector.load %arg2[%c0_215, %c0_216] : memref<32x128xbf16, #tpu.memory_space<vmem>>, vector<32x128xbf16>
    %cst_217 = arith.constant dense<0.000000e+00> : vector<2x128xf32>
    %412 = tpu.matmul %410, %411, %cst_217 {dimension_numbers = #tpu.dot_dimension_numbers<[1], [0], [0], [1], [0, 0, 1, 1], [], []>} : vector<2x32xbf16>, vector<32x128xbf16>, vector<2x128xf32> -> vector<2x128xf32>
    %413 = arith.addf %408, %412 : vector<2x128xf32>
    %c0_218 = arith.constant 0 : index
    %c0_219 = arith.constant 0 : index
    %414 = vector.load %arg5[%c0_218, %c0_219] : memref<2x32xf32, #tpu.memory_space<vmem>>, vector<2x32xf32>
    %415 = vector.extract_strided_slice %407 {offsets = [0, 0], sizes = [2, 32], strides = [1, 1]} : vector<2x128xf32> to vector<2x32xf32>
    %416 = arith.negf %415 : vector<2x32xf32>
    %417 = math.exp %416 : vector<2x32xf32>
    %cst_220 = arith.constant 1.000000e+00 : f32
    %418 = vector.broadcast %cst_220 : f32 to vector<2x32xf32>
    %419 = arith.addf %418, %417 : vector<2x32xf32>
    %420 = arith.divf %418, %419 : vector<2x32xf32>
    %421 = vector.extract_strided_slice %407 {offsets = [0, 32], sizes = [2, 32], strides = [1, 1]} : vector<2x128xf32> to vector<2x32xf32>
    %422 = arith.negf %421 : vector<2x32xf32>
    %423 = math.exp %422 : vector<2x32xf32>
    %cst_221 = arith.constant 1.000000e+00 : f32
    %424 = vector.broadcast %cst_221 : f32 to vector<2x32xf32>
    %425 = arith.addf %424, %423 : vector<2x32xf32>
    %426 = arith.divf %424, %425 : vector<2x32xf32>
    %427 = vector.extract_strided_slice %407 {offsets = [0, 64], sizes = [2, 32], strides = [1, 1]} : vector<2x128xf32> to vector<2x32xf32>
    %428 = math.tanh %427 : vector<2x32xf32>
    %429 = vector.extract_strided_slice %407 {offsets = [0, 96], sizes = [2, 32], strides = [1, 1]} : vector<2x128xf32> to vector<2x32xf32>
    %430 = arith.negf %429 : vector<2x32xf32>
    %431 = math.exp %430 : vector<2x32xf32>
    %cst_222 = arith.constant 1.000000e+00 : f32
    %432 = vector.broadcast %cst_222 : f32 to vector<2x32xf32>
    %433 = arith.addf %432, %431 : vector<2x32xf32>
    %434 = arith.divf %432, %433 : vector<2x32xf32>
    %435 = arith.mulf %426, %414 : vector<2x32xf32>
    %436 = arith.mulf %420, %428 : vector<2x32xf32>
    %437 = arith.addf %435, %436 : vector<2x32xf32>
    %438 = math.tanh %437 : vector<2x32xf32>
    %439 = arith.mulf %434, %438 : vector<2x32xf32>
    %c0_223 = arith.constant 0 : index
    %c0_224 = arith.constant 0 : index
    %440 = vector.load %arg7[%c0_223, %c0_224] : memref<2x32xf32, #tpu.memory_space<vmem>>, vector<2x32xf32>
    %441 = vector.extract_strided_slice %413 {offsets = [0, 0], sizes = [2, 32], strides = [1, 1]} : vector<2x128xf32> to vector<2x32xf32>
    %442 = arith.negf %441 : vector<2x32xf32>
    %443 = math.exp %442 : vector<2x32xf32>
    %cst_225 = arith.constant 1.000000e+00 : f32
    %444 = vector.broadcast %cst_225 : f32 to vector<2x32xf32>
    %445 = arith.addf %444, %443 : vector<2x32xf32>
    %446 = arith.divf %444, %445 : vector<2x32xf32>
    %447 = vector.extract_strided_slice %413 {offsets = [0, 32], sizes = [2, 32], strides = [1, 1]} : vector<2x128xf32> to vector<2x32xf32>
    %448 = arith.negf %447 : vector<2x32xf32>
    %449 = math.exp %448 : vector<2x32xf32>
    %cst_226 = arith.constant 1.000000e+00 : f32
    %450 = vector.broadcast %cst_226 : f32 to vector<2x32xf32>
    %451 = arith.addf %450, %449 : vector<2x32xf32>
    %452 = arith.divf %450, %451 : vector<2x32xf32>
    %453 = vector.extract_strided_slice %413 {offsets = [0, 64], sizes = [2, 32], strides = [1, 1]} : vector<2x128xf32> to vector<2x32xf32>
    %454 = math.tanh %453 : vector<2x32xf32>
    %455 = vector.extract_strided_slice %413 {offsets = [0, 96], sizes = [2, 32], strides = [1, 1]} : vector<2x128xf32> to vector<2x32xf32>
    %456 = arith.negf %455 : vector<2x32xf32>
    %457 = math.exp %456 : vector<2x32xf32>
    %cst_227 = arith.constant 1.000000e+00 : f32
    %458 = vector.broadcast %cst_227 : f32 to vector<2x32xf32>
    %459 = arith.addf %458, %457 : vector<2x32xf32>
    %460 = arith.divf %458, %459 : vector<2x32xf32>
    %461 = arith.mulf %452, %440 : vector<2x32xf32>
    %462 = arith.mulf %446, %454 : vector<2x32xf32>
    %463 = arith.addf %461, %462 : vector<2x32xf32>
    %464 = math.tanh %463 : vector<2x32xf32>
    %465 = arith.mulf %460, %464 : vector<2x32xf32>
    %c0_228 = arith.constant 0 : index
    %c0_229 = arith.constant 0 : index
    %466 = vector.load %arg4[%c0_228, %c0_229] : memref<2x32xf32, #tpu.memory_space<vmem>>, vector<2x32xf32>
    tpu.vector_store %arg4[%c0_228, %c0_229], %439 {strides = array<i32>} : memref<2x32xf32, #tpu.memory_space<vmem>>, vector<2x32xf32>,
    %c0_230 = arith.constant 0 : index
    %c0_231 = arith.constant 0 : index
    %467 = vector.load %arg5[%c0_230, %c0_231] : memref<2x32xf32, #tpu.memory_space<vmem>>, vector<2x32xf32>
    tpu.vector_store %arg5[%c0_230, %c0_231], %437 {strides = array<i32>} : memref<2x32xf32, #tpu.memory_space<vmem>>, vector<2x32xf32>,
    %c0_232 = arith.constant 0 : index
    %c0_233 = arith.constant 0 : index
    %468 = vector.load %arg6[%c0_232, %c0_233] : memref<2x32xf32, #tpu.memory_space<vmem>>, vector<2x32xf32>
    tpu.vector_store %arg6[%c0_232, %c0_233], %465 {strides = array<i32>} : memref<2x32xf32, #tpu.memory_space<vmem>>, vector<2x32xf32>,
    %c0_234 = arith.constant 0 : index
    %c0_235 = arith.constant 0 : index
    %469 = vector.load %arg7[%c0_234, %c0_235] : memref<2x32xf32, #tpu.memory_space<vmem>>, vector<2x32xf32>
    tpu.vector_store %arg7[%c0_234, %c0_235], %463 {strides = array<i32>} : memref<2x32xf32, #tpu.memory_space<vmem>>, vector<2x32xf32>,
    %c5_236 = arith.constant 5 : index
    %c0_237 = arith.constant 0 : index
    %c0_238 = arith.constant 0 : index
    %470 = vector.load %arg3[%c5_236, %c0_237, %c0_238] : memref<8x2x64xf32, #tpu.memory_space<vmem>>, vector<1x2x32xf32>
    %471 = vector.shape_cast %470 : vector<1x2x32xf32> to vector<2x32xf32>
    %472 = vector.shape_cast %439 : vector<2x32xf32> to vector<1x2x32xf32>
    tpu.vector_store %arg3[%c5_236, %c0_237, %c0_238], %472 {strides = array<i32>} : memref<8x2x64xf32, #tpu.memory_space<vmem>>, vector<1x2x32xf32>,
    %c2_239 = arith.constant 2 : index
    %c0_240 = arith.constant 0 : index
    %c32_241 = arith.constant 32 : index
    %473 = vector.load %arg3[%c2_239, %c0_240, %c32_241] : memref<8x2x64xf32, #tpu.memory_space<vmem>>, vector<1x2x32xf32>
    %474 = vector.shape_cast %473 : vector<1x2x32xf32> to vector<2x32xf32>
    %475 = vector.shape_cast %465 : vector<2x32xf32> to vector<1x2x32xf32>
    tpu.vector_store %arg3[%c2_239, %c0_240, %c32_241], %475 {strides = array<i32>} : memref<8x2x64xf32, #tpu.memory_space<vmem>>, vector<1x2x32xf32>,
    %c6_242 = arith.constant 6 : index
    %c0_243 = arith.constant 0 : index
    %c0_244 = arith.constant 0 : index
    %476 = vector.load %arg0[%c6_242, %c0_243, %c0_244] : memref<8x2x256xf32, #tpu.memory_space<vmem>>, vector<1x2x256xf32>
    %477 = vector.shape_cast %476 : vector<1x2x256xf32> to vector<2x256xf32>
    %c1_245 = arith.constant 1 : index
    %c0_246 = arith.constant 0 : index
    %c0_247 = arith.constant 0 : index
    %478 = vector.load %arg0[%c1_245, %c0_246, %c0_247] : memref<8x2x256xf32, #tpu.memory_space<vmem>>, vector<1x2x256xf32>
    %479 = vector.shape_cast %478 : vector<1x2x256xf32> to vector<2x256xf32>
    %480 = vector.extract_strided_slice %477 {offsets = [0, 0], sizes = [2, 128], strides = [1, 1]} : vector<2x256xf32> to vector<2x128xf32>
    %c0_248 = arith.constant 0 : index
    %c0_249 = arith.constant 0 : index
    %481 = vector.load %arg4[%c0_248, %c0_249] : memref<2x32xf32, #tpu.memory_space<vmem>>, vector<2x32xf32>
    %482 = arith.truncf %481 : vector<2x32xf32> to vector<2x32xbf16>
    %c0_250 = arith.constant 0 : index
    %c0_251 = arith.constant 0 : index
    %483 = vector.load %arg1[%c0_250, %c0_251] : memref<32x128xbf16, #tpu.memory_space<vmem>>, vector<32x128xbf16>
    %cst_252 = arith.constant dense<0.000000e+00> : vector<2x128xf32>
    %484 = tpu.matmul %482, %483, %cst_252 {dimension_numbers = #tpu.dot_dimension_numbers<[1], [0], [0], [1], [0, 0, 1, 1], [], []>} : vector<2x32xbf16>, vector<32x128xbf16>, vector<2x128xf32> -> vector<2x128xf32>
    %485 = arith.addf %480, %484 : vector<2x128xf32>
    %486 = vector.extract_strided_slice %479 {offsets = [0, 128], sizes = [2, 128], strides = [1, 1]} : vector<2x256xf32> to vector<2x128xf32>
    %c0_253 = arith.constant 0 : index
    %c0_254 = arith.constant 0 : index
    %487 = vector.load %arg6[%c0_253, %c0_254] : memref<2x32xf32, #tpu.memory_space<vmem>>, vector<2x32xf32>
    %488 = arith.truncf %487 : vector<2x32xf32> to vector<2x32xbf16>
    %c0_255 = arith.constant 0 : index
    %c0_256 = arith.constant 0 : index
    %489 = vector.load %arg2[%c0_255, %c0_256] : memref<32x128xbf16, #tpu.memory_space<vmem>>, vector<32x128xbf16>
    %cst_257 = arith.constant dense<0.000000e+00> : vector<2x128xf32>
    %490 = tpu.matmul %488, %489, %cst_257 {dimension_numbers = #tpu.dot_dimension_numbers<[1], [0], [0], [1], [0, 0, 1, 1], [], []>} : vector<2x32xbf16>, vector<32x128xbf16>, vector<2x128xf32> -> vector<2x128xf32>
    %491 = arith.addf %486, %490 : vector<2x128xf32>
    %c0_258 = arith.constant 0 : index
    %c0_259 = arith.constant 0 : index
    %492 = vector.load %arg5[%c0_258, %c0_259] : memref<2x32xf32, #tpu.memory_space<vmem>>, vector<2x32xf32>
    %493 = vector.extract_strided_slice %485 {offsets = [0, 0], sizes = [2, 32], strides = [1, 1]} : vector<2x128xf32> to vector<2x32xf32>
    %494 = arith.negf %493 : vector<2x32xf32>
    %495 = math.exp %494 : vector<2x32xf32>
    %cst_260 = arith.constant 1.000000e+00 : f32
    %496 = vector.broadcast %cst_260 : f32 to vector<2x32xf32>
    %497 = arith.addf %496, %495 : vector<2x32xf32>
    %498 = arith.divf %496, %497 : vector<2x32xf32>
    %499 = vector.extract_strided_slice %485 {offsets = [0, 32], sizes = [2, 32], strides = [1, 1]} : vector<2x128xf32> to vector<2x32xf32>
    %500 = arith.negf %499 : vector<2x32xf32>
    %501 = math.exp %500 : vector<2x32xf32>
    %cst_261 = arith.constant 1.000000e+00 : f32
    %502 = vector.broadcast %cst_261 : f32 to vector<2x32xf32>
    %503 = arith.addf %502, %501 : vector<2x32xf32>
    %504 = arith.divf %502, %503 : vector<2x32xf32>
    %505 = vector.extract_strided_slice %485 {offsets = [0, 64], sizes = [2, 32], strides = [1, 1]} : vector<2x128xf32> to vector<2x32xf32>
    %506 = math.tanh %505 : vector<2x32xf32>
    %507 = vector.extract_strided_slice %485 {offsets = [0, 96], sizes = [2, 32], strides = [1, 1]} : vector<2x128xf32> to vector<2x32xf32>
    %508 = arith.negf %507 : vector<2x32xf32>
    %509 = math.exp %508 : vector<2x32xf32>
    %cst_262 = arith.constant 1.000000e+00 : f32
    %510 = vector.broadcast %cst_262 : f32 to vector<2x32xf32>
    %511 = arith.addf %510, %509 : vector<2x32xf32>
    %512 = arith.divf %510, %511 : vector<2x32xf32>
    %513 = arith.mulf %504, %492 : vector<2x32xf32>
    %514 = arith.mulf %498, %506 : vector<2x32xf32>
    %515 = arith.addf %513, %514 : vector<2x32xf32>
    %516 = math.tanh %515 : vector<2x32xf32>
    %517 = arith.mulf %512, %516 : vector<2x32xf32>
    %c0_263 = arith.constant 0 : index
    %c0_264 = arith.constant 0 : index
    %518 = vector.load %arg7[%c0_263, %c0_264] : memref<2x32xf32, #tpu.memory_space<vmem>>, vector<2x32xf32>
    %519 = vector.extract_strided_slice %491 {offsets = [0, 0], sizes = [2, 32], strides = [1, 1]} : vector<2x128xf32> to vector<2x32xf32>
    %520 = arith.negf %519 : vector<2x32xf32>
    %521 = math.exp %520 : vector<2x32xf32>
    %cst_265 = arith.constant 1.000000e+00 : f32
    %522 = vector.broadcast %cst_265 : f32 to vector<2x32xf32>
    %523 = arith.addf %522, %521 : vector<2x32xf32>
    %524 = arith.divf %522, %523 : vector<2x32xf32>
    %525 = vector.extract_strided_slice %491 {offsets = [0, 32], sizes = [2, 32], strides = [1, 1]} : vector<2x128xf32> to vector<2x32xf32>
    %526 = arith.negf %525 : vector<2x32xf32>
    %527 = math.exp %526 : vector<2x32xf32>
    %cst_266 = arith.constant 1.000000e+00 : f32
    %528 = vector.broadcast %cst_266 : f32 to vector<2x32xf32>
    %529 = arith.addf %528, %527 : vector<2x32xf32>
    %530 = arith.divf %528, %529 : vector<2x32xf32>
    %531 = vector.extract_strided_slice %491 {offsets = [0, 64], sizes = [2, 32], strides = [1, 1]} : vector<2x128xf32> to vector<2x32xf32>
    %532 = math.tanh %531 : vector<2x32xf32>
    %533 = vector.extract_strided_slice %491 {offsets = [0, 96], sizes = [2, 32], strides = [1, 1]} : vector<2x128xf32> to vector<2x32xf32>
    %534 = arith.negf %533 : vector<2x32xf32>
    %535 = math.exp %534 : vector<2x32xf32>
    %cst_267 = arith.constant 1.000000e+00 : f32
    %536 = vector.broadcast %cst_267 : f32 to vector<2x32xf32>
    %537 = arith.addf %536, %535 : vector<2x32xf32>
    %538 = arith.divf %536, %537 : vector<2x32xf32>
    %539 = arith.mulf %530, %518 : vector<2x32xf32>
    %540 = arith.mulf %524, %532 : vector<2x32xf32>
    %541 = arith.addf %539, %540 : vector<2x32xf32>
    %542 = math.tanh %541 : vector<2x32xf32>
    %543 = arith.mulf %538, %542 : vector<2x32xf32>
    %c0_268 = arith.constant 0 : index
    %c0_269 = arith.constant 0 : index
    %544 = vector.load %arg4[%c0_268, %c0_269] : memref<2x32xf32, #tpu.memory_space<vmem>>, vector<2x32xf32>
    tpu.vector_store %arg4[%c0_268, %c0_269], %517 {strides = array<i32>} : memref<2x32xf32, #tpu.memory_space<vmem>>, vector<2x32xf32>,
    %c0_270 = arith.constant 0 : index
    %c0_271 = arith.constant 0 : index
    %545 = vector.load %arg5[%c0_270, %c0_271] : memref<2x32xf32, #tpu.memory_space<vmem>>, vector<2x32xf32>
    tpu.vector_store %arg5[%c0_270, %c0_271], %515 {strides = array<i32>} : memref<2x32xf32, #tpu.memory_space<vmem>>, vector<2x32xf32>,
    %c0_272 = arith.constant 0 : index
    %c0_273 = arith.constant 0 : index
    %546 = vector.load %arg6[%c0_272, %c0_273] : memref<2x32xf32, #tpu.memory_space<vmem>>, vector<2x32xf32>
    tpu.vector_store %arg6[%c0_272, %c0_273], %543 {strides = array<i32>} : memref<2x32xf32, #tpu.memory_space<vmem>>, vector<2x32xf32>,
    %c0_274 = arith.constant 0 : index
    %c0_275 = arith.constant 0 : index
    %547 = vector.load %arg7[%c0_274, %c0_275] : memref<2x32xf32, #tpu.memory_space<vmem>>, vector<2x32xf32>
    tpu.vector_store %arg7[%c0_274, %c0_275], %541 {strides = array<i32>} : memref<2x32xf32, #tpu.memory_space<vmem>>, vector<2x32xf32>,
    %c6_276 = arith.constant 6 : index
    %c0_277 = arith.constant 0 : index
    %c0_278 = arith.constant 0 : index
    %548 = vector.load %arg3[%c6_276, %c0_277, %c0_278] : memref<8x2x64xf32, #tpu.memory_space<vmem>>, vector<1x2x32xf32>
    %549 = vector.shape_cast %548 : vector<1x2x32xf32> to vector<2x32xf32>
    %550 = vector.shape_cast %517 : vector<2x32xf32> to vector<1x2x32xf32>
    tpu.vector_store %arg3[%c6_276, %c0_277, %c0_278], %550 {strides = array<i32>} : memref<8x2x64xf32, #tpu.memory_space<vmem>>, vector<1x2x32xf32>,
    %c1_279 = arith.constant 1 : index
    %c0_280 = arith.constant 0 : index
    %c32_281 = arith.constant 32 : index
    %551 = vector.load %arg3[%c1_279, %c0_280, %c32_281] : memref<8x2x64xf32, #tpu.memory_space<vmem>>, vector<1x2x32xf32>
    %552 = vector.shape_cast %551 : vector<1x2x32xf32> to vector<2x32xf32>
    %553 = vector.shape_cast %543 : vector<2x32xf32> to vector<1x2x32xf32>
    tpu.vector_store %arg3[%c1_279, %c0_280, %c32_281], %553 {strides = array<i32>} : memref<8x2x64xf32, #tpu.memory_space<vmem>>, vector<1x2x32xf32>,
    %c7_282 = arith.constant 7 : index
    %c0_283 = arith.constant 0 : index
    %c0_284 = arith.constant 0 : index
    %554 = vector.load %arg0[%c7_282, %c0_283, %c0_284] : memref<8x2x256xf32, #tpu.memory_space<vmem>>, vector<1x2x256xf32>
    %555 = vector.shape_cast %554 : vector<1x2x256xf32> to vector<2x256xf32>
    %c0_285 = arith.constant 0 : index
    %c0_286 = arith.constant 0 : index
    %c0_287 = arith.constant 0 : index
    %556 = vector.load %arg0[%c0_285, %c0_286, %c0_287] : memref<8x2x256xf32, #tpu.memory_space<vmem>>, vector<1x2x256xf32>
    %557 = vector.shape_cast %556 : vector<1x2x256xf32> to vector<2x256xf32>
    %558 = vector.extract_strided_slice %555 {offsets = [0, 0], sizes = [2, 128], strides = [1, 1]} : vector<2x256xf32> to vector<2x128xf32>
    %c0_288 = arith.constant 0 : index
    %c0_289 = arith.constant 0 : index
    %559 = vector.load %arg4[%c0_288, %c0_289] : memref<2x32xf32, #tpu.memory_space<vmem>>, vector<2x32xf32>
    %560 = arith.truncf %559 : vector<2x32xf32> to vector<2x32xbf16>
    %c0_290 = arith.constant 0 : index
    %c0_291 = arith.constant 0 : index
    %561 = vector.load %arg1[%c0_290, %c0_291] : memref<32x128xbf16, #tpu.memory_space<vmem>>, vector<32x128xbf16>
    %cst_292 = arith.constant dense<0.000000e+00> : vector<2x128xf32>
    %562 = tpu.matmul %560, %561, %cst_292 {dimension_numbers = #tpu.dot_dimension_numbers<[1], [0], [0], [1], [0, 0, 1, 1], [], []>} : vector<2x32xbf16>, vector<32x128xbf16>, vector<2x128xf32> -> vector<2x128xf32>
    %563 = arith.addf %558, %562 : vector<2x128xf32>
    %564 = vector.extract_strided_slice %557 {offsets = [0, 128], sizes = [2, 128], strides = [1, 1]} : vector<2x256xf32> to vector<2x128xf32>
    %c0_293 = arith.constant 0 : index
    %c0_294 = arith.constant 0 : index
    %565 = vector.load %arg6[%c0_293, %c0_294] : memref<2x32xf32, #tpu.memory_space<vmem>>, vector<2x32xf32>
    %566 = arith.truncf %565 : vector<2x32xf32> to vector<2x32xbf16>
    %c0_295 = arith.constant 0 : index
    %c0_296 = arith.constant 0 : index
    %567 = vector.load %arg2[%c0_295, %c0_296] : memref<32x128xbf16, #tpu.memory_space<vmem>>, vector<32x128xbf16>
    %cst_297 = arith.constant dense<0.000000e+00> : vector<2x128xf32>
    %568 = tpu.matmul %566, %567, %cst_297 {dimension_numbers = #tpu.dot_dimension_numbers<[1], [0], [0], [1], [0, 0, 1, 1], [], []>} : vector<2x32xbf16>, vector<32x128xbf16>, vector<2x128xf32> -> vector<2x128xf32>
    %569 = arith.addf %564, %568 : vector<2x128xf32>
    %c0_298 = arith.constant 0 : index
    %c0_299 = arith.constant 0 : index
    %570 = vector.load %arg5[%c0_298, %c0_299] : memref<2x32xf32, #tpu.memory_space<vmem>>, vector<2x32xf32>
    %571 = vector.extract_strided_slice %563 {offsets = [0, 0], sizes = [2, 32], strides = [1, 1]} : vector<2x128xf32> to vector<2x32xf32>
    %572 = arith.negf %571 : vector<2x32xf32>
    %573 = math.exp %572 : vector<2x32xf32>
    %cst_300 = arith.constant 1.000000e+00 : f32
    %574 = vector.broadcast %cst_300 : f32 to vector<2x32xf32>
    %575 = arith.addf %574, %573 : vector<2x32xf32>
    %576 = arith.divf %574, %575 : vector<2x32xf32>
    %577 = vector.extract_strided_slice %563 {offsets = [0, 32], sizes = [2, 32], strides = [1, 1]} : vector<2x128xf32> to vector<2x32xf32>
    %578 = arith.negf %577 : vector<2x32xf32>
    %579 = math.exp %578 : vector<2x32xf32>
    %cst_301 = arith.constant 1.000000e+00 : f32
    %580 = vector.broadcast %cst_301 : f32 to vector<2x32xf32>
    %581 = arith.addf %580, %579 : vector<2x32xf32>
    %582 = arith.divf %580, %581 : vector<2x32xf32>
    %583 = vector.extract_strided_slice %563 {offsets = [0, 64], sizes = [2, 32], strides = [1, 1]} : vector<2x128xf32> to vector<2x32xf32>
    %584 = math.tanh %583 : vector<2x32xf32>
    %585 = vector.extract_strided_slice %563 {offsets = [0, 96], sizes = [2, 32], strides = [1, 1]} : vector<2x128xf32> to vector<2x32xf32>
    %586 = arith.negf %585 : vector<2x32xf32>
    %587 = math.exp %586 : vector<2x32xf32>
    %cst_302 = arith.constant 1.000000e+00 : f32
    %588 = vector.broadcast %cst_302 : f32 to vector<2x32xf32>
    %589 = arith.addf %588, %587 : vector<2x32xf32>
    %590 = arith.divf %588, %589 : vector<2x32xf32>
    %591 = arith.mulf %582, %570 : vector<2x32xf32>
    %592 = arith.mulf %576, %584 : vector<2x32xf32>
    %593 = arith.addf %591, %592 : vector<2x32xf32>
    %594 = math.tanh %593 : vector<2x32xf32>
    %595 = arith.mulf %590, %594 : vector<2x32xf32>
    %c0_303 = arith.constant 0 : index
    %c0_304 = arith.constant 0 : index
    %596 = vector.load %arg7[%c0_303, %c0_304] : memref<2x32xf32, #tpu.memory_space<vmem>>, vector<2x32xf32>
    %597 = vector.extract_strided_slice %569 {offsets = [0, 0], sizes = [2, 32], strides = [1, 1]} : vector<2x128xf32> to vector<2x32xf32>
    %598 = arith.negf %597 : vector<2x32xf32>
    %599 = math.exp %598 : vector<2x32xf32>
    %cst_305 = arith.constant 1.000000e+00 : f32
    %600 = vector.broadcast %cst_305 : f32 to vector<2x32xf32>
    %601 = arith.addf %600, %599 : vector<2x32xf32>
    %602 = arith.divf %600, %601 : vector<2x32xf32>
    %603 = vector.extract_strided_slice %569 {offsets = [0, 32], sizes = [2, 32], strides = [1, 1]} : vector<2x128xf32> to vector<2x32xf32>
    %604 = arith.negf %603 : vector<2x32xf32>
    %605 = math.exp %604 : vector<2x32xf32>
    %cst_306 = arith.constant 1.000000e+00 : f32
    %606 = vector.broadcast %cst_306 : f32 to vector<2x32xf32>
    %607 = arith.addf %606, %605 : vector<2x32xf32>
    %608 = arith.divf %606, %607 : vector<2x32xf32>
    %609 = vector.extract_strided_slice %569 {offsets = [0, 64], sizes = [2, 32], strides = [1, 1]} : vector<2x128xf32> to vector<2x32xf32>
    %610 = math.tanh %609 : vector<2x32xf32>
    %611 = vector.extract_strided_slice %569 {offsets = [0, 96], sizes = [2, 32], strides = [1, 1]} : vector<2x128xf32> to vector<2x32xf32>
    %612 = arith.negf %611 : vector<2x32xf32>
    %613 = math.exp %612 : vector<2x32xf32>
    %cst_307 = arith.constant 1.000000e+00 : f32
    %614 = vector.broadcast %cst_307 : f32 to vector<2x32xf32>
    %615 = arith.addf %614, %613 : vector<2x32xf32>
    %616 = arith.divf %614, %615 : vector<2x32xf32>
    %617 = arith.mulf %608, %596 : vector<2x32xf32>
    %618 = arith.mulf %602, %610 : vector<2x32xf32>
    %619 = arith.addf %617, %618 : vector<2x32xf32>
    %620 = math.tanh %619 : vector<2x32xf32>
    %621 = arith.mulf %616, %620 : vector<2x32xf32>
    %c0_308 = arith.constant 0 : index
    %c0_309 = arith.constant 0 : index
    %622 = vector.load %arg4[%c0_308, %c0_309] : memref<2x32xf32, #tpu.memory_space<vmem>>, vector<2x32xf32>
    tpu.vector_store %arg4[%c0_308, %c0_309], %595 {strides = array<i32>} : memref<2x32xf32, #tpu.memory_space<vmem>>, vector<2x32xf32>,
    %c0_310 = arith.constant 0 : index
    %c0_311 = arith.constant 0 : index
    %623 = vector.load %arg5[%c0_310, %c0_311] : memref<2x32xf32, #tpu.memory_space<vmem>>, vector<2x32xf32>
    tpu.vector_store %arg5[%c0_310, %c0_311], %593 {strides = array<i32>} : memref<2x32xf32, #tpu.memory_space<vmem>>, vector<2x32xf32>,
    %c0_312 = arith.constant 0 : index
    %c0_313 = arith.constant 0 : index
    %624 = vector.load %arg6[%c0_312, %c0_313] : memref<2x32xf32, #tpu.memory_space<vmem>>, vector<2x32xf32>
    tpu.vector_store %arg6[%c0_312, %c0_313], %621 {strides = array<i32>} : memref<2x32xf32, #tpu.memory_space<vmem>>, vector<2x32xf32>,
    %c0_314 = arith.constant 0 : index
    %c0_315 = arith.constant 0 : index
    %625 = vector.load %arg7[%c0_314, %c0_315] : memref<2x32xf32, #tpu.memory_space<vmem>>, vector<2x32xf32>
    tpu.vector_store %arg7[%c0_314, %c0_315], %619 {strides = array<i32>} : memref<2x32xf32, #tpu.memory_space<vmem>>, vector<2x32xf32>,
    %c7_316 = arith.constant 7 : index
    %c0_317 = arith.constant 0 : index
    %c0_318 = arith.constant 0 : index
    %626 = vector.load %arg3[%c7_316, %c0_317, %c0_318] : memref<8x2x64xf32, #tpu.memory_space<vmem>>, vector<1x2x32xf32>
    %627 = vector.shape_cast %626 : vector<1x2x32xf32> to vector<2x32xf32>
    %628 = vector.shape_cast %595 : vector<2x32xf32> to vector<1x2x32xf32>
    tpu.vector_store %arg3[%c7_316, %c0_317, %c0_318], %628 {strides = array<i32>} : memref<8x2x64xf32, #tpu.memory_space<vmem>>, vector<1x2x32xf32>,
    %c0_319 = arith.constant 0 : index
    %c0_320 = arith.constant 0 : index
    %c32_321 = arith.constant 32 : index
    %629 = vector.load %arg3[%c0_319, %c0_320, %c32_321] : memref<8x2x64xf32, #tpu.memory_space<vmem>>, vector<1x2x32xf32>
    %630 = vector.shape_cast %629 : vector<1x2x32xf32> to vector<2x32xf32>
    %631 = vector.shape_cast %621 : vector<2x32xf32> to vector<1x2x32xf32>
    tpu.vector_store %arg3[%c0_319, %c0_320, %c32_321], %631 {strides = array<i32>} : memref<8x2x64xf32, #tpu.memory_space<vmem>>, vector<1x2x32xf32>,
    return
  }
}

module attributes {stable_mosaic.version = 11 : i64} {
  func.func @_proj_kernel(%arg0: i32, %arg1: memref<8x64xf32, #tpu.memory_space<vmem>>, %arg2: memref<64x256xbf16, #tpu.memory_space<vmem>>, %arg3: memref<1x256xf32, #tpu.memory_space<vmem>>, %arg4: memref<8x256xf32, #tpu.memory_space<vmem>>) attributes {dimension_semantics = [#tpu.dimension_semantics<parallel>], iteration_bounds = array<i64: 2>, scalar_prefetch = 0 : i64, scratch_operands = 0 : i64, tpu.core_type = #tpu.core_type<tc>, window_params = [{transform_indices = @transform_0, window_bounds = array<i64: 8, 64>}, {pipeline_mode = #tpu.pipeline_mode<synchronous>, transform_indices = @transform_1, window_bounds = array<i64: 64, 256>}, {pipeline_mode = #tpu.pipeline_mode<synchronous>, transform_indices = @transform_2, window_bounds = array<i64: 1, 256>}, {transform_indices = @transform_3, window_bounds = array<i64: 8, 256>}]} {
    %c0 = arith.constant 0 : index
    %c0_0 = arith.constant 0 : index
    %0 = vector.load %arg1[%c0, %c0_0] : memref<8x64xf32, #tpu.memory_space<vmem>>, vector<8x64xf32>
    %1 = arith.truncf %0 : vector<8x64xf32> to vector<8x64xbf16>
    %c0_1 = arith.constant 0 : index
    %c0_2 = arith.constant 0 : index
    %2 = vector.load %arg2[%c0_1, %c0_2] : memref<64x256xbf16, #tpu.memory_space<vmem>>, vector<64x256xbf16>
    %cst = arith.constant dense<0.000000e+00> : vector<8x256xf32>
    %3 = tpu.matmul %1, %2, %cst {dimension_numbers = #tpu.dot_dimension_numbers<[1], [0], [0], [1], [0, 0, 1, 1], [], []>} : vector<8x64xbf16>, vector<64x256xbf16>, vector<8x256xf32> -> vector<8x256xf32>
    %c0_3 = arith.constant 0 : index
    %c0_4 = arith.constant 0 : index
    %4 = vector.load %arg3[%c0_3, %c0_4] : memref<1x256xf32, #tpu.memory_space<vmem>>, vector<1x256xf32>
    %5 = vector.broadcast %4 : vector<1x256xf32> to vector<8x256xf32>
    %6 = arith.addf %3, %5 : vector<8x256xf32>
    %c0_5 = arith.constant 0 : index
    %c0_6 = arith.constant 0 : index
    %7 = vector.load %arg4[%c0_5, %c0_6] : memref<8x256xf32, #tpu.memory_space<vmem>>, vector<8x256xf32>
    tpu.vector_store %arg4[%c0_5, %c0_6], %6 {strides = array<i32>} : memref<8x256xf32, #tpu.memory_space<vmem>>, vector<8x256xf32>,
    return
  }
  func.func @transform_0(%arg0: i32) -> (i32, i32) {
    %c0_i32 = arith.constant 0 : i32
    %c0_i32_0 = arith.constant 0 : i32
    return %arg0, %c0_i32 : i32, i32
  }
  func.func @transform_1(%arg0: i32) -> (i32, i32) {
    %c0_i32 = arith.constant 0 : i32
    %c0_i32_0 = arith.constant 0 : i32
    %c0_i32_1 = arith.constant 0 : i32
    return %c0_i32, %c0_i32_0 : i32, i32
  }
  func.func @transform_2(%arg0: i32) -> (i32, i32) {
    %c0_i32 = arith.constant 0 : i32
    %c0_i32_0 = arith.constant 0 : i32
    %c0_i32_1 = arith.constant 0 : i32
    return %c0_i32, %c0_i32_0 : i32, i32
  }
  func.func @transform_3(%arg0: i32) -> (i32, i32) {
    %c0_i32 = arith.constant 0 : i32
    %c0_i32_0 = arith.constant 0 : i32
    return %arg0, %c0_i32 : i32, i32
  }
}

module attributes {stable_mosaic.version = 11 : i64} {
  func.func @_fc_head_kernel(%arg0: memref<2x128xf32, #tpu.memory_space<vmem>>, %arg1: memref<2x110xf32, #tpu.memory_space<vmem>>, %arg2: memref<128x64xf32, #tpu.memory_space<vmem>>, %arg3: memref<110x64xf32, #tpu.memory_space<vmem>>, %arg4: memref<1x64xf32, #tpu.memory_space<vmem>>, %arg5: memref<64x57xf32, #tpu.memory_space<vmem>>, %arg6: memref<1x57xf32, #tpu.memory_space<vmem>>, %arg7: memref<2x57xf32, #tpu.memory_space<vmem>>) attributes {dimension_semantics = [], scalar_prefetch = 0 : i64, scratch_operands = 0 : i64, tpu.core_type = #tpu.core_type<tc>} {
    %c0 = arith.constant 0 : index
    %c0_0 = arith.constant 0 : index
    %0 = vector.load %arg0[%c0, %c0_0] : memref<2x128xf32, #tpu.memory_space<vmem>>, vector<2x128xf32>
    %c0_1 = arith.constant 0 : index
    %c0_2 = arith.constant 0 : index
    %1 = vector.load %arg2[%c0_1, %c0_2] : memref<128x64xf32, #tpu.memory_space<vmem>>, vector<128x64xf32>
    %cst = arith.constant dense<0.000000e+00> : vector<2x64xf32>
    %2 = tpu.matmul %0, %1, %cst {dimension_numbers = #tpu.dot_dimension_numbers<[1], [0], [0], [1], [0, 0, 1, 1], [], []>} : vector<2x128xf32>, vector<128x64xf32>, vector<2x64xf32> -> vector<2x64xf32>
    %c0_3 = arith.constant 0 : index
    %c0_4 = arith.constant 0 : index
    %3 = vector.load %arg1[%c0_3, %c0_4] : memref<2x110xf32, #tpu.memory_space<vmem>>, vector<2x110xf32>
    %c0_5 = arith.constant 0 : index
    %c0_6 = arith.constant 0 : index
    %4 = vector.load %arg3[%c0_5, %c0_6] : memref<110x64xf32, #tpu.memory_space<vmem>>, vector<110x64xf32>
    %cst_7 = arith.constant dense<0.000000e+00> : vector<2x64xf32>
    %5 = tpu.matmul %3, %4, %cst_7 {dimension_numbers = #tpu.dot_dimension_numbers<[1], [0], [0], [1], [0, 0, 1, 1], [], []>} : vector<2x110xf32>, vector<110x64xf32>, vector<2x64xf32> -> vector<2x64xf32>
    %6 = arith.addf %2, %5 : vector<2x64xf32>
    %c0_8 = arith.constant 0 : index
    %c0_9 = arith.constant 0 : index
    %7 = vector.load %arg4[%c0_8, %c0_9] : memref<1x64xf32, #tpu.memory_space<vmem>>, vector<1x64xf32>
    %8 = vector.broadcast %7 : vector<1x64xf32> to vector<2x64xf32>
    %9 = arith.addf %6, %8 : vector<2x64xf32>
    %cst_10 = arith.constant 0.000000e+00 : f32
    %10 = vector.broadcast %cst_10 : f32 to vector<2x64xf32>
    %11 = arith.maximumf %9, %10 : vector<2x64xf32>
    %c0_11 = arith.constant 0 : index
    %c0_12 = arith.constant 0 : index
    %12 = vector.load %arg5[%c0_11, %c0_12] : memref<64x57xf32, #tpu.memory_space<vmem>>, vector<64x57xf32>
    %cst_13 = arith.constant dense<0.000000e+00> : vector<2x57xf32>
    %13 = tpu.matmul %11, %12, %cst_13 {dimension_numbers = #tpu.dot_dimension_numbers<[1], [0], [0], [1], [0, 0, 1, 1], [], []>} : vector<2x64xf32>, vector<64x57xf32>, vector<2x57xf32> -> vector<2x57xf32>
    %c0_14 = arith.constant 0 : index
    %c0_15 = arith.constant 0 : index
    %14 = vector.load %arg6[%c0_14, %c0_15] : memref<1x57xf32, #tpu.memory_space<vmem>>, vector<1x57xf32>
    %15 = vector.broadcast %14 : vector<1x57xf32> to vector<2x57xf32>
    %16 = arith.addf %13, %15 : vector<2x57xf32>
    %c0_16 = arith.constant 0 : index
    %c0_17 = arith.constant 0 : index
    %17 = vector.load %arg7[%c0_16, %c0_17] : memref<2x57xf32, #tpu.memory_space<vmem>>, vector<2x57xf32>
    tpu.vector_store %arg7[%c0_16, %c0_17], %16 {strides = array<i32>} : memref<2x57xf32, #tpu.memory_space<vmem>>, vector<2x57xf32>,
    return
  }
}

</mosaic_0001>

<llo_original>
// kernel: stacked_brnn_forward.5
$region0: #{stacked_brnn_forward.5}
  #allocation0 [shape = 'u32[]', space=smem, size = 0x4, offset = 0x4, fixed_abs, tag = 'smem constant byte address 0x4 - core index']
  #allocation1 [shape = 'u32[72,128]{1,0:T(1,128)}', space=vmem, size = 0x9000, scoped, tag = 'internal scratch']
  %s0 = inlined_call_operand.vmem [shape: f32[16,16], index: 0, kind: input, shape index: {}]
  %s1 = inlined_call_operand.vmem [shape: bf16[16,256], index: 1, kind: input, shape index: {}]
  %s2 = inlined_call_operand.vmem [shape: f32[1,256], index: 2, kind: input, shape index: {}]
  %s3 = inlined_call_operand.vmem [shape: f32[16,256], index: 3, kind: output, shape index: {}]
  %s4 = sld [smem:[#allocation0]]
  $region45: #{stacked_brnn_forward.5} parent=0
    _
  %s6 = ssub.s32 1, %s4
  %s7 = scalar_select 0, %s6, %s4
  loop: start=0, step=1, limit=4
  $region2: #{stacked_brnn_forward.5} parent=0 // loop_pre_header
    _
  $region3: #{stacked_brnn_forward.5} parent=0 // loop_header
    %s9 = sphi 0, %s13
    %p10 = scmp.ge.s32.totalorder %s9, 4
    %s19 = sphi 0, %s21
    %s22 = sphi 0, %s19
    %s23 = sphi 0, %s22
    %s39 = sphi 0, %s23
    %s43 = sphi 0, %s43
    %s45 = sphi 0, %s43
    %s46 = sphi 0, %s45
    %s60 = sphi 0, %s46
    %s64 = sphi 0, %s64
    %s66 = sphi 0, %s64
    %s67 = sphi 0, %s66
    %s81 = sphi 0, %s67
    %s87 = sphi 0, %s89
    %s90 = sphi 0, %s87
    %s91 = sphi 0, %s90
    %s107 = sphi 0, %s91
  $region4: #{stacked_brnn_forward.5} parent=0 // loop_header_branch
    %12 = sbr.rel (%p10) target = $region8
  $region5: #{stacked_brnn_forward.5} parent=0 // loop_body
    %s14 = ssub.s32 %s9, 1
    %s15 = ssub.s32 %s9, 2
    %s16 = sadd.s32 %s9, 1
    %s17 = ssub.s32 %s9, %s16
    %p18 = scmp.eq.s32.totalorder %s17, 0
    %s20 = sadd.s32 %s19, 1
    %s21 = scalar_select %p18, %s19, %s20
    %p24 = pneg %p18
    %p25 = scmp.eq.s32.totalorder %s9, 1
    %p26 = por %p24, %p25
    %p27 = scmp.ne.s32.totalorder %s19, %s22
    %p28 = scmp.eq.s32.totalorder %s9, 0
    %p29 = por %p27, %p28
    %p30 = scmp.ne.s32.totalorder %s19, %s22
    %p31 = scmp.eq.s32.totalorder %s14, 1
    %p32 = por %p30, %p31
    %p33 = scmp.ne.s32.totalorder %s22, %s23
    %p34 = scmp.eq.s32.totalorder %s14, 0
    %p35 = por %p33, %p34
    %p36 = scmp.ne.s32.totalorder %s22, %s23
    %p37 = scmp.eq.s32.totalorder %s15, 1
    %p38 = por %p36, %p37
    %p40 = scmp.ne.s32.totalorder %s23, %s39
    %p41 = scmp.eq.s32.totalorder %s15, 0
    %p42 = por %p40, %p41
    %s44 = sadd.s32 %s43, 1
    %p47 = scmp.eq.s32.totalorder %s9, 1
    %p48 = scmp.ne.s32.totalorder %s43, %s45
    %p49 = scmp.eq.s32.totalorder %s9, 0
    %p50 = por %p48, %p49
    %p51 = scmp.ne.s32.totalorder %s43, %s45
    %p52 = scmp.eq.s32.totalorder %s14, 1
    %p53 = por %p51, %p52
    %p54 = scmp.ne.s32.totalorder %s45, %s46
    %p55 = scmp.eq.s32.totalorder %s14, 0
    %p56 = por %p54, %p55
    %p57 = scmp.ne.s32.totalorder %s45, %s46
    %p58 = scmp.eq.s32.totalorder %s15, 1
    %p59 = por %p57, %p58
    %p61 = scmp.ne.s32.totalorder %s46, %s60
    %p62 = scmp.eq.s32.totalorder %s15, 0
    %p63 = por %p61, %p62
    %s65 = sadd.s32 %s64, 1
    %p68 = scmp.eq.s32.totalorder %s9, 1
    %p69 = scmp.ne.s32.totalorder %s64, %s66
    %p70 = scmp.eq.s32.totalorder %s9, 0
    %p71 = por %p69, %p70
    %p72 = scmp.ne.s32.totalorder %s64, %s66
    %p73 = scmp.eq.s32.totalorder %s14, 1
    %p74 = por %p72, %p73
    %p75 = scmp.ne.s32.totalorder %s66, %s67
    %p76 = scmp.eq.s32.totalorder %s14, 0
    %p77 = por %p75, %p76
    %p78 = scmp.ne.s32.totalorder %s66, %s67
    %p79 = scmp.eq.s32.totalorder %s15, 1
    %p80 = por %p78, %p79
    %p82 = scmp.ne.s32.totalorder %s67, %s81
    %p83 = scmp.eq.s32.totalorder %s15, 0
    %p84 = por %p82, %p83
    %s85 = ssub.s32 %s9, %s16
    %p86 = scmp.eq.s32.totalorder %s85, 0
    %s88 = sadd.s32 %s87, 1
    %s89 = scalar_select %p86, %s87, %s88
    %p92 = pneg %p86
    %p93 = scmp.eq.s32.totalorder %s9, 1
    %p94 = por %p92, %p93
    %p95 = scmp.ne.s32.totalorder %s87, %s90
    %p96 = scmp.eq.s32.totalorder %s9, 0
    %p97 = por %p95, %p96
    %p98 = scmp.ne.s32.totalorder %s87, %s90
    %p99 = scmp.eq.s32.totalorder %s14, 1
    %p100 = por %p98, %p99
    %p101 = scmp.ne.s32.totalorder %s90, %s91
    %p102 = scmp.eq.s32.totalorder %s14, 0
    %p103 = por %p101, %p102
    %p104 = scmp.ne.s32.totalorder %s90, %s91
    %p105 = scmp.eq.s32.totalorder %s15, 1
    %p106 = por %p104, %p105
    %p108 = scmp.ne.s32.totalorder %s91, %s107
    %p109 = scmp.eq.s32.totalorder %s15, 0
    %p110 = por %p108, %p109
    %p111 = scmp.le.s32.totalorder 1, %s9
    %p112 = scmp.lt.s32.totalorder %s9, 3
    %p113 = pnand %p111, %p112
    %p114 = pneg %p113
    // Predicated region
    $region9: #{stacked_brnn_forward.5} parent=5 // pred_check
      _
    $region10: #{stacked_brnn_forward.5} parent=5 // pred_check_branch
      %116 = sbr.rel (%p113) target = $region12
    $region11: #{stacked_brnn_forward.5} parent=5 // pred_region
      %s117 = ssub.s32 %s9, 1
      // Predicated region
      $region13: #{stacked_brnn_forward.5} parent=11 // pred_check
        %p118 = pneg %p56
      $region14: #{stacked_brnn_forward.5} parent=11 // pred_check_branch
        %120 = sbr.rel (%p118) target = $region16
      $region15: #{stacked_brnn_forward.5} parent=11 // pred_region
        _
      $region16: #{stacked_brnn_forward.5} parent=11 // pred_fallthru
        _
      // Predicated region
      $region17: #{stacked_brnn_forward.5} parent=11 // pred_check
        %p121 = pneg %p77
      $region18: #{stacked_brnn_forward.5} parent=11 // pred_check_branch
        %123 = sbr.rel (%p121) target = $region20
      $region19: #{stacked_brnn_forward.5} parent=11 // pred_region
        _
      $region20: #{stacked_brnn_forward.5} parent=11 // pred_fallthru
        _
    $region12: #{stacked_brnn_forward.5} parent=5 // pred_fallthru
      _
    %p124 = scmp.lt.s32.totalorder %s9, 2
    // Predicated region
    $region21: #{stacked_brnn_forward.5} parent=5 // pred_check
      %p125 = pneg %p124
    $region22: #{stacked_brnn_forward.5} parent=5 // pred_check_branch
      %127 = sbr.rel (%p125) target = $region24
    $region23: #{stacked_brnn_forward.5} parent=5 // pred_region
      // Predicated region
      $region25: #{stacked_brnn_forward.5} parent=23 // pred_check
        %p128 = pneg %p29
      $region26: #{stacked_brnn_forward.5} parent=23 // pred_check_branch
        %130 = sbr.rel (%p128) target = $region28
      $region27: #{stacked_brnn_forward.5} parent=23 // pred_region
        %p131 = scmp.lt.s32.totalorder %s9, 1
        %s132 = scalar_select %p131, %s9, 1
        %s133 = smul.addr %s132, 8
        %s134 = scalar_lea.vmem %s0, %s133
      $region28: #{stacked_brnn_forward.5} parent=23 // pred_fallthru
        _
    $region24: #{stacked_brnn_forward.5} parent=5 // pred_fallthru
      _
    %p135 = scmp.le.s32.totalorder 1, %s9
    %p136 = scmp.lt.s32.totalorder %s9, 3
    %p137 = pnand %p135, %p136
    %p138 = pneg %p137
    // Predicated region
    $region29: #{stacked_brnn_forward.5} parent=5 // pred_check
      _
    $region30: #{stacked_brnn_forward.5} parent=5 // pred_check_branch
      %140 = sbr.rel (%p137) target = $region32
    $region31: #{stacked_brnn_forward.5} parent=5 // pred_region
      %s141 = ssub.s32 %s9, 1
      %p142 = scmp.lt.s32.totalorder %s14, 1
      %s143 = scalar_select %p142, %s14, 1
      %s144 = smul.addr %s143, 8
      %s145 = scalar_lea.vmem %s0, %s144
      %p146 = pneg %p35
      %p147 = pneg %p32
      %p148 = pneg %p56
      %p149 = pneg %p53
      %p150 = pneg %p77
      %p151 = pneg %p74
      %p152 = pneg %p103
      %p153 = pneg %p100
      %p154 = scmp.lt.s32.totalorder %s14, 1
      %s155 = scalar_select %p154, %s14, 1
      %s156 = smul.addr %s155, 2
      %s157 = smul.addr %s156, 8
      %s158 = scalar_lea.vmem %s3, %s157
      %p159 = scmp.lt.s32.totalorder %s14, 1
      %s160 = scalar_select %p159, %s14, 1
      %s161 = smul.addr %s160, 8
      %s162 = scalar_lea.vmem %s0, %s161
      %p163 = scmp.lt.s32.totalorder %s14, 1
      %s164 = scalar_select %p163, %s14, 1
      %s165 = smul.addr %s164, 2
      %s166 = smul.addr %s165, 8
      %s167 = scalar_lea.vmem %s3, %s166
      %v169 = vld [vmem:[%s162] sm:$0xff]
      %v170 = vpack.c.bf16 %v169, %v169
      %v171 = vld [vmem:[%s1] sm:$0xff]
      %v172 = vld [vmem:[%s1 + $0x8] sm:$0xff]
      %v173 = vld [vmem:[%s2] sm:$0x3]
      %v175 = vperm.slane %v173, 0
      %v176 = vperm.slane %v173, 1
      %v181 = vunpack.c.l.b16 %v171
      %v182 = vunpack.c.h.b16 %v171
      %v183 = vunpack.c.l.b16 %v172
      %v184 = vunpack.c.h.b16 %v172
      %v185 = vpack.c.b16 %v183, %v181
      %v186 = vpack.c.b16 %v184, %v182
      %vm189 = vcmask 130048
      %v191 = vsel %vm189, %v170, 0
      %193 = vmatpush.bf16.msra.mxu0 0
      %194 = vmatpush.bf16.msra.mxu0 0
      %195 = vmatpush.bf16.msra.mxu0 0
      %196 = vmatpush.bf16.msra.mxu0 0
      %197 = vmatpush.bf16.msra.mxu0 0
      %198 = vmatpush.bf16.msra.mxu0 0
      %199 = vmatpush.bf16.msra.mxu0 0
      %200 = vmatpush.bf16.msra.mxu0 %v185
      %201 = vmatmul.bf16.gmra.mxu0 %v191
      %v202 = vpop.f32.mrf.mxu0
      %v203 = vadd.f32 %v175, %v202
      %v204 = vpop.f32.mrf.mxu0
      %205 = vdwg.mxu0
      %206 = vmatpush.bf16.msra.mxu0 0
      %207 = vmatpush.bf16.msra.mxu0 0
      %208 = vmatpush.bf16.msra.mxu0 0
      %209 = vmatpush.bf16.msra.mxu0 0
      %210 = vmatpush.bf16.msra.mxu0 0
      %211 = vmatpush.bf16.msra.mxu0 0
      %212 = vmatpush.bf16.msra.mxu0 0
      %213 = vmatpush.bf16.msra.mxu0 %v186
      %214 = vmatmul.bf16.gmra.mxu0 %v191
      %v215 = vpop.f32.mrf.mxu0
      %v216 = vadd.f32 %v176, %v215
      %v217 = vpop.f32.mrf.mxu0
      %218 = vdwg.mxu0
      %219 = vst [vmem:[%s167] sm:$0xff] %v203
      %220 = vst [vmem:[%s167 + $0x8] sm:$0xff] %v216
      %p221 = scmp.lt.s32.totalorder %s14, 1
      %s222 = scalar_select %p221, %s14, 1
      %s223 = smul.addr %s222, 2
      %s224 = smul.addr %s223, 8
      %s225 = scalar_lea.vmem %s3, %s224
      // Predicated region
      $region33: #{stacked_brnn_forward.5} parent=31 // pred_check
        %p226 = pneg %p100
      $region34: #{stacked_brnn_forward.5} parent=31 // pred_check_branch
        %228 = sbr.rel (%p226) target = $region36
      $region35: #{stacked_brnn_forward.5} parent=31 // pred_region
        _
      $region36: #{stacked_brnn_forward.5} parent=31 // pred_fallthru
        _
    $region32: #{stacked_brnn_forward.5} parent=5 // pred_fallthru
      _
    %p229 = scmp.le.s32.totalorder 2, %s9
    // Predicated region
    $region37: #{stacked_brnn_forward.5} parent=5 // pred_check
      %p230 = pneg %p229
    $region38: #{stacked_brnn_forward.5} parent=5 // pred_check_branch
      %232 = sbr.rel (%p230) target = $region40
    $region39: #{stacked_brnn_forward.5} parent=5 // pred_region
      %s233 = ssub.s32 %s9, 2
      // Predicated region
      $region41: #{stacked_brnn_forward.5} parent=39 // pred_check
        %p234 = pneg %p106
      $region42: #{stacked_brnn_forward.5} parent=39 // pred_check_branch
        %236 = sbr.rel (%p234) target = $region44
      $region43: #{stacked_brnn_forward.5} parent=39 // pred_region
        %p237 = scmp.lt.s32.totalorder %s15, 1
        %s238 = scalar_select %p237, %s15, 1
        %s239 = smul.addr %s238, 2
        %s240 = smul.addr %s239, 8
        %s241 = scalar_lea.vmem %s3, %s240
      $region44: #{stacked_brnn_forward.5} parent=39 // pred_fallthru
        _
    $region40: #{stacked_brnn_forward.5} parent=5 // pred_fallthru
      _
  $region6: #{stacked_brnn_forward.5} parent=0 // loop_footer
    %s13 = sadd.s32 1, %s9
  $region7: #{stacked_brnn_forward.5} parent=0 // loop_footer_branch
    %8 = sbr.rel target = $region3
  $region8: #{stacked_brnn_forward.5} parent=0 // loop_exit
    _

// kernel: stacked_brnn_forward.7
$region0: #{stacked_brnn_forward.7}
  #allocation0 [shape = 'u32[]', space=smem, size = 0x4, offset = 0x4, fixed_abs, tag = 'smem constant byte address 0x4 - core index']
  #allocation1 [shape = 'u32[72,128]{1,0:T(1,128)}', space=vmem, size = 0x9000, scoped, tag = 'internal scratch']
  %s0 = inlined_call_operand.vmem [shape: f32[16,64], index: 0, kind: input, shape index: {}]
  %s1 = inlined_call_operand.vmem [shape: bf16[64,256], index: 1, kind: input, shape index: {}]
  %s2 = inlined_call_operand.vmem [shape: f32[1,256], index: 2, kind: input, shape index: {}]
  %s3 = inlined_call_operand.vmem [shape: f32[16,256], index: 3, kind: output, shape index: {}]
  %s4 = sld [smem:[#allocation0]]
  $region45: #{stacked_brnn_forward.7} parent=0
    _
  %s6 = ssub.s32 1, %s4
  %s7 = scalar_select 0, %s6, %s4
  loop: start=0, step=1, limit=4
  $region2: #{stacked_brnn_forward.7} parent=0 // loop_pre_header
    _
  $region3: #{stacked_brnn_forward.7} parent=0 // loop_header
    %s9 = sphi 0, %s13
    %p10 = scmp.ge.s32.totalorder %s9, 4
    %s19 = sphi 0, %s21
    %s22 = sphi 0, %s19
    %s23 = sphi 0, %s22
    %s39 = sphi 0, %s23
    %s43 = sphi 0, %s43
    %s45 = sphi 0, %s43
    %s46 = sphi 0, %s45
    %s60 = sphi 0, %s46
    %s64 = sphi 0, %s64
    %s66 = sphi 0, %s64
    %s67 = sphi 0, %s66
    %s81 = sphi 0, %s67
    %s87 = sphi 0, %s89
    %s90 = sphi 0, %s87
    %s91 = sphi 0, %s90
    %s107 = sphi 0, %s91
  $region4: #{stacked_brnn_forward.7} parent=0 // loop_header_branch
    %12 = sbr.rel (%p10) target = $region8
  $region5: #{stacked_brnn_forward.7} parent=0 // loop_body
    %s14 = ssub.s32 %s9, 1
    %s15 = ssub.s32 %s9, 2
    %s16 = sadd.s32 %s9, 1
    %s17 = ssub.s32 %s9, %s16
    %p18 = scmp.eq.s32.totalorder %s17, 0
    %s20 = sadd.s32 %s19, 1
    %s21 = scalar_select %p18, %s19, %s20
    %p24 = pneg %p18
    %p25 = scmp.eq.s32.totalorder %s9, 1
    %p26 = por %p24, %p25
    %p27 = scmp.ne.s32.totalorder %s19, %s22
    %p28 = scmp.eq.s32.totalorder %s9, 0
    %p29 = por %p27, %p28
    %p30 = scmp.ne.s32.totalorder %s19, %s22
    %p31 = scmp.eq.s32.totalorder %s14, 1
    %p32 = por %p30, %p31
    %p33 = scmp.ne.s32.totalorder %s22, %s23
    %p34 = scmp.eq.s32.totalorder %s14, 0
    %p35 = por %p33, %p34
    %p36 = scmp.ne.s32.totalorder %s22, %s23
    %p37 = scmp.eq.s32.totalorder %s15, 1
    %p38 = por %p36, %p37
    %p40 = scmp.ne.s32.totalorder %s23, %s39
    %p41 = scmp.eq.s32.totalorder %s15, 0
    %p42 = por %p40, %p41
    %s44 = sadd.s32 %s43, 1
    %p47 = scmp.eq.s32.totalorder %s9, 1
    %p48 = scmp.ne.s32.totalorder %s43, %s45
    %p49 = scmp.eq.s32.totalorder %s9, 0
    %p50 = por %p48, %p49
    %p51 = scmp.ne.s32.totalorder %s43, %s45
    %p52 = scmp.eq.s32.totalorder %s14, 1
    %p53 = por %p51, %p52
    %p54 = scmp.ne.s32.totalorder %s45, %s46
    %p55 = scmp.eq.s32.totalorder %s14, 0
    %p56 = por %p54, %p55
    %p57 = scmp.ne.s32.totalorder %s45, %s46
    %p58 = scmp.eq.s32.totalorder %s15, 1
    %p59 = por %p57, %p58
    %p61 = scmp.ne.s32.totalorder %s46, %s60
    %p62 = scmp.eq.s32.totalorder %s15, 0
    %p63 = por %p61, %p62
    %s65 = sadd.s32 %s64, 1
    %p68 = scmp.eq.s32.totalorder %s9, 1
    %p69 = scmp.ne.s32.totalorder %s64, %s66
    %p70 = scmp.eq.s32.totalorder %s9, 0
    %p71 = por %p69, %p70
    %p72 = scmp.ne.s32.totalorder %s64, %s66
    %p73 = scmp.eq.s32.totalorder %s14, 1
    %p74 = por %p72, %p73
    %p75 = scmp.ne.s32.totalorder %s66, %s67
    %p76 = scmp.eq.s32.totalorder %s14, 0
    %p77 = por %p75, %p76
    %p78 = scmp.ne.s32.totalorder %s66, %s67
    %p79 = scmp.eq.s32.totalorder %s15, 1
    %p80 = por %p78, %p79
    %p82 = scmp.ne.s32.totalorder %s67, %s81
    %p83 = scmp.eq.s32.totalorder %s15, 0
    %p84 = por %p82, %p83
    %s85 = ssub.s32 %s9, %s16
    %p86 = scmp.eq.s32.totalorder %s85, 0
    %s88 = sadd.s32 %s87, 1
    %s89 = scalar_select %p86, %s87, %s88
    %p92 = pneg %p86
    %p93 = scmp.eq.s32.totalorder %s9, 1
    %p94 = por %p92, %p93
    %p95 = scmp.ne.s32.totalorder %s87, %s90
    %p96 = scmp.eq.s32.totalorder %s9, 0
    %p97 = por %p95, %p96
    %p98 = scmp.ne.s32.totalorder %s87, %s90
    %p99 = scmp.eq.s32.totalorder %s14, 1
    %p100 = por %p98, %p99
    %p101 = scmp.ne.s32.totalorder %s90, %s91
    %p102 = scmp.eq.s32.totalorder %s14, 0
    %p103 = por %p101, %p102
    %p104 = scmp.ne.s32.totalorder %s90, %s91
    %p105 = scmp.eq.s32.totalorder %s15, 1
    %p106 = por %p104, %p105
    %p108 = scmp.ne.s32.totalorder %s91, %s107
    %p109 = scmp.eq.s32.totalorder %s15, 0
    %p110 = por %p108, %p109
    %p111 = scmp.le.s32.totalorder 1, %s9
    %p112 = scmp.lt.s32.totalorder %s9, 3
    %p113 = pnand %p111, %p112
    %p114 = pneg %p113
    // Predicated region
    $region9: #{stacked_brnn_forward.7} parent=5 // pred_check
      _
    $region10: #{stacked_brnn_forward.7} parent=5 // pred_check_branch
      %116 = sbr.rel (%p113) target = $region12
    $region11: #{stacked_brnn_forward.7} parent=5 // pred_region
      %s117 = ssub.s32 %s9, 1
      // Predicated region
      $region13: #{stacked_brnn_forward.7} parent=11 // pred_check
        %p118 = pneg %p56
      $region14: #{stacked_brnn_forward.7} parent=11 // pred_check_branch
        %120 = sbr.rel (%p118) target = $region16
      $region15: #{stacked_brnn_forward.7} parent=11 // pred_region
        _
      $region16: #{stacked_brnn_forward.7} parent=11 // pred_fallthru
        _
      // Predicated region
      $region17: #{stacked_brnn_forward.7} parent=11 // pred_check
        %p121 = pneg %p77
      $region18: #{stacked_brnn_forward.7} parent=11 // pred_check_branch
        %123 = sbr.rel (%p121) target = $region20
      $region19: #{stacked_brnn_forward.7} parent=11 // pred_region
        _
      $region20: #{stacked_brnn_forward.7} parent=11 // pred_fallthru
        _
    $region12: #{stacked_brnn_forward.7} parent=5 // pred_fallthru
      _
    %p124 = scmp.lt.s32.totalorder %s9, 2
    // Predicated region
    $region21: #{stacked_brnn_forward.7} parent=5 // pred_check
      %p125 = pneg %p124
    $region22: #{stacked_brnn_forward.7} parent=5 // pred_check_branch
      %127 = sbr.rel (%p125) target = $region24
    $region23: #{stacked_brnn_forward.7} parent=5 // pred_region
      // Predicated region
      $region25: #{stacked_brnn_forward.7} parent=23 // pred_check
        %p128 = pneg %p29
      $region26: #{stacked_brnn_forward.7} parent=23 // pred_check_branch
        %130 = sbr.rel (%p128) target = $region28
      $region27: #{stacked_brnn_forward.7} parent=23 // pred_region
        %p131 = scmp.lt.s32.totalorder %s9, 1
        %s132 = scalar_select %p131, %s9, 1
        %s133 = smul.addr %s132, 8
        %s134 = scalar_lea.vmem %s0, %s133
      $region28: #{stacked_brnn_forward.7} parent=23 // pred_fallthru
        _
    $region24: #{stacked_brnn_forward.7} parent=5 // pred_fallthru
      _
    %p135 = scmp.le.s32.totalorder 1, %s9
    %p136 = scmp.lt.s32.totalorder %s9, 3
    %p137 = pnand %p135, %p136
    %p138 = pneg %p137
    // Predicated region
    $region29: #{stacked_brnn_forward.7} parent=5 // pred_check
      _
    $region30: #{stacked_brnn_forward.7} parent=5 // pred_check_branch
      %140 = sbr.rel (%p137) target = $region32
    $region31: #{stacked_brnn_forward.7} parent=5 // pred_region
      %s141 = ssub.s32 %s9, 1
      %p142 = scmp.lt.s32.totalorder %s14, 1
      %s143 = scalar_select %p142, %s14, 1
      %s144 = smul.addr %s143, 8
      %s145 = scalar_lea.vmem %s0, %s144
      %p146 = pneg %p35
      %p147 = pneg %p32
      %p148 = pneg %p56
      %p149 = pneg %p53
      %p150 = pneg %p77
      %p151 = pneg %p74
      %p152 = pneg %p103
      %p153 = pneg %p100
      %p154 = scmp.lt.s32.totalorder %s14, 1
      %s155 = scalar_select %p154, %s14, 1
      %s156 = smul.addr %s155, 2
      %s157 = smul.addr %s156, 8
      %s158 = scalar_lea.vmem %s3, %s157
      %p159 = scmp.lt.s32.totalorder %s14, 1
      %s160 = scalar_select %p159, %s14, 1
      %s161 = smul.addr %s160, 8
      %s162 = scalar_lea.vmem %s0, %s161
      %p163 = scmp.lt.s32.totalorder %s14, 1
      %s164 = scalar_select %p163, %s14, 1
      %s165 = smul.addr %s164, 2
      %s166 = smul.addr %s165, 8
      %s167 = scalar_lea.vmem %s3, %s166
      %v169 = vld [vmem:[%s162] sm:$0xff]
      %v170 = vpack.c.bf16 %v169, %v169
      %v171 = vld [vmem:[%s1] sm:$0xff]
      %v172 = vld [vmem:[%s1 + $0x8] sm:$0xff]
      %v173 = vld [vmem:[%s1 + $0x10] sm:$0xff]
      %v174 = vld [vmem:[%s1 + $0x18] sm:$0xff]
      %v175 = vld [vmem:[%s1 + $0x20] sm:$0xff]
      %v176 = vld [vmem:[%s1 + $0x28] sm:$0xff]
      %v177 = vld [vmem:[%s1 + $0x30] sm:$0xff]
      %v178 = vld [vmem:[%s1 + $0x38] sm:$0xff]
      %v179 = vld [vmem:[%s2] sm:$0x3]
      %v181 = vperm.slane %v179, 0
      %v182 = vperm.slane %v179, 1
      %v193 = vunpack.c.l.b16 %v171
      %v194 = vunpack.c.h.b16 %v171
      %v195 = vunpack.c.l.b16 %v172
      %v196 = vunpack.c.h.b16 %v172
      %v197 = vunpack.c.l.b16 %v173
      %v198 = vunpack.c.h.b16 %v173
      %v199 = vunpack.c.l.b16 %v174
      %v200 = vunpack.c.h.b16 %v174
      %v201 = vunpack.c.l.b16 %v175
      %v202 = vunpack.c.h.b16 %v175
      %v203 = vunpack.c.l.b16 %v176
      %v204 = vunpack.c.h.b16 %v176
      %v205 = vunpack.c.l.b16 %v177
      %v206 = vunpack.c.h.b16 %v177
      %v207 = vunpack.c.l.b16 %v178
      %v208 = vunpack.c.h.b16 %v178
      %v209 = vpack.c.b16 %v195, %v193
      %v210 = vpack.c.b16 %v196, %v194
      %v211 = vpack.c.b16 %v199, %v197
      %v212 = vpack.c.b16 %v200, %v198
      %v213 = vpack.c.b16 %v203, %v201
      %v214 = vpack.c.b16 %v204, %v202
      %v215 = vpack.c.b16 %v207, %v205
      %v216 = vpack.c.b16 %v208, %v206
      %vm225 = vcmask 523264
      %v227 = vsel %vm225, %v170, 0
      %229 = vmatpush.bf16.msra.mxu0 0
      %230 = vmatpush.bf16.msra.mxu0 0
      %231 = vmatpush.bf16.msra.mxu0 0
      %232 = vmatpush.bf16.msra.mxu0 0
      %233 = vmatpush.bf16.msra.mxu0 %v215
      %234 = vmatpush.bf16.msra.mxu0 %v213
      %235 = vmatpush.bf16.msra.mxu0 %v211
      %236 = vmatpush.bf16.msra.mxu0 %v209
      %237 = vmatmul.bf16.gmra.mxu0 %v227
      %v238 = vpop.f32.mrf.mxu0
      %v239 = vadd.f32 %v181, %v238
      %v240 = vpop.f32.mrf.mxu0
      %241 = vdwg.mxu0
      %242 = vmatpush.bf16.msra.mxu0 0
      %243 = vmatpush.bf16.msra.mxu0 0
      %244 = vmatpush.bf16.msra.mxu0 0
      %245 = vmatpush.bf16.msra.mxu0 0
      %246 = vmatpush.bf16.msra.mxu0 %v216
      %247 = vmatpush.bf16.msra.mxu0 %v214
      %248 = vmatpush.bf16.msra.mxu0 %v212
      %249 = vmatpush.bf16.msra.mxu0 %v210
      %250 = vmatmul.bf16.gmra.mxu0 %v227
      %v251 = vpop.f32.mrf.mxu0
      %v252 = vadd.f32 %v182, %v251
      %v253 = vpop.f32.mrf.mxu0
      %254 = vdwg.mxu0
      %255 = vst [vmem:[%s167] sm:$0xff] %v239
      %256 = vst [vmem:[%s167 + $0x8] sm:$0xff] %v252
      %p257 = scmp.lt.s32.totalorder %s14, 1
      %s258 = scalar_select %p257, %s14, 1
      %s259 = smul.addr %s258, 2
      %s260 = smul.addr %s259, 8
      %s261 = scalar_lea.vmem %s3, %s260
      // Predicated region
      $region33: #{stacked_brnn_forward.7} parent=31 // pred_check
        %p262 = pneg %p100
      $region34: #{stacked_brnn_forward.7} parent=31 // pred_check_branch
        %264 = sbr.rel (%p262) target = $region36
      $region35: #{stacked_brnn_forward.7} parent=31 // pred_region
        _
      $region36: #{stacked_brnn_forward.7} parent=31 // pred_fallthru
        _
    $region32: #{stacked_brnn_forward.7} parent=5 // pred_fallthru
      _
    %p265 = scmp.le.s32.totalorder 2, %s9
    // Predicated region
    $region37: #{stacked_brnn_forward.7} parent=5 // pred_check
      %p266 = pneg %p265
    $region38: #{stacked_brnn_forward.7} parent=5 // pred_check_branch
      %268 = sbr.rel (%p266) target = $region40
    $region39: #{stacked_brnn_forward.7} parent=5 // pred_region
      %s269 = ssub.s32 %s9, 2
      // Predicated region
      $region41: #{stacked_brnn_forward.7} parent=39 // pred_check
        %p270 = pneg %p106
      $region42: #{stacked_brnn_forward.7} parent=39 // pred_check_branch
        %272 = sbr.rel (%p270) target = $region44
      $region43: #{stacked_brnn_forward.7} parent=39 // pred_region
        %p273 = scmp.lt.s32.totalorder %s15, 1
        %s274 = scalar_select %p273, %s15, 1
        %s275 = smul.addr %s274, 2
        %s276 = smul.addr %s275, 8
        %s277 = scalar_lea.vmem %s3, %s276
      $region44: #{stacked_brnn_forward.7} parent=39 // pred_fallthru
        _
    $region40: #{stacked_brnn_forward.7} parent=5 // pred_fallthru
      _
  $region6: #{stacked_brnn_forward.7} parent=0 // loop_footer
    %s13 = sadd.s32 1, %s9
  $region7: #{stacked_brnn_forward.7} parent=0 // loop_footer_branch
    %8 = sbr.rel target = $region3
  $region8: #{stacked_brnn_forward.7} parent=0 // loop_exit
    _

// kernel: stacked_brnn_forward.9
$region0: #{stacked_brnn_forward.9}
  #allocation0 [shape = 'u32[]', space=smem, size = 0x4, offset = 0x4, fixed_abs, tag = 'smem constant byte address 0x4 - core index']
  #allocation1 [shape = 'u32[72,128]{1,0:T(1,128)}', space=vmem, size = 0x9000, scoped, tag = 'internal scratch']
  %s0 = inlined_call_operand.vmem [shape: f32[2,128], index: 0, kind: input, shape index: {}]
  %s1 = inlined_call_operand.vmem [shape: f32[2,110], index: 1, kind: input, shape index: {}]
  %s2 = inlined_call_operand.vmem [shape: f32[128,64], index: 2, kind: input, shape index: {}]
  %s3 = inlined_call_operand.vmem [shape: f32[110,64], index: 3, kind: input, shape index: {}]
  %s4 = inlined_call_operand.vmem [shape: f32[1,64], index: 4, kind: input, shape index: {}]
  %s5 = inlined_call_operand.vmem [shape: f32[64,57], index: 5, kind: input, shape index: {}]
  %s6 = inlined_call_operand.vmem [shape: f32[1,57], index: 6, kind: input, shape index: {}]
  %s7 = inlined_call_operand.hbm [shape: f32[2,57], index: 7, kind: output, shape index: {}]
  %s8 = sld [smem:[#allocation0]]
  $region38: #{stacked_brnn_forward.9} parent=0
    _
  %s10 = ssub.s32 1, %s8
  %s11 = scalar_select 0, %s10, %s8
  $region1: #{stacked_brnn_forward.9} parent=0
    #allocation2 [shape = 'u8[1024]{0}', space=vmem, size = 0x400, scoped, tag = 'output window, operand 0, single buffered']
    #allocation3 [shape = 's32[1]{0}', space=sflag, size = 0x4, scoped, tag = 'scoped memory for stacked_brnn_forward.9']
    %12 = vsyncpa [#allocation3], 0
    // Predicated region
    $region2: #{stacked_brnn_forward.9} parent=1 // pred_check
      _
    $region3: #{stacked_brnn_forward.9} parent=1 // pred_check_branch
      %14 = sbr.rel (0) target = $region5
    $region4: #{stacked_brnn_forward.9} parent=1 // pred_region
      _
    $region5: #{stacked_brnn_forward.9} parent=1 // pred_fallthru
      _
    // Predicated region
    $region6: #{stacked_brnn_forward.9} parent=1 // pred_check
      _
    $region7: #{stacked_brnn_forward.9} parent=1 // pred_check_branch
      %16 = sbr.rel (0) target = $region9
    $region8: #{stacked_brnn_forward.9} parent=1 // pred_region
      _
    $region9: #{stacked_brnn_forward.9} parent=1 // pred_fallthru
      _
    // Predicated region
    $region10: #{stacked_brnn_forward.9} parent=1 // pred_check
      _
    $region11: #{stacked_brnn_forward.9} parent=1 // pred_check_branch
      %18 = sbr.rel (0) target = $region13
    $region12: #{stacked_brnn_forward.9} parent=1 // pred_region
      _
    $region13: #{stacked_brnn_forward.9} parent=1 // pred_fallthru
      _
    // Predicated region
    $region14: #{stacked_brnn_forward.9} parent=1 // pred_check
      _
    $region15: #{stacked_brnn_forward.9} parent=1 // pred_check_branch
      %20 = sbr.rel (0) target = $region17
    $region16: #{stacked_brnn_forward.9} parent=1 // pred_region
      _
    $region17: #{stacked_brnn_forward.9} parent=1 // pred_fallthru
      _
    // Predicated region
    $region18: #{stacked_brnn_forward.9} parent=1 // pred_check
      _
    $region19: #{stacked_brnn_forward.9} parent=1 // pred_check_branch
      %22 = sbr.rel (0) target = $region21
    $region20: #{stacked_brnn_forward.9} parent=1 // pred_region
      _
    $region21: #{stacked_brnn_forward.9} parent=1 // pred_fallthru
      _
    // Predicated region
    $region22: #{stacked_brnn_forward.9} parent=1 // pred_check
      _
    $region23: #{stacked_brnn_forward.9} parent=1 // pred_check_branch
      %24 = sbr.rel (0) target = $region25
    $region24: #{stacked_brnn_forward.9} parent=1 // pred_region
      _
    $region25: #{stacked_brnn_forward.9} parent=1 // pred_fallthru
      _
    // Predicated region
    $region26: #{stacked_brnn_forward.9} parent=1 // pred_check
      _
    $region27: #{stacked_brnn_forward.9} parent=1 // pred_check_branch
      %26 = sbr.rel (0) target = $region29
    $region28: #{stacked_brnn_forward.9} parent=1 // pred_region
      _
    $region29: #{stacked_brnn_forward.9} parent=1 // pred_fallthru
      _
    %v27 = vld [vmem:[%s0] sm:$0x3]
    %v28 = vld [vmem:[%s2] sm:$0xff]
    %v29 = vld [vmem:[%s2 + $0x8] sm:$0xff]
    %v30 = vld [vmem:[%s2 + $0x10] sm:$0xff]
    %v31 = vld [vmem:[%s2 + $0x18] sm:$0xff]
    %v32 = vld [vmem:[%s2 + $0x20] sm:$0xff]
    %v33 = vld [vmem:[%s2 + $0x28] sm:$0xff]
    %v34 = vld [vmem:[%s2 + $0x30] sm:$0xff]
    %v35 = vld [vmem:[%s2 + $0x38] sm:$0xff]
    %v36 = vld [vmem:[%s2 + $0x40] sm:$0xff]
    %v37 = vld [vmem:[%s2 + $0x48] sm:$0xff]
    %v38 = vld [vmem:[%s2 + $0x50] sm:$0xff]
    %v39 = vld [vmem:[%s2 + $0x58] sm:$0xff]
    %v40 = vld [vmem:[%s2 + $0x60] sm:$0xff]
    %v41 = vld [vmem:[%s2 + $0x68] sm:$0xff]
    %v42 = vld [vmem:[%s2 + $0x70] sm:$0xff]
    %v43 = vld [vmem:[%s2 + $0x78] sm:$0xff]
    %v44 = vld [vmem:[%s1] sm:$0x3]
    %v45 = vld [vmem:[%s3] sm:$0xff]
    %v46 = vld [vmem:[%s3 + $0x8] sm:$0xff]
    %v47 = vld [vmem:[%s3 + $0x10] sm:$0xff]
    %v48 = vld [vmem:[%s3 + $0x18] sm:$0xff]
    %v49 = vld [vmem:[%s3 + $0x20] sm:$0xff]
    %v50 = vld [vmem:[%s3 + $0x28] sm:$0xff]
    %v51 = vld [vmem:[%s3 + $0x30] sm:$0xff]
    %v52 = vld [vmem:[%s3 + $0x38] sm:$0xff]
    %v53 = vld [vmem:[%s3 + $0x40] sm:$0xff]
    %v54 = vld [vmem:[%s3 + $0x48] sm:$0xff]
    %v55 = vld [vmem:[%s3 + $0x50] sm:$0xff]
    %v56 = vld [vmem:[%s3 + $0x58] sm:$0xff]
    %v57 = vld [vmem:[%s3 + $0x60] sm:$0xff]
    %v58 = vld [vmem:[%s3 + $0x68] sm:$0x3f]
    %vm59 = vcmask 900096
    %v61 = vsel %vm59, %v44, 0
    %vm63 = vcmask 1045504
    %v65 = vsel %vm63, %v58, 0
    %67 = vmatpush.msra.mxu0 0.0
    %68 = vmatpush.msra.mxu0 0.0
    %69 = vmatpush.msra.mxu0 %v65
    %70 = vmatpush.msra.mxu0 %v57
    %71 = vmatpush.msra.mxu0 %v56
    %72 = vmatpush.msra.mxu0 %v55
    %73 = vmatpush.msra.mxu0 %v54
    %74 = vmatpush.msra.mxu0 %v53
    %75 = vmatpush.msra.mxu0 %v52
    %76 = vmatpush.msra.mxu0 %v51
    %77 = vmatpush.msra.mxu0 %v50
    %78 = vmatpush.msra.mxu0 %v49
    %79 = vmatpush.msra.mxu0 %v48
    %80 = vmatpush.msra.mxu0 %v47
    %81 = vmatpush.msra.mxu0 %v46
    %82 = vmatpush.msra.mxu0 %v45
    %83 = vmatmul.f32.gmra.mxu0 %v61
    %v84 = vpop.f32.mrf.mxu0
    %v85 = vadd.f32 0.0, %v84
    %86 = vdwg.mxu0
    %87 = vmatpush.msra.mxu0 %v43
    %88 = vmatpush.msra.mxu0 %v42
    %89 = vmatpush.msra.mxu0 %v41
    %90 = vmatpush.msra.mxu0 %v40
    %91 = vmatpush.msra.mxu0 %v39
    %92 = vmatpush.msra.mxu0 %v38
    %93 = vmatpush.msra.mxu0 %v37
    %94 = vmatpush.msra.mxu0 %v36
    %95 = vmatpush.msra.mxu0 %v35
    %96 = vmatpush.msra.mxu0 %v34
    %97 = vmatpush.msra.mxu0 %v33
    %98 = vmatpush.msra.mxu0 %v32
    %99 = vmatpush.msra.mxu0 %v31
    %100 = vmatpush.msra.mxu0 %v30
    %101 = vmatpush.msra.mxu0 %v29
    %102 = vmatpush.msra.mxu0 %v28
    %103 = vmatmul.f32.gmra.mxu0 %v27
    %v104 = vpop.f32.mrf.mxu0
    %v105 = vadd.f32 %v85, %v104
    %106 = vdwg.mxu0
    %v107 = vld [vmem:[%s4] sm:$0x1]
    %v109 = vperm.slane %v107, 0
    %v111 = vadd.f32 %v105, %v109
    %v112 = vmax.f32 %v111, 0.0
    %v113 = vld [vmem:[%s5] sm:$0xff]
    %v114 = vld [vmem:[%s5 + $0x8] sm:$0xff]
    %v115 = vld [vmem:[%s5 + $0x10] sm:$0xff]
    %v116 = vld [vmem:[%s5 + $0x18] sm:$0xff]
    %v117 = vld [vmem:[%s5 + $0x20] sm:$0xff]
    %v118 = vld [vmem:[%s5 + $0x28] sm:$0xff]
    %v119 = vld [vmem:[%s5 + $0x30] sm:$0xff]
    %v120 = vld [vmem:[%s5 + $0x38] sm:$0xff]
    %v121 = vld [vmem:[%s6] sm:$0x1]
    %v123 = vperm.slane %v121, 0
    %vm125 = vcmask 523264
    %v127 = vsel %vm125, %v112, 0
    %129 = vmatpush.msra.mxu0 0.0
    %130 = vmatpush.msra.mxu0 0.0
    %131 = vmatpush.msra.mxu0 0.0
    %132 = vmatpush.msra.mxu0 0.0
    %133 = vmatpush.msra.mxu0 0.0
    %134 = vmatpush.msra.mxu0 0.0
    %135 = vmatpush.msra.mxu0 0.0
    %136 = vmatpush.msra.mxu0 0.0
    %137 = vmatpush.msra.mxu0 %v120
    %138 = vmatpush.msra.mxu0 %v119
    %139 = vmatpush.msra.mxu0 %v118
    %140 = vmatpush.msra.mxu0 %v117
    %141 = vmatpush.msra.mxu0 %v116
    %142 = vmatpush.msra.mxu0 %v115
    %143 = vmatpush.msra.mxu0 %v114
    %144 = vmatpush.msra.mxu0 %v113
    %145 = vmatmul.f32.gmra.mxu0 %v127
    %v146 = vpop.f32.mrf.mxu0
    %v147 = vadd.f32 %v123, %v146
    %148 = vdwg.mxu0
    %vm149 = vcmask 459776
    %150 = vst.msk [vmem:[#allocation2] sm:$0x3] %vm149, %v147
    // Predicated region
    $region30: #{stacked_brnn_forward.9} parent=1 // pred_check
      _
    $region31: #{stacked_brnn_forward.9} parent=1 // pred_check_branch
      %152 = sbr.rel (0) target = $region33
    $region32: #{stacked_brnn_forward.9} parent=1 // pred_region
      %154 = vsyncadd [#allocation3], 0
      %s156 = sshll.u32 [#allocation2], 4
      %s157 = int_to_ptr.vmem [resolvable:$true] %s156
      %s158 = sshll.u32 %s7, 4
      %s159 = int_to_ptr.hbm [resolvable:$true] %s158
      %161 = dma.vmem_to_hbm [thread:$0]  %s157, 32, %s159, [#allocation3]
    $region33: #{stacked_brnn_forward.9} parent=1 // pred_fallthru
      _
    // Predicated region
    $region34: #{stacked_brnn_forward.9} parent=1 // pred_check
      _
    $region35: #{stacked_brnn_forward.9} parent=1 // pred_check_branch
      %163 = sbr.rel (0) target = $region37
    $region36: #{stacked_brnn_forward.9} parent=1 // pred_region
      %165 = dma.done [#allocation3], 32
    $region37: #{stacked_brnn_forward.9} parent=1 // pred_fallthru
      _
    %166 = vsyncpa [#allocation3], 1

// kernel: stacked_brnn_forward.6
$region0: #{stacked_brnn_forward.6}
  #allocation0 [shape = 'u32[]', space=smem, size = 0x4, offset = 0x4, fixed_abs, tag = 'smem constant byte address 0x4 - core index']
  #allocation1 [shape = 'u32[72,128]{1,0:T(1,128)}', space=vmem, size = 0x9000, scoped, tag = 'internal scratch']
  #allocation2 [shape = 'f32[2,32]{1,0:T(2,128)}', space=vmem, size = 0x400, scoped, tag = 'scratch operand']
  #allocation3 [shape = 'f32[2,32]{1,0:T(2,128)}', space=vmem, size = 0x400, scoped, tag = 'scratch operand']
  #allocation4 [shape = 'f32[2,32]{1,0:T(2,128)}', space=vmem, size = 0x400, scoped, tag = 'scratch operand']
  #allocation5 [shape = 'f32[2,32]{1,0:T(2,128)}', space=vmem, size = 0x400, scoped, tag = 'scratch operand']
  %s0 = inlined_call_operand.vmem [shape: f32[8,2,256], index: 0, kind: input, shape index: {}]
  %s1 = inlined_call_operand.vmem [shape: bf16[32,128], index: 1, kind: input, shape index: {}]
  %s2 = inlined_call_operand.vmem [shape: bf16[32,128], index: 2, kind: input, shape index: {}]
  %s3 = inlined_call_operand.vmem [shape: f32[8,2,64], index: 3, kind: output, shape index: {}]
  %s4 = sld [smem:[#allocation0]]
  $region22: #{stacked_brnn_forward.6} parent=0
    _
  %s6 = ssub.s32 1, %s4
  %s7 = scalar_select 0, %s6, %s4
  // Predicated region
  $region2: #{stacked_brnn_forward.6} parent=0 // pred_check
    _
  $region3: #{stacked_brnn_forward.6} parent=0 // pred_check_branch
    %9 = sbr.rel (0) target = $region5
  $region4: #{stacked_brnn_forward.6} parent=0 // pred_region
    _
  $region5: #{stacked_brnn_forward.6} parent=0 // pred_fallthru
    _
  // Predicated region
  $region6: #{stacked_brnn_forward.6} parent=0 // pred_check
    _
  $region7: #{stacked_brnn_forward.6} parent=0 // pred_check_branch
    %11 = sbr.rel (0) target = $region9
  $region8: #{stacked_brnn_forward.6} parent=0 // pred_region
    _
  $region9: #{stacked_brnn_forward.6} parent=0 // pred_fallthru
    _
  // Predicated region
  $region10: #{stacked_brnn_forward.6} parent=0 // pred_check
    _
  $region11: #{stacked_brnn_forward.6} parent=0 // pred_check_branch
    %13 = sbr.rel (0) target = $region13
  $region12: #{stacked_brnn_forward.6} parent=0 // pred_region
    _
  $region13: #{stacked_brnn_forward.6} parent=0 // pred_fallthru
    _
  %vm15 = vcmask 254976
  %16 = vst.msk [vmem:[#allocation2] sm:$0x3] %vm15, 0.0
  %17 = vst.msk [vmem:[#allocation3] sm:$0x3] %vm15, 0.0
  %18 = vst.msk [vmem:[#allocation4] sm:$0x3] %vm15, 0.0
  %19 = vst.msk [vmem:[#allocation5] sm:$0x3] %vm15, 0.0
  %v20 = vld [vmem:[%s0] sm:$0xf]
  %s21 = scalar_lea.vmem %s0, 28
  %v22 = vld [vmem:[%s21] sm:$0xf]
  %v23 = vld [vmem:[#allocation2] sm:$0x3]
  %v24 = vpack.c.bf16 %v23, %v23
  %v25 = vld [vmem:[%s1] sm:$0xf]
  %v26 = vld [vmem:[%s1 + $0x4] sm:$0xf]
  %v27 = vld [vmem:[%s1 + $0x8] sm:$0xf]
  %v28 = vld [vmem:[%s1 + $0xc] sm:$0xf]
  %v33 = vunpack.c.l.b16 %v25
  %v34 = vunpack.c.l.b16 %v26
  %v35 = vunpack.c.l.b16 %v27
  %v36 = vunpack.c.l.b16 %v28
  %v37 = vpack.c.b16 %v34, %v33
  %v38 = vpack.c.b16 %v36, %v35
  %vm41 = vcmask 261120
  %v43 = vsel %vm41, %v24, 0
  %45 = vmatpush.bf16.msra.mxu0 0
  %46 = vmatpush.bf16.msra.mxu0 0
  %47 = vmatpush.bf16.msra.mxu0 0
  %48 = vmatpush.bf16.msra.mxu0 0
  %49 = vmatpush.bf16.msra.mxu0 0
  %50 = vmatpush.bf16.msra.mxu0 0
  %51 = vmatpush.bf16.msra.mxu0 %v38
  %52 = vmatpush.bf16.msra.mxu0 %v37
  %53 = vmatmul.bf16.gmra.mxu0 %v43
  %v54 = vpop.f32.mrf.mxu0
  %v55 = vadd.f32 0.0, %v54
  %v56 = vpop.f32.mrf.mxu0
  %57 = vdwg.mxu0
  %v58 = vadd.f32 %v20, %v55
  %v59 = vld [vmem:[#allocation4] sm:$0x3]
  %v60 = vpack.c.bf16 %v59, %v59
  %v61 = vld [vmem:[%s2] sm:$0xf]
  %v62 = vld [vmem:[%s2 + $0x4] sm:$0xf]
  %v63 = vld [vmem:[%s2 + $0x8] sm:$0xf]
  %v64 = vld [vmem:[%s2 + $0xc] sm:$0xf]
  %v69 = vunpack.c.l.b16 %v61
  %v70 = vunpack.c.l.b16 %v62
  %v71 = vunpack.c.l.b16 %v63
  %v72 = vunpack.c.l.b16 %v64
  %v73 = vpack.c.b16 %v70, %v69
  %v74 = vpack.c.b16 %v72, %v71
  %v78 = vsel %vm41, %v60, 0
  %80 = vmatpush.bf16.msra.mxu0 0
  %81 = vmatpush.bf16.msra.mxu0 0
  %82 = vmatpush.bf16.msra.mxu0 0
  %83 = vmatpush.bf16.msra.mxu0 0
  %84 = vmatpush.bf16.msra.mxu0 0
  %85 = vmatpush.bf16.msra.mxu0 0
  %86 = vmatpush.bf16.msra.mxu0 %v74
  %87 = vmatpush.bf16.msra.mxu0 %v73
  %88 = vmatmul.bf16.gmra.mxu0 %v78
  %v89 = vpop.f32.mrf.mxu0
  %v90 = vadd.f32 0.0, %v89
  %v91 = vpop.f32.mrf.mxu0
  %92 = vdwg.mxu0
  %v94 = vrot.slane %v22, 2
  %v96 = vadd.f32 %v94, %v90
  %v97 = vld [vmem:[#allocation3] sm:$0x3]
  %v98 = vxor.u32 %v58, 2147483648
  %v99 = vmul.f32 %v98, 1.442695
  %v100 = vpow.pop %v99
  %v101 = vadd.f32 %v100, 1.0
  %v102 = vrcp.pop %v101
  %v103 = vmul.f32 %v101, %v102
  %v104 = vsub.f32 1.0, %v103
  %v105 = vmul.f32 %v102, %v104
  %v106 = vadd.f32 %v102, %v105
  %vm107 = vweird.f32 %v101
  %vm108 = vweird.f32 %v102
  %vm109 = vmor %vm107, %vm108
  %v110 = vsel %vm109, %v102, %v106
  %v111 = vand.u32 2147483647, %v101
  %vm112 = vcmp.eq.f32.partialorder %v111, 8.507059e+37
  %v113 = vand.u32 %v101, 2147483648
  %v114 = vor.u32 1.1754944e-38, %v113
  %v115 = vsel %vm112, %v114, %v110
  %v116 = vmul.f32 1.0, %v115
  %v117 = vtanh.pop %v58
  %119 = vrot.lane.b32.xlu0 %v97, 32
  %v120 = vpop.permute.xlu0 %119
  %v122 = vmul.f32 %v116, %v120
  %124 = vrot.lane.b32.xlu0 %v117, 64
  %v125 = vpop.permute.xlu0 %124
  %v127 = vmul.f32 %v116, %v125
  %129 = vrot.lane.b32.xlu0 %v127, 32
  %v130 = vpop.permute.xlu0 %129
  %v132 = vadd.f32 %v122, %v130
  %v133 = vtanh.pop %v132
  %135 = vrot.lane.b32.xlu0 %v133, 64
  %v136 = vpop.permute.xlu0 %135
  %v138 = vmul.f32 %v116, %v136
  %v139 = vld [vmem:[#allocation5] sm:$0x3]
  %v140 = vxor.u32 %v96, 2147483648
  %v141 = vmul.f32 %v140, 1.442695
  %v142 = vpow.pop %v141
  %v143 = vadd.f32 %v142, 1.0
  %v144 = vrcp.pop %v143
  %v145 = vmul.f32 %v143, %v144
  %v146 = vsub.f32 1.0, %v145
  %v147 = vmul.f32 %v144, %v146
  %v148 = vadd.f32 %v144, %v147
  %vm149 = vweird.f32 %v143
  %vm150 = vweird.f32 %v144
  %vm151 = vmor %vm149, %vm150
  %v152 = vsel %vm151, %v144, %v148
  %v153 = vand.u32 2147483647, %v143
  %vm154 = vcmp.eq.f32.partialorder %v153, 8.507059e+37
  %v155 = vand.u32 %v143, 2147483648
  %v156 = vor.u32 1.1754944e-38, %v155
  %v157 = vsel %vm154, %v156, %v152
  %v158 = vmul.f32 1.0, %v157
  %v159 = vtanh.pop %v96
  %161 = vrot.lane.b32.xlu0 %v139, 32
  %v162 = vpop.permute.xlu0 %161
  %v164 = vmul.f32 %v158, %v162
  %166 = vrot.lane.b32.xlu0 %v159, 64
  %v167 = vpop.permute.xlu0 %166
  %v169 = vmul.f32 %v158, %v167
  %171 = vrot.lane.b32.xlu0 %v169, 32
  %v172 = vpop.permute.xlu0 %171
  %v174 = vadd.f32 %v164, %v172
  %v175 = vtanh.pop %v174
  %177 = vrot.lane.b32.xlu0 %v175, 64
  %v178 = vpop.permute.xlu0 %177
  %v180 = vmul.f32 %v158, %v178
  %182 = vst [vmem:[#allocation1] ss:$4 sm:$0xff] %v138
  %v183 = vld.sshfl [vmem:[#allocation1] sm:$0xff pattern:$0x73625140]
  %184 = vrot.lane.b32.xlu0 %v183, 32
  %v185 = vpop.permute.xlu0 %184
  %187 = vst.msk [vmem:[#allocation2] sm:$0x3] %vm15, %v185
  %189 = vst [vmem:[#allocation1] ss:$4 sm:$0xff] %v132
  %v190 = vld.sshfl [vmem:[#allocation1] sm:$0xff pattern:$0x73625140]
  %191 = vrot.lane.b32.xlu0 %v190, 96
  %v192 = vpop.permute.xlu0 %191
  %194 = vst.msk [vmem:[#allocation3] sm:$0x3] %vm15, %v192
  %196 = vst [vmem:[#allocation1] ss:$4 sm:$0xff] %v180
  %v197 = vld.sshfl [vmem:[#allocation1] sm:$0xff pattern:$0x73625140]
  %198 = vrot.lane.b32.xlu0 %v197, 32
  %v199 = vpop.permute.xlu0 %198
  %201 = vst.msk [vmem:[#allocation4] sm:$0x3] %vm15, %v199
  %203 = vst [vmem:[#allocation1] ss:$4 sm:$0xff] %v174
  %v204 = vld.sshfl [vmem:[#allocation1] sm:$0xff pattern:$0x73625140]
  %205 = vrot.lane.b32.xlu0 %v204, 96
  %v206 = vpop.permute.xlu0 %205
  %208 = vst.msk [vmem:[#allocation5] sm:$0x3] %vm15, %v206
  %209 = vst [vmem:[#allocation1] ss:$4 sm:$0xff] %v138
  %v210 = vld.sshfl [vmem:[#allocation1] sm:$0xff pattern:$0x73625140]
  %211 = vrot.lane.b32.xlu0 %v210, 32
  %v212 = vpop.permute.xlu0 %211
  %214 = vst.msk [vmem:[%s3] sm:$0x3] %vm15, %v212
  %215 = vst [vmem:[#allocation1] ss:$4 sm:$0xff] %v180
  %v216 = vld.sshfl [vmem:[#allocation1] sm:$0xff pattern:$0x73625140]
  %217 = vrot.lane.b32.xlu0 %v216, 64
  %v218 = vpop.permute.xlu0 %217
  %s220 = scalar_lea.vmem %s3, 14
  %vm221 = vcmask 517376
  %222 = vst.msk [vmem:[%s220] sm:$0x3] %vm221, %v218
  %s223 = scalar_lea.vmem %s0, 4
  %v224 = vld [vmem:[%s223] sm:$0xf]
  %s225 = scalar_lea.vmem %s0, 24
  %v226 = vld [vmem:[%s225] sm:$0xf]
  %v227 = vld [vmem:[#allocation2] sm:$0x3]
  %v228 = vpack.c.bf16 %v227, %v227
  %v229 = vld [vmem:[%s1] sm:$0xf]
  %v230 = vld [vmem:[%s1 + $0x4] sm:$0xf]
  %v231 = vld [vmem:[%s1 + $0x8] sm:$0xf]
  %v232 = vld [vmem:[%s1 + $0xc] sm:$0xf]
  %v237 = vunpack.c.l.b16 %v229
  %v238 = vunpack.c.l.b16 %v230
  %v239 = vunpack.c.l.b16 %v231
  %v240 = vunpack.c.l.b16 %v232
  %v241 = vpack.c.b16 %v238, %v237
  %v242 = vpack.c.b16 %v240, %v239
  %v246 = vsel %vm41, %v228, 0
  %248 = vmatpush.bf16.msra.mxu0 0
  %249 = vmatpush.bf16.msra.mxu0 0
  %250 = vmatpush.bf16.msra.mxu0 0
  %251 = vmatpush.bf16.msra.mxu0 0
  %252 = vmatpush.bf16.msra.mxu0 0
  %253 = vmatpush.bf16.msra.mxu0 0
  %254 = vmatpush.bf16.msra.mxu0 %v242
  %255 = vmatpush.bf16.msra.mxu0 %v241
  %256 = vmatmul.bf16.gmra.mxu0 %v246
  %v257 = vpop.f32.mrf.mxu0
  %v258 = vadd.f32 0.0, %v257
  %v259 = vpop.f32.mrf.mxu0
  %260 = vdwg.mxu0
  %v261 = vadd.f32 %v224, %v258
  %v262 = vld [vmem:[#allocation4] sm:$0x3]
  %v263 = vpack.c.bf16 %v262, %v262
  %v264 = vld [vmem:[%s2] sm:$0xf]
  %v265 = vld [vmem:[%s2 + $0x4] sm:$0xf]
  %v266 = vld [vmem:[%s2 + $0x8] sm:$0xf]
  %v267 = vld [vmem:[%s2 + $0xc] sm:$0xf]
  %v272 = vunpack.c.l.b16 %v264
  %v273 = vunpack.c.l.b16 %v265
  %v274 = vunpack.c.l.b16 %v266
  %v275 = vunpack.c.l.b16 %v267
  %v276 = vpack.c.b16 %v273, %v272
  %v277 = vpack.c.b16 %v275, %v274
  %v281 = vsel %vm41, %v263, 0
  %283 = vmatpush.bf16.msra.mxu0 0
  %284 = vmatpush.bf16.msra.mxu0 0
  %285 = vmatpush.bf16.msra.mxu0 0
  %286 = vmatpush.bf16.msra.mxu0 0
  %287 = vmatpush.bf16.msra.mxu0 0
  %288 = vmatpush.bf16.msra.mxu0 0
  %289 = vmatpush.bf16.msra.mxu0 %v277
  %290 = vmatpush.bf16.msra.mxu0 %v276
  %291 = vmatmul.bf16.gmra.mxu0 %v281
  %v292 = vpop.f32.mrf.mxu0
  %v293 = vadd.f32 0.0, %v292
  %v294 = vpop.f32.mrf.mxu0
  %295 = vdwg.mxu0
  %v297 = vrot.slane %v226, 2
  %v299 = vadd.f32 %v297, %v293
  %v300 = vld [vmem:[#allocation3] sm:$0x3]
  %v301 = vxor.u32 %v261, 2147483648
  %v302 = vmul.f32 %v301, 1.442695
  %v303 = vpow.pop %v302
  %v304 = vadd.f32 %v303, 1.0
  %v305 = vrcp.pop %v304
  %v306 = vmul.f32 %v304, %v305
  %v307 = vsub.f32 1.0, %v306
  %v308 = vmul.f32 %v305, %v307
  %v309 = vadd.f32 %v305, %v308
  %vm310 = vweird.f32 %v304
  %vm311 = vweird.f32 %v305
  %vm312 = vmor %vm310, %vm311
  %v313 = vsel %vm312, %v305, %v309
  %v314 = vand.u32 2147483647, %v304
  %vm315 = vcmp.eq.f32.partialorder %v314, 8.507059e+37
  %v316 = vand.u32 %v304, 2147483648
  %v317 = vor.u32 1.1754944e-38, %v316
  %v318 = vsel %vm315, %v317, %v313
  %v319 = vmul.f32 1.0, %v318
  %v320 = vtanh.pop %v261
  %322 = vrot.lane.b32.xlu0 %v300, 32
  %v323 = vpop.permute.xlu0 %322
  %v325 = vmul.f32 %v319, %v323
  %327 = vrot.lane.b32.xlu0 %v320, 64
  %v328 = vpop.permute.xlu0 %327
  %v330 = vmul.f32 %v319, %v328
  %332 = vrot.lane.b32.xlu0 %v330, 32
  %v333 = vpop.permute.xlu0 %332
  %v335 = vadd.f32 %v325, %v333
  %v336 = vtanh.pop %v335
  %338 = vrot.lane.b32.xlu0 %v336, 64
  %v339 = vpop.permute.xlu0 %338
  %v341 = vmul.f32 %v319, %v339
  %v342 = vld [vmem:[#allocation5] sm:$0x3]
  %v343 = vxor.u32 %v299, 2147483648
  %v344 = vmul.f32 %v343, 1.442695
  %v345 = vpow.pop %v344
  %v346 = vadd.f32 %v345, 1.0
  %v347 = vrcp.pop %v346
  %v348 = vmul.f32 %v346, %v347
  %v349 = vsub.f32 1.0, %v348
  %v350 = vmul.f32 %v347, %v349
  %v351 = vadd.f32 %v347, %v350
  %vm352 = vweird.f32 %v346
  %vm353 = vweird.f32 %v347
  %vm354 = vmor %vm352, %vm353
  %v355 = vsel %vm354, %v347, %v351
  %v356 = vand.u32 2147483647, %v346
  %vm357 = vcmp.eq.f32.partialorder %v356, 8.507059e+37
  %v358 = vand.u32 %v346, 2147483648
  %v359 = vor.u32 1.1754944e-38, %v358
  %v360 = vsel %vm357, %v359, %v355
  %v361 = vmul.f32 1.0, %v360
  %v362 = vtanh.pop %v299
  %364 = vrot.lane.b32.xlu0 %v342, 32
  %v365 = vpop.permute.xlu0 %364
  %v367 = vmul.f32 %v361, %v365
  %369 = vrot.lane.b32.xlu0 %v362, 64
  %v370 = vpop.permute.xlu0 %369
  %v372 = vmul.f32 %v361, %v370
  %374 = vrot.lane.b32.xlu0 %v372, 32
  %v375 = vpop.permute.xlu0 %374
  %v377 = vadd.f32 %v367, %v375
  %v378 = vtanh.pop %v377
  %380 = vrot.lane.b32.xlu0 %v378, 64
  %v381 = vpop.permute.xlu0 %380
  %v383 = vmul.f32 %v361, %v381
  %385 = vst [vmem:[#allocation1] ss:$4 sm:$0xff] %v341
  %v386 = vld.sshfl [vmem:[#allocation1] sm:$0xff pattern:$0x73625140]
  %387 = vrot.lane.b32.xlu0 %v386, 32
  %v388 = vpop.permute.xlu0 %387
  %390 = vst.msk [vmem:[#allocation2] sm:$0x3] %vm15, %v388
  %392 = vst [vmem:[#allocation1] ss:$4 sm:$0xff] %v335
  %v393 = vld.sshfl [vmem:[#allocation1] sm:$0xff pattern:$0x73625140]
  %394 = vrot.lane.b32.xlu0 %v393, 96
  %v395 = vpop.permute.xlu0 %394
  %397 = vst.msk [vmem:[#allocation3] sm:$0x3] %vm15, %v395
  %399 = vst [vmem:[#allocation1] ss:$4 sm:$0xff] %v383
  %v400 = vld.sshfl [vmem:[#allocation1] sm:$0xff pattern:$0x73625140]
  %401 = vrot.lane.b32.xlu0 %v400, 32
  %v402 = vpop.permute.xlu0 %401
  %404 = vst.msk [vmem:[#allocation4] sm:$0x3] %vm15, %v402
  %406 = vst [vmem:[#allocation1] ss:$4 sm:$0xff] %v377
  %v407 = vld.sshfl [vmem:[#allocation1] sm:$0xff pattern:$0x73625140]
  %408 = vrot.lane.b32.xlu0 %v407, 96
  %v409 = vpop.permute.xlu0 %408
  %411 = vst.msk [vmem:[#allocation5] sm:$0x3] %vm15, %v409
  %412 = vst [vmem:[#allocation1] ss:$4 sm:$0xff] %v341
  %v413 = vld.sshfl [vmem:[#allocation1] sm:$0xff pattern:$0x73625140]
  %414 = vrot.lane.b32.xlu0 %v413, 32
  %v415 = vpop.permute.xlu0 %414
  %s417 = scalar_lea.vmem %s3, 2
  %418 = vst.msk [vmem:[%s417] sm:$0x3] %vm15, %v415
  %419 = vst [vmem:[#allocation1] ss:$4 sm:$0xff] %v383
  %v420 = vld.sshfl [vmem:[#allocation1] sm:$0xff pattern:$0x73625140]
  %421 = vrot.lane.b32.xlu0 %v420, 64
  %v422 = vpop.permute.xlu0 %421
  %s424 = scalar_lea.vmem %s3, 12
  %425 = vst.msk [vmem:[%s424] sm:$0x3] %vm221, %v422
  %s426 = scalar_lea.vmem %s0, 8
  %v427 = vld [vmem:[%s426] sm:$0xf]
  %s428 = scalar_lea.vmem %s0, 20
  %v429 = vld [vmem:[%s428] sm:$0xf]
  %v430 = vld [vmem:[#allocation2] sm:$0x3]
  %v431 = vpack.c.bf16 %v430, %v430
  %v432 = vld [vmem:[%s1] sm:$0xf]
  %v433 = vld [vmem:[%s1 + $0x4] sm:$0xf]
  %v434 = vld [vmem:[%s1 + $0x8] sm:$0xf]
  %v435 = vld [vmem:[%s1 + $0xc] sm:$0xf]
  %v440 = vunpack.c.l.b16 %v432
  %v441 = vunpack.c.l.b16 %v433
  %v442 = vunpack.c.l.b16 %v434
  %v443 = vunpack.c.l.b16 %v435
  %v444 = vpack.c.b16 %v441, %v440
  %v445 = vpack.c.b16 %v443, %v442
  %v449 = vsel %vm41, %v431, 0
  %451 = vmatpush.bf16.msra.mxu0 0
  %452 = vmatpush.bf16.msra.mxu0 0
  %453 = vmatpush.bf16.msra.mxu0 0
  %454 = vmatpush.bf16.msra.mxu0 0
  %455 = vmatpush.bf16.msra.mxu0 0
  %456 = vmatpush.bf16.msra.mxu0 0
  %457 = vmatpush.bf16.msra.mxu0 %v445
  %458 = vmatpush.bf16.msra.mxu0 %v444
  %459 = vmatmul.bf16.gmra.mxu0 %v449
  %v460 = vpop.f32.mrf.mxu0
  %v461 = vadd.f32 0.0, %v460
  %v462 = vpop.f32.mrf.mxu0
  %463 = vdwg.mxu0
  %v464 = vadd.f32 %v427, %v461
  %v465 = vld [vmem:[#allocation4] sm:$0x3]
  %v466 = vpack.c.bf16 %v465, %v465
  %v467 = vld [vmem:[%s2] sm:$0xf]
  %v468 = vld [vmem:[%s2 + $0x4] sm:$0xf]
  %v469 = vld [vmem:[%s2 + $0x8] sm:$0xf]
  %v470 = vld [vmem:[%s2 + $0xc] sm:$0xf]
  %v475 = vunpack.c.l.b16 %v467
  %v476 = vunpack.c.l.b16 %v468
  %v477 = vunpack.c.l.b16 %v469
  %v478 = vunpack.c.l.b16 %v470
  %v479 = vpack.c.b16 %v476, %v475
  %v480 = vpack.c.b16 %v478, %v477
  %v484 = vsel %vm41, %v466, 0
  %486 = vmatpush.bf16.msra.mxu0 0
  %487 = vmatpush.bf16.msra.mxu0 0
  %488 = vmatpush.bf16.msra.mxu0 0
  %489 = vmatpush.bf16.msra.mxu0 0
  %490 = vmatpush.bf16.msra.mxu0 0
  %491 = vmatpush.bf16.msra.mxu0 0
  %492 = vmatpush.bf16.msra.mxu0 %v480
  %493 = vmatpush.bf16.msra.mxu0 %v479
  %494 = vmatmul.bf16.gmra.mxu0 %v484
  %v495 = vpop.f32.mrf.mxu0
  %v496 = vadd.f32 0.0, %v495
  %v497 = vpop.f32.mrf.mxu0
  %498 = vdwg.mxu0
  %v500 = vrot.slane %v429, 2
  %v502 = vadd.f32 %v500, %v496
  %v503 = vld [vmem:[#allocation3] sm:$0x3]
  %v504 = vxor.u32 %v464, 2147483648
  %v505 = vmul.f32 %v504, 1.442695
  %v506 = vpow.pop %v505
  %v507 = vadd.f32 %v506, 1.0
  %v508 = vrcp.pop %v507
  %v509 = vmul.f32 %v507, %v508
  %v510 = vsub.f32 1.0, %v509
  %v511 = vmul.f32 %v508, %v510
  %v512 = vadd.f32 %v508, %v511
  %vm513 = vweird.f32 %v507
  %vm514 = vweird.f32 %v508
  %vm515 = vmor %vm513, %vm514
  %v516 = vsel %vm515, %v508, %v512
  %v517 = vand.u32 2147483647, %v507
  %vm518 = vcmp.eq.f32.partialorder %v517, 8.507059e+37
  %v519 = vand.u32 %v507, 2147483648
  %v520 = vor.u32 1.1754944e-38, %v519
  %v521 = vsel %vm518, %v520, %v516
  %v522 = vmul.f32 1.0, %v521
  %v523 = vtanh.pop %v464
  %525 = vrot.lane.b32.xlu0 %v503, 32
  %v526 = vpop.permute.xlu0 %525
  %v528 = vmul.f32 %v522, %v526
  %530 = vrot.lane.b32.xlu0 %v523, 64
  %v531 = vpop.permute.xlu0 %530
  %v533 = vmul.f32 %v522, %v531
  %535 = vrot.lane.b32.xlu0 %v533, 32
  %v536 = vpop.permute.xlu0 %535
  %v538 = vadd.f32 %v528, %v536
  %v539 = vtanh.pop %v538
  %541 = vrot.lane.b32.xlu0 %v539, 64
  %v542 = vpop.permute.xlu0 %541
  %v544 = vmul.f32 %v522, %v542
  %v545 = vld [vmem:[#allocation5] sm:$0x3]
  %v546 = vxor.u32 %v502, 2147483648
  %v547 = vmul.f32 %v546, 1.442695
  %v548 = vpow.pop %v547
  %v549 = vadd.f32 %v548, 1.0
  %v550 = vrcp.pop %v549
  %v551 = vmul.f32 %v549, %v550
  %v552 = vsub.f32 1.0, %v551
  %v553 = vmul.f32 %v550, %v552
  %v554 = vadd.f32 %v550, %v553
  %vm555 = vweird.f32 %v549
  %vm556 = vweird.f32 %v550
  %vm557 = vmor %vm555, %vm556
  %v558 = vsel %vm557, %v550, %v554
  %v559 = vand.u32 2147483647, %v549
  %vm560 = vcmp.eq.f32.partialorder %v559, 8.507059e+37
  %v561 = vand.u32 %v549, 2147483648
  %v562 = vor.u32 1.1754944e-38, %v561
  %v563 = vsel %vm560, %v562, %v558
  %v564 = vmul.f32 1.0, %v563
  %v565 = vtanh.pop %v502
  %567 = vrot.lane.b32.xlu0 %v545, 32
  %v568 = vpop.permute.xlu0 %567
  %v570 = vmul.f32 %v564, %v568
  %572 = vrot.lane.b32.xlu0 %v565, 64
  %v573 = vpop.permute.xlu0 %572
  %v575 = vmul.f32 %v564, %v573
  %577 = vrot.lane.b32.xlu0 %v575, 32
  %v578 = vpop.permute.xlu0 %577
  %v580 = vadd.f32 %v570, %v578
  %v581 = vtanh.pop %v580
  %583 = vrot.lane.b32.xlu0 %v581, 64
  %v584 = vpop.permute.xlu0 %583
  %v586 = vmul.f32 %v564, %v584
  %588 = vst [vmem:[#allocation1] ss:$4 sm:$0xff] %v544
  %v589 = vld.sshfl [vmem:[#allocation1] sm:$0xff pattern:$0x73625140]
  %590 = vrot.lane.b32.xlu0 %v589, 32
  %v591 = vpop.permute.xlu0 %590
  %593 = vst.msk [vmem:[#allocation2] sm:$0x3] %vm15, %v591
  %595 = vst [vmem:[#allocation1] ss:$4 sm:$0xff] %v538
  %v596 = vld.sshfl [vmem:[#allocation1] sm:$0xff pattern:$0x73625140]
  %597 = vrot.lane.b32.xlu0 %v596, 96
  %v598 = vpop.permute.xlu0 %597
  %600 = vst.msk [vmem:[#allocation3] sm:$0x3] %vm15, %v598
  %602 = vst [vmem:[#allocation1] ss:$4 sm:$0xff] %v586
  %v603 = vld.sshfl [vmem:[#allocation1] sm:$0xff pattern:$0x73625140]
  %604 = vrot.lane.b32.xlu0 %v603, 32
  %v605 = vpop.permute.xlu0 %604
  %607 = vst.msk [vmem:[#allocation4] sm:$0x3] %vm15, %v605
  %609 = vst [vmem:[#allocation1] ss:$4 sm:$0xff] %v580
  %v610 = vld.sshfl [vmem:[#allocation1] sm:$0xff pattern:$0x73625140]
  %611 = vrot.lane.b32.xlu0 %v610, 96
  %v612 = vpop.permute.xlu0 %611
  %614 = vst.msk [vmem:[#allocation5] sm:$0x3] %vm15, %v612
  %615 = vst [vmem:[#allocation1] ss:$4 sm:$0xff] %v544
  %v616 = vld.sshfl [vmem:[#allocation1] sm:$0xff pattern:$0x73625140]
  %617 = vrot.lane.b32.xlu0 %v616, 32
  %v618 = vpop.permute.xlu0 %617
  %s620 = scalar_lea.vmem %s3, 4
  %621 = vst.msk [vmem:[%s620] sm:$0x3] %vm15, %v618
  %622 = vst [vmem:[#allocation1] ss:$4 sm:$0xff] %v586
  %v623 = vld.sshfl [vmem:[#allocation1] sm:$0xff pattern:$0x73625140]
  %624 = vrot.lane.b32.xlu0 %v623, 64
  %v625 = vpop.permute.xlu0 %624
  %s627 = scalar_lea.vmem %s3, 10
  %628 = vst.msk [vmem:[%s627] sm:$0x3] %vm221, %v625
  %s629 = scalar_lea.vmem %s0, 12
  %v630 = vld [vmem:[%s629] sm:$0xf]
  %s631 = scalar_lea.vmem %s0, 16
  %v632 = vld [vmem:[%s631] sm:$0xf]
  %v633 = vld [vmem:[#allocation2] sm:$0x3]
  %v634 = vpack.c.bf16 %v633, %v633
  %v635 = vld [vmem:[%s1] sm:$0xf]
  %v636 = vld [vmem:[%s1 + $0x4] sm:$0xf]
  %v637 = vld [vmem:[%s1 + $0x8] sm:$0xf]
  %v638 = vld [vmem:[%s1 + $0xc] sm:$0xf]
  %v643 = vunpack.c.l.b16 %v635
  %v644 = vunpack.c.l.b16 %v636
  %v645 = vunpack.c.l.b16 %v637
  %v646 = vunpack.c.l.b16 %v638
  %v647 = vpack.c.b16 %v644, %v643
  %v648 = vpack.c.b16 %v646, %v645
  %v652 = vsel %vm41, %v634, 0
  %654 = vmatpush.bf16.msra.mxu0 0
  %655 = vmatpush.bf16.msra.mxu0 0
  %656 = vmatpush.bf16.msra.mxu0 0
  %657 = vmatpush.bf16.msra.mxu0 0
  %658 = vmatpush.bf16.msra.mxu0 0
  %659 = vmatpush.bf16.msra.mxu0 0
  %660 = vmatpush.bf16.msra.mxu0 %v648
  %661 = vmatpush.bf16.msra.mxu0 %v647
  %662 = vmatmul.bf16.gmra.mxu0 %v652
  %v663 = vpop.f32.mrf.mxu0
  %v664 = vadd.f32 0.0, %v663
  %v665 = vpop.f32.mrf.mxu0
  %666 = vdwg.mxu0
  %v667 = vadd.f32 %v630, %v664
  %v668 = vld [vmem:[#allocation4] sm:$0x3]
  %v669 = vpack.c.bf16 %v668, %v668
  %v670 = vld [vmem:[%s2] sm:$0xf]
  %v671 = vld [vmem:[%s2 + $0x4] sm:$0xf]
  %v672 = vld [vmem:[%s2 + $0x8] sm:$0xf]
  %v673 = vld [vmem:[%s2 + $0xc] sm:$0xf]
  %v678 = vunpack.c.l.b16 %v670
  %v679 = vunpack.c.l.b16 %v671
  %v680 = vunpack.c.l.b16 %v672
  %v681 = vunpack.c.l.b16 %v673
  %v682 = vpack.c.b16 %v679, %v678
  %v683 = vpack.c.b16 %v681, %v680
  %v687 = vsel %vm41, %v669, 0
  %689 = vmatpush.bf16.msra.mxu0 0
  %690 = vmatpush.bf16.msra.mxu0 0
  %691 = vmatpush.bf16.msra.mxu0 0
  %692 = vmatpush.bf16.msra.mxu0 0
  %693 = vmatpush.bf16.msra.mxu0 0
  %694 = vmatpush.bf16.msra.mxu0 0
  %695 = vmatpush.bf16.msra.mxu0 %v683
  %696 = vmatpush.bf16.msra.mxu0 %v682
  %697 = vmatmul.bf16.gmra.mxu0 %v687
  %v698 = vpop.f32.mrf.mxu0
  %v699 = vadd.f32 0.0, %v698
  %v700 = vpop.f32.mrf.mxu0
  %701 = vdwg.mxu0
  %v703 = vrot.slane %v632, 2
  %v705 = vadd.f32 %v703, %v699
  %v706 = vld [vmem:[#allocation3] sm:$0x3]
  %v707 = vxor.u32 %v667, 2147483648
  %v708 = vmul.f32 %v707, 1.442695
  %v709 = vpow.pop %v708
  %v710 = vadd.f32 %v709, 1.0
  %v711 = vrcp.pop %v710
  %v712 = vmul.f32 %v710, %v711
  %v713 = vsub.f32 1.0, %v712
  %v714 = vmul.f32 %v711, %v713
  %v715 = vadd.f32 %v711, %v714
  %vm716 = vweird.f32 %v710
  %vm717 = vweird.f32 %v711
  %vm718 = vmor %vm716, %vm717
  %v719 = vsel %vm718, %v711, %v715
  %v720 = vand.u32 2147483647, %v710
  %vm721 = vcmp.eq.f32.partialorder %v720, 8.507059e+37
  %v722 = vand.u32 %v710, 2147483648
  %v723 = vor.u32 1.1754944e-38, %v722
  %v724 = vsel %vm721, %v723, %v719
  %v725 = vmul.f32 1.0, %v724
  %v726 = vtanh.pop %v667
  %728 = vrot.lane.b32.xlu0 %v706, 32
  %v729 = vpop.permute.xlu0 %728
  %v731 = vmul.f32 %v725, %v729
  %733 = vrot.lane.b32.xlu0 %v726, 64
  %v734 = vpop.permute.xlu0 %733
  %v736 = vmul.f32 %v725, %v734
  %738 = vrot.lane.b32.xlu0 %v736, 32
  %v739 = vpop.permute.xlu0 %738
  %v741 = vadd.f32 %v731, %v739
  %v742 = vtanh.pop %v741
  %744 = vrot.lane.b32.xlu0 %v742, 64
  %v745 = vpop.permute.xlu0 %744
  %v747 = vmul.f32 %v725, %v745
  %v748 = vld [vmem:[#allocation5] sm:$0x3]
  %v749 = vxor.u32 %v705, 2147483648
  %v750 = vmul.f32 %v749, 1.442695
  %v751 = vpow.pop %v750
  %v752 = vadd.f32 %v751, 1.0
  %v753 = vrcp.pop %v752
  %v754 = vmul.f32 %v752, %v753
  %v755 = vsub.f32 1.0, %v754
  %v756 = vmul.f32 %v753, %v755
  %v757 = vadd.f32 %v753, %v756
  %vm758 = vweird.f32 %v752
  %vm759 = vweird.f32 %v753
  %vm760 = vmor %vm758, %vm759
  %v761 = vsel %vm760, %v753, %v757
  %v762 = vand.u32 2147483647, %v752
  %vm763 = vcmp.eq.f32.partialorder %v762, 8.507059e+37
  %v764 = vand.u32 %v752, 2147483648
  %v765 = vor.u32 1.1754944e-38, %v764
  %v766 = vsel %vm763, %v765, %v761
  %v767 = vmul.f32 1.0, %v766
  %v768 = vtanh.pop %v705
  %770 = vrot.lane.b32.xlu0 %v748, 32
  %v771 = vpop.permute.xlu0 %770
  %v773 = vmul.f32 %v767, %v771
  %775 = vrot.lane.b32.xlu0 %v768, 64
  %v776 = vpop.permute.xlu0 %775
  %v778 = vmul.f32 %v767, %v776
  %780 = vrot.lane.b32.xlu0 %v778, 32
  %v781 = vpop.permute.xlu0 %780
  %v783 = vadd.f32 %v773, %v781
  %v784 = vtanh.pop %v783
  %786 = vrot.lane.b32.xlu0 %v784, 64
  %v787 = vpop.permute.xlu0 %786
  %v789 = vmul.f32 %v767, %v787
  %791 = vst [vmem:[#allocation1] ss:$4 sm:$0xff] %v747
  %v792 = vld.sshfl [vmem:[#allocation1] sm:$0xff pattern:$0x73625140]
  %793 = vrot.lane.b32.xlu0 %v792, 32
  %v794 = vpop.permute.xlu0 %793
  %796 = vst.msk [vmem:[#allocation2] sm:$0x3] %vm15, %v794
  %798 = vst [vmem:[#allocation1] ss:$4 sm:$0xff] %v741
  %v799 = vld.sshfl [vmem:[#allocation1] sm:$0xff pattern:$0x73625140]
  %800 = vrot.lane.b32.xlu0 %v799, 96
  %v801 = vpop.permute.xlu0 %800
  %803 = vst.msk [vmem:[#allocation3] sm:$0x3] %vm15, %v801
  %805 = vst [vmem:[#allocation1] ss:$4 sm:$0xff] %v789
  %v806 = vld.sshfl [vmem:[#allocation1] sm:$0xff pattern:$0x73625140]
  %807 = vrot.lane.b32.xlu0 %v806, 32
  %v808 = vpop.permute.xlu0 %807
  %810 = vst.msk [vmem:[#allocation4] sm:$0x3] %vm15, %v808
  %812 = vst [vmem:[#allocation1] ss:$4 sm:$0xff] %v783
  %v813 = vld.sshfl [vmem:[#allocation1] sm:$0xff pattern:$0x73625140]
  %814 = vrot.lane.b32.xlu0 %v813, 96
  %v815 = vpop.permute.xlu0 %814
  %817 = vst.msk [vmem:[#allocation5] sm:$0x3] %vm15, %v815
  %818 = vst [vmem:[#allocation1] ss:$4 sm:$0xff] %v747
  %v819 = vld.sshfl [vmem:[#allocation1] sm:$0xff pattern:$0x73625140]
  %820 = vrot.lane.b32.xlu0 %v819, 32
  %v821 = vpop.permute.xlu0 %820
  %s823 = scalar_lea.vmem %s3, 6
  %824 = vst.msk [vmem:[%s823] sm:$0x3] %vm15, %v821
  %825 = vst [vmem:[#allocation1] ss:$4 sm:$0xff] %v789
  %v826 = vld.sshfl [vmem:[#allocation1] sm:$0xff pattern:$0x73625140]
  %827 = vrot.lane.b32.xlu0 %v826, 64
  %v828 = vpop.permute.xlu0 %827
  %s830 = scalar_lea.vmem %s3, 8
  %831 = vst.msk [vmem:[%s830] sm:$0x3] %vm221, %v828
  %v832 = vld [vmem:[%s631] sm:$0xf]
  %v833 = vld [vmem:[%s629] sm:$0xf]
  %v834 = vld [vmem:[#allocation2] sm:$0x3]
  %v835 = vpack.c.bf16 %v834, %v834
  %v836 = vld [vmem:[%s1] sm:$0xf]
  %v837 = vld [vmem:[%s1 + $0x4] sm:$0xf]
  %v838 = vld [vmem:[%s1 + $0x8] sm:$0xf]
  %v839 = vld [vmem:[%s1 + $0xc] sm:$0xf]
  %v844 = vunpack.c.l.b16 %v836
  %v845 = vunpack.c.l.b16 %v837
  %v846 = vunpack.c.l.b16 %v838
  %v847 = vunpack.c.l.b16 %v839
  %v848 = vpack.c.b16 %v845, %v844
  %v849 = vpack.c.b16 %v847, %v846
  %v853 = vsel %vm41, %v835, 0
  %855 = vmatpush.bf16.msra.mxu0 0
  %856 = vmatpush.bf16.msra.mxu0 0
  %857 = vmatpush.bf16.msra.mxu0 0
  %858 = vmatpush.bf16.msra.mxu0 0
  %859 = vmatpush.bf16.msra.mxu0 0
  %860 = vmatpush.bf16.msra.mxu0 0
  %861 = vmatpush.bf16.msra.mxu0 %v849
  %862 = vmatpush.bf16.msra.mxu0 %v848
  %863 = vmatmul.bf16.gmra.mxu0 %v853
  %v864 = vpop.f32.mrf.mxu0
  %v865 = vadd.f32 0.0, %v864
  %v866 = vpop.f32.mrf.mxu0
  %867 = vdwg.mxu0
  %v868 = vadd.f32 %v832, %v865
  %v869 = vld [vmem:[#allocation4] sm:$0x3]
  %v870 = vpack.c.bf16 %v869, %v869
  %v871 = vld [vmem:[%s2] sm:$0xf]
  %v872 = vld [vmem:[%s2 + $0x4] sm:$0xf]
  %v873 = vld [vmem:[%s2 + $0x8] sm:$0xf]
  %v874 = vld [vmem:[%s2 + $0xc] sm:$0xf]
  %v879 = vunpack.c.l.b16 %v871
  %v880 = vunpack.c.l.b16 %v872
  %v881 = vunpack.c.l.b16 %v873
  %v882 = vunpack.c.l.b16 %v874
  %v883 = vpack.c.b16 %v880, %v879
  %v884 = vpack.c.b16 %v882, %v881
  %v888 = vsel %vm41, %v870, 0
  %890 = vmatpush.bf16.msra.mxu0 0
  %891 = vmatpush.bf16.msra.mxu0 0
  %892 = vmatpush.bf16.msra.mxu0 0
  %893 = vmatpush.bf16.msra.mxu0 0
  %894 = vmatpush.bf16.msra.mxu0 0
  %895 = vmatpush.bf16.msra.mxu0 0
  %896 = vmatpush.bf16.msra.mxu0 %v884
  %897 = vmatpush.bf16.msra.mxu0 %v883
  %898 = vmatmul.bf16.gmra.mxu0 %v888
  %v899 = vpop.f32.mrf.mxu0
  %v900 = vadd.f32 0.0, %v899
  %v901 = vpop.f32.mrf.mxu0
  %902 = vdwg.mxu0
  %v904 = vrot.slane %v833, 2
  %v906 = vadd.f32 %v904, %v900
  %v907 = vld [vmem:[#allocation3] sm:$0x3]
  %v908 = vxor.u32 %v868, 2147483648
  %v909 = vmul.f32 %v908, 1.442695
  %v910 = vpow.pop %v909
  %v911 = vadd.f32 %v910, 1.0
  %v912 = vrcp.pop %v911
  %v913 = vmul.f32 %v911, %v912
  %v914 = vsub.f32 1.0, %v913
  %v915 = vmul.f32 %v912, %v914
  %v916 = vadd.f32 %v912, %v915
  %vm917 = vweird.f32 %v911
  %vm918 = vweird.f32 %v912
  %vm919 = vmor %vm917, %vm918
  %v920 = vsel %vm919, %v912, %v916
  %v921 = vand.u32 2147483647, %v911
  %vm922 = vcmp.eq.f32.partialorder %v921, 8.507059e+37
  %v923 = vand.u32 %v911, 2147483648
  %v924 = vor.u32 1.1754944e-38, %v923
  %v925 = vsel %vm922, %v924, %v920
  %v926 = vmul.f32 1.0, %v925
  %v927 = vtanh.pop %v868
  %929 = vrot.lane.b32.xlu0 %v907, 32
  %v930 = vpop.permute.xlu0 %929
  %v932 = vmul.f32 %v926, %v930
  %934 = vrot.lane.b32.xlu0 %v927, 64
  %v935 = vpop.permute.xlu0 %934
  %v937 = vmul.f32 %v926, %v935
  %939 = vrot.lane.b32.xlu0 %v937, 32
  %v940 = vpop.permute.xlu0 %939
  %v942 = vadd.f32 %v932, %v940
  %v943 = vtanh.pop %v942
  %945 = vrot.lane.b32.xlu0 %v943, 64
  %v946 = vpop.permute.xlu0 %945
  %v948 = vmul.f32 %v926, %v946
  %v949 = vld [vmem:[#allocation5] sm:$0x3]
  %v950 = vxor.u32 %v906, 2147483648
  %v951 = vmul.f32 %v950, 1.442695
  %v952 = vpow.pop %v951
  %v953 = vadd.f32 %v952, 1.0
  %v954 = vrcp.pop %v953
  %v955 = vmul.f32 %v953, %v954
  %v956 = vsub.f32 1.0, %v955
  %v957 = vmul.f32 %v954, %v956
  %v958 = vadd.f32 %v954, %v957
  %vm959 = vweird.f32 %v953
  %vm960 = vweird.f32 %v954
  %vm961 = vmor %vm959, %vm960
  %v962 = vsel %vm961, %v954, %v958
  %v963 = vand.u32 2147483647, %v953
  %vm964 = vcmp.eq.f32.partialorder %v963, 8.507059e+37
  %v965 = vand.u32 %v953, 2147483648
  %v966 = vor.u32 1.1754944e-38, %v965
  %v967 = vsel %vm964, %v966, %v962
  %v968 = vmul.f32 1.0, %v967
  %v969 = vtanh.pop %v906
  %971 = vrot.lane.b32.xlu0 %v949, 32
  %v972 = vpop.permute.xlu0 %971
  %v974 = vmul.f32 %v968, %v972
  %976 = vrot.lane.b32.xlu0 %v969, 64
  %v977 = vpop.permute.xlu0 %976
  %v979 = vmul.f32 %v968, %v977
  %981 = vrot.lane.b32.xlu0 %v979, 32
  %v982 = vpop.permute.xlu0 %981
  %v984 = vadd.f32 %v974, %v982
  %v985 = vtanh.pop %v984
  %987 = vrot.lane.b32.xlu0 %v985, 64
  %v988 = vpop.permute.xlu0 %987
  %v990 = vmul.f32 %v968, %v988
  %992 = vst [vmem:[#allocation1] ss:$4 sm:$0xff] %v948
  %v993 = vld.sshfl [vmem:[#allocation1] sm:$0xff pattern:$0x73625140]
  %994 = vrot.lane.b32.xlu0 %v993, 32
  %v995 = vpop.permute.xlu0 %994
  %997 = vst.msk [vmem:[#allocation2] sm:$0x3] %vm15, %v995
  %999 = vst [vmem:[#allocation1] ss:$4 sm:$0xff] %v942
  %v1000 = vld.sshfl [vmem:[#allocation1] sm:$0xff pattern:$0x73625140]
  %1001 = vrot.lane.b32.xlu0 %v1000, 96
  %v1002 = vpop.permute.xlu0 %1001
  %1004 = vst.msk [vmem:[#allocation3] sm:$0x3] %vm15, %v1002
  %1006 = vst [vmem:[#allocation1] ss:$4 sm:$0xff] %v990
  %v1007 = vld.sshfl [vmem:[#allocation1] sm:$0xff pattern:$0x73625140]
  %1008 = vrot.lane.b32.xlu0 %v1007, 32
  %v1009 = vpop.permute.xlu0 %1008
  %1011 = vst.msk [vmem:[#allocation4] sm:$0x3] %vm15, %v1009
  %1013 = vst [vmem:[#allocation1] ss:$4 sm:$0xff] %v984
  %v1014 = vld.sshfl [vmem:[#allocation1] sm:$0xff pattern:$0x73625140]
  %1015 = vrot.lane.b32.xlu0 %v1014, 96
  %v1016 = vpop.permute.xlu0 %1015
  %1018 = vst.msk [vmem:[#allocation5] sm:$0x3] %vm15, %v1016
  %1019 = vst [vmem:[#allocation1] ss:$4 sm:$0xff] %v948
  %v1020 = vld.sshfl [vmem:[#allocation1] sm:$0xff pattern:$0x73625140]
  %1021 = vrot.lane.b32.xlu0 %v1020, 32
  %v1022 = vpop.permute.xlu0 %1021
  %1024 = vst.msk [vmem:[%s830] sm:$0x3] %vm15, %v1022
  %1025 = vst [vmem:[#allocation1] ss:$4 sm:$0xff] %v990
  %v1026 = vld.sshfl [vmem:[#allocation1] sm:$0xff pattern:$0x73625140]
  %1027 = vrot.lane.b32.xlu0 %v1026, 64
  %v1028 = vpop.permute.xlu0 %1027
  %1030 = vst.msk [vmem:[%s823] sm:$0x3] %vm221, %v1028
  %v1031 = vld [vmem:[%s428] sm:$0xf]
  %v1032 = vld [vmem:[%s426] sm:$0xf]
  %v1033 = vld [vmem:[#allocation2] sm:$0x3]
  %v1034 = vpack.c.bf16 %v1033, %v1033
  %v1035 = vld [vmem:[%s1] sm:$0xf]
  %v1036 = vld [vmem:[%s1 + $0x4] sm:$0xf]
  %v1037 = vld [vmem:[%s1 + $0x8] sm:$0xf]
  %v1038 = vld [vmem:[%s1 + $0xc] sm:$0xf]
  %v1043 = vunpack.c.l.b16 %v1035
  %v1044 = vunpack.c.l.b16 %v1036
  %v1045 = vunpack.c.l.b16 %v1037
  %v1046 = vunpack.c.l.b16 %v1038
  %v1047 = vpack.c.b16 %v1044, %v1043
  %v1048 = vpack.c.b16 %v1046, %v1045
  %v1052 = vsel %vm41, %v1034, 0
  %1054 = vmatpush.bf16.msra.mxu0 0
  %1055 = vmatpush.bf16.msra.mxu0 0
  %1056 = vmatpush.bf16.msra.mxu0 0
  %1057 = vmatpush.bf16.msra.mxu0 0
  %1058 = vmatpush.bf16.msra.mxu0 0
  %1059 = vmatpush.bf16.msra.mxu0 0
  %1060 = vmatpush.bf16.msra.mxu0 %v1048
  %1061 = vmatpush.bf16.msra.mxu0 %v1047
  %1062 = vmatmul.bf16.gmra.mxu0 %v1052
  %v1063 = vpop.f32.mrf.mxu0
  %v1064 = vadd.f32 0.0, %v1063
  %v1065 = vpop.f32.mrf.mxu0
  %1066 = vdwg.mxu0
  %v1067 = vadd.f32 %v1031, %v1064
  %v1068 = vld [vmem:[#allocation4] sm:$0x3]
  %v1069 = vpack.c.bf16 %v1068, %v1068
  %v1070 = vld [vmem:[%s2] sm:$0xf]
  %v1071 = vld [vmem:[%s2 + $0x4] sm:$0xf]
  %v1072 = vld [vmem:[%s2 + $0x8] sm:$0xf]
  %v1073 = vld [vmem:[%s2 + $0xc] sm:$0xf]
  %v1078 = vunpack.c.l.b16 %v1070
  %v1079 = vunpack.c.l.b16 %v1071
  %v1080 = vunpack.c.l.b16 %v1072
  %v1081 = vunpack.c.l.b16 %v1073
  %v1082 = vpack.c.b16 %v1079, %v1078
  %v1083 = vpack.c.b16 %v1081, %v1080
  %v1087 = vsel %vm41, %v1069, 0
  %1089 = vmatpush.bf16.msra.mxu0 0
  %1090 = vmatpush.bf16.msra.mxu0 0
  %1091 = vmatpush.bf16.msra.mxu0 0
  %1092 = vmatpush.bf16.msra.mxu0 0
  %1093 = vmatpush.bf16.msra.mxu0 0
  %1094 = vmatpush.bf16.msra.mxu0 0
  %1095 = vmatpush.bf16.msra.mxu0 %v1083
  %1096 = vmatpush.bf16.msra.mxu0 %v1082
  %1097 = vmatmul.bf16.gmra.mxu0 %v1087
  %v1098 = vpop.f32.mrf.mxu0
  %v1099 = vadd.f32 0.0, %v1098
  %v1100 = vpop.f32.mrf.mxu0
  %1101 = vdwg.mxu0
  %v1103 = vrot.slane %v1032, 2
  %v1105 = vadd.f32 %v1103, %v1099
  %v1106 = vld [vmem:[#allocation3] sm:$0x3]
  %v1107 = vxor.u32 %v1067, 2147483648
  %v1108 = vmul.f32 %v1107, 1.442695
  %v1109 = vpow.pop %v1108
  %v1110 = vadd.f32 %v1109, 1.0
  %v1111 = vrcp.pop %v1110
  %v1112 = vmul.f32 %v1110, %v1111
  %v1113 = vsub.f32 1.0, %v1112
  %v1114 = vmul.f32 %v1111, %v1113
  %v1115 = vadd.f32 %v1111, %v1114
  %vm1116 = vweird.f32 %v1110
  %vm1117 = vweird.f32 %v1111
  %vm1118 = vmor %vm1116, %vm1117
  %v1119 = vsel %vm1118, %v1111, %v1115
  %v1120 = vand.u32 2147483647, %v1110
  %vm1121 = vcmp.eq.f32.partialorder %v1120, 8.507059e+37
  %v1122 = vand.u32 %v1110, 2147483648
  %v1123 = vor.u32 1.1754944e-38, %v1122
  %v1124 = vsel %vm1121, %v1123, %v1119
  %v1125 = vmul.f32 1.0, %v1124
  %v1126 = vtanh.pop %v1067
  %1128 = vrot.lane.b32.xlu0 %v1106, 32
  %v1129 = vpop.permute.xlu0 %1128
  %v1131 = vmul.f32 %v1125, %v1129
  %1133 = vrot.lane.b32.xlu0 %v1126, 64
  %v1134 = vpop.permute.xlu0 %1133
  %v1136 = vmul.f32 %v1125, %v1134
  %1138 = vrot.lane.b32.xlu0 %v1136, 32
  %v1139 = vpop.permute.xlu0 %1138
  %v1141 = vadd.f32 %v1131, %v1139
  %v1142 = vtanh.pop %v1141
  %1144 = vrot.lane.b32.xlu0 %v1142, 64
  %v1145 = vpop.permute.xlu0 %1144
  %v1147 = vmul.f32 %v1125, %v1145
  %v1148 = vld [vmem:[#allocation5] sm:$0x3]
  %v1149 = vxor.u32 %v1105, 2147483648
  %v1150 = vmul.f32 %v1149, 1.442695
  %v1151 = vpow.pop %v1150
  %v1152 = vadd.f32 %v1151, 1.0
  %v1153 = vrcp.pop %v1152
  %v1154 = vmul.f32 %v1152, %v1153
  %v1155 = vsub.f32 1.0, %v1154
  %v1156 = vmul.f32 %v1153, %v1155
  %v1157 = vadd.f32 %v1153, %v1156
  %vm1158 = vweird.f32 %v1152
  %vm1159 = vweird.f32 %v1153
  %vm1160 = vmor %vm1158, %vm1159
  %v1161 = vsel %vm1160, %v1153, %v1157
  %v1162 = vand.u32 2147483647, %v1152
  %vm1163 = vcmp.eq.f32.partialorder %v1162, 8.507059e+37
  %v1164 = vand.u32 %v1152, 2147483648
  %v1165 = vor.u32 1.1754944e-38, %v1164
  %v1166 = vsel %vm1163, %v1165, %v1161
  %v1167 = vmul.f32 1.0, %v1166
  %v1168 = vtanh.pop %v1105
  %1170 = vrot.lane.b32.xlu0 %v1148, 32
  %v1171 = vpop.permute.xlu0 %1170
  %v1173 = vmul.f32 %v1167, %v1171
  %1175 = vrot.lane.b32.xlu0 %v1168, 64
  %v1176 = vpop.permute.xlu0 %1175
  %v1178 = vmul.f32 %v1167, %v1176
  %1180 = vrot.lane.b32.xlu0 %v1178, 32
  %v1181 = vpop.permute.xlu0 %1180
  %v1183 = vadd.f32 %v1173, %v1181
  %v1184 = vtanh.pop %v1183
  %1186 = vrot.lane.b32.xlu0 %v1184, 64
  %v1187 = vpop.permute.xlu0 %1186
  %v1189 = vmul.f32 %v1167, %v1187
  %1191 = vst [vmem:[#allocation1] ss:$4 sm:$0xff] %v1147
  %v1192 = vld.sshfl [vmem:[#allocation1] sm:$0xff pattern:$0x73625140]
  %1193 = vrot.lane.b32.xlu0 %v1192, 32
  %v1194 = vpop.permute.xlu0 %1193
  %1196 = vst.msk [vmem:[#allocation2] sm:$0x3] %vm15, %v1194
  %1198 = vst [vmem:[#allocation1] ss:$4 sm:$0xff] %v1141
  %v1199 = vld.sshfl [vmem:[#allocation1] sm:$0xff pattern:$0x73625140]
  %1200 = vrot.lane.b32.xlu0 %v1199, 96
  %v1201 = vpop.permute.xlu0 %1200
  %1203 = vst.msk [vmem:[#allocation3] sm:$0x3] %vm15, %v1201
  %1205 = vst [vmem:[#allocation1] ss:$4 sm:$0xff] %v1189
  %v1206 = vld.sshfl [vmem:[#allocation1] sm:$0xff pattern:$0x73625140]
  %1207 = vrot.lane.b32.xlu0 %v1206, 32
  %v1208 = vpop.permute.xlu0 %1207
  %1210 = vst.msk [vmem:[#allocation4] sm:$0x3] %vm15, %v1208
  %1212 = vst [vmem:[#allocation1] ss:$4 sm:$0xff] %v1183
  %v1213 = vld.sshfl [vmem:[#allocation1] sm:$0xff pattern:$0x73625140]
  %1214 = vrot.lane.b32.xlu0 %v1213, 96
  %v1215 = vpop.permute.xlu0 %1214
  %1217 = vst.msk [vmem:[#allocation5] sm:$0x3] %vm15, %v1215
  %1218 = vst [vmem:[#allocation1] ss:$4 sm:$0xff] %v1147
  %v1219 = vld.sshfl [vmem:[#allocation1] sm:$0xff pattern:$0x73625140]
  %1220 = vrot.lane.b32.xlu0 %v1219, 32
  %v1221 = vpop.permute.xlu0 %1220
  %1223 = vst.msk [vmem:[%s627] sm:$0x3] %vm15, %v1221
  %1224 = vst [vmem:[#allocation1] ss:$4 sm:$0xff] %v1189
  %v1225 = vld.sshfl [vmem:[#allocation1] sm:$0xff pattern:$0x73625140]
  %1226 = vrot.lane.b32.xlu0 %v1225, 64
  %v1227 = vpop.permute.xlu0 %1226
  %1229 = vst.msk [vmem:[%s620] sm:$0x3] %vm221, %v1227
  %v1230 = vld [vmem:[%s225] sm:$0xf]
  %v1231 = vld [vmem:[%s223] sm:$0xf]
  %v1232 = vld [vmem:[#allocation2] sm:$0x3]
  %v1233 = vpack.c.bf16 %v1232, %v1232
  %v1234 = vld [vmem:[%s1] sm:$0xf]
  %v1235 = vld [vmem:[%s1 + $0x4] sm:$0xf]
  %v1236 = vld [vmem:[%s1 + $0x8] sm:$0xf]
  %v1237 = vld [vmem:[%s1 + $0xc] sm:$0xf]
  %v1242 = vunpack.c.l.b16 %v1234
  %v1243 = vunpack.c.l.b16 %v1235
  %v1244 = vunpack.c.l.b16 %v1236
  %v1245 = vunpack.c.l.b16 %v1237
  %v1246 = vpack.c.b16 %v1243, %v1242
  %v1247 = vpack.c.b16 %v1245, %v1244
  %v1251 = vsel %vm41, %v1233, 0
  %1253 = vmatpush.bf16.msra.mxu0 0
  %1254 = vmatpush.bf16.msra.mxu0 0
  %1255 = vmatpush.bf16.msra.mxu0 0
  %1256 = vmatpush.bf16.msra.mxu0 0
  %1257 = vmatpush.bf16.msra.mxu0 0
  %1258 = vmatpush.bf16.msra.mxu0 0
  %1259 = vmatpush.bf16.msra.mxu0 %v1247
  %1260 = vmatpush.bf16.msra.mxu0 %v1246
  %1261 = vmatmul.bf16.gmra.mxu0 %v1251
  %v1262 = vpop.f32.mrf.mxu0
  %v1263 = vadd.f32 0.0, %v1262
  %v1264 = vpop.f32.mrf.mxu0
  %1265 = vdwg.mxu0
  %v1266 = vadd.f32 %v1230, %v1263
  %v1267 = vld [vmem:[#allocation4] sm:$0x3]
  %v1268 = vpack.c.bf16 %v1267, %v1267
  %v1269 = vld [vmem:[%s2] sm:$0xf]
  %v1270 = vld [vmem:[%s2 + $0x4] sm:$0xf]
  %v1271 = vld [vmem:[%s2 + $0x8] sm:$0xf]
  %v1272 = vld [vmem:[%s2 + $0xc] sm:$0xf]
  %v1277 = vunpack.c.l.b16 %v1269
  %v1278 = vunpack.c.l.b16 %v1270
  %v1279 = vunpack.c.l.b16 %v1271
  %v1280 = vunpack.c.l.b16 %v1272
  %v1281 = vpack.c.b16 %v1278, %v1277
  %v1282 = vpack.c.b16 %v1280, %v1279
  %v1286 = vsel %vm41, %v1268, 0
  %1288 = vmatpush.bf16.msra.mxu0 0
  %1289 = vmatpush.bf16.msra.mxu0 0
  %1290 = vmatpush.bf16.msra.mxu0 0
  %1291 = vmatpush.bf16.msra.mxu0 0
  %1292 = vmatpush.bf16.msra.mxu0 0
  %1293 = vmatpush.bf16.msra.mxu0 0
  %1294 = vmatpush.bf16.msra.mxu0 %v1282
  %1295 = vmatpush.bf16.msra.mxu0 %v1281
  %1296 = vmatmul.bf16.gmra.mxu0 %v1286
  %v1297 = vpop.f32.mrf.mxu0
  %v1298 = vadd.f32 0.0, %v1297
  %v1299 = vpop.f32.mrf.mxu0
  %1300 = vdwg.mxu0
  %v1302 = vrot.slane %v1231, 2
  %v1304 = vadd.f32 %v1302, %v1298
  %v1305 = vld [vmem:[#allocation3] sm:$0x3]
  %v1306 = vxor.u32 %v1266, 2147483648
  %v1307 = vmul.f32 %v1306, 1.442695
  %v1308 = vpow.pop %v1307
  %v1309 = vadd.f32 %v1308, 1.0
  %v1310 = vrcp.pop %v1309
  %v1311 = vmul.f32 %v1309, %v1310
  %v1312 = vsub.f32 1.0, %v1311
  %v1313 = vmul.f32 %v1310, %v1312
  %v1314 = vadd.f32 %v1310, %v1313
  %vm1315 = vweird.f32 %v1309
  %vm1316 = vweird.f32 %v1310
  %vm1317 = vmor %vm1315, %vm1316
  %v1318 = vsel %vm1317, %v1310, %v1314
  %v1319 = vand.u32 2147483647, %v1309
  %vm1320 = vcmp.eq.f32.partialorder %v1319, 8.507059e+37
  %v1321 = vand.u32 %v1309, 2147483648
  %v1322 = vor.u32 1.1754944e-38, %v1321
  %v1323 = vsel %vm1320, %v1322, %v1318
  %v1324 = vmul.f32 1.0, %v1323
  %v1325 = vtanh.pop %v1266
  %1327 = vrot.lane.b32.xlu0 %v1305, 32
  %v1328 = vpop.permute.xlu0 %1327
  %v1330 = vmul.f32 %v1324, %v1328
  %1332 = vrot.lane.b32.xlu0 %v1325, 64
  %v1333 = vpop.permute.xlu0 %1332
  %v1335 = vmul.f32 %v1324, %v1333
  %1337 = vrot.lane.b32.xlu0 %v1335, 32
  %v1338 = vpop.permute.xlu0 %1337
  %v1340 = vadd.f32 %v1330, %v1338
  %v1341 = vtanh.pop %v1340
  %1343 = vrot.lane.b32.xlu0 %v1341, 64
  %v1344 = vpop.permute.xlu0 %1343
  %v1346 = vmul.f32 %v1324, %v1344
  %v1347 = vld [vmem:[#allocation5] sm:$0x3]
  %v1348 = vxor.u32 %v1304, 2147483648
  %v1349 = vmul.f32 %v1348, 1.442695
  %v1350 = vpow.pop %v1349
  %v1351 = vadd.f32 %v1350, 1.0
  %v1352 = vrcp.pop %v1351
  %v1353 = vmul.f32 %v1351, %v1352
  %v1354 = vsub.f32 1.0, %v1353
  %v1355 = vmul.f32 %v1352, %v1354
  %v1356 = vadd.f32 %v1352, %v1355
  %vm1357 = vweird.f32 %v1351
  %vm1358 = vweird.f32 %v1352
  %vm1359 = vmor %vm1357, %vm1358
  %v1360 = vsel %vm1359, %v1352, %v1356
  %v1361 = vand.u32 2147483647, %v1351
  %vm1362 = vcmp.eq.f32.partialorder %v1361, 8.507059e+37
  %v1363 = vand.u32 %v1351, 2147483648
  %v1364 = vor.u32 1.1754944e-38, %v1363
  %v1365 = vsel %vm1362, %v1364, %v1360
  %v1366 = vmul.f32 1.0, %v1365
  %v1367 = vtanh.pop %v1304
  %1369 = vrot.lane.b32.xlu0 %v1347, 32
  %v1370 = vpop.permute.xlu0 %1369
  %v1372 = vmul.f32 %v1366, %v1370
  %1374 = vrot.lane.b32.xlu0 %v1367, 64
  %v1375 = vpop.permute.xlu0 %1374
  %v1377 = vmul.f32 %v1366, %v1375
  %1379 = vrot.lane.b32.xlu0 %v1377, 32
  %v1380 = vpop.permute.xlu0 %1379
  %v1382 = vadd.f32 %v1372, %v1380
  %v1383 = vtanh.pop %v1382
  %1385 = vrot.lane.b32.xlu0 %v1383, 64
  %v1386 = vpop.permute.xlu0 %1385
  %v1388 = vmul.f32 %v1366, %v1386
  %1390 = vst [vmem:[#allocation1] ss:$4 sm:$0xff] %v1346
  %v1391 = vld.sshfl [vmem:[#allocation1] sm:$0xff pattern:$0x73625140]
  %1392 = vrot.lane.b32.xlu0 %v1391, 32
  %v1393 = vpop.permute.xlu0 %1392
  %1395 = vst.msk [vmem:[#allocation2] sm:$0x3] %vm15, %v1393
  %1397 = vst [vmem:[#allocation1] ss:$4 sm:$0xff] %v1340
  %v1398 = vld.sshfl [vmem:[#allocation1] sm:$0xff pattern:$0x73625140]
  %1399 = vrot.lane.b32.xlu0 %v1398, 96
  %v1400 = vpop.permute.xlu0 %1399
  %1402 = vst.msk [vmem:[#allocation3] sm:$0x3] %vm15, %v1400
  %1404 = vst [vmem:[#allocation1] ss:$4 sm:$0xff] %v1388
  %v1405 = vld.sshfl [vmem:[#allocation1] sm:$0xff pattern:$0x73625140]
  %1406 = vrot.lane.b32.xlu0 %v1405, 32
  %v1407 = vpop.permute.xlu0 %1406
  %1409 = vst.msk [vmem:[#allocation4] sm:$0x3] %vm15, %v1407
  %1411 = vst [vmem:[#allocation1] ss:$4 sm:$0xff] %v1382
  %v1412 = vld.sshfl [vmem:[#allocation1] sm:$0xff pattern:$0x73625140]
  %1413 = vrot.lane.b32.xlu0 %v1412, 96
  %v1414 = vpop.permute.xlu0 %1413
  %1416 = vst.msk [vmem:[#allocation5] sm:$0x3] %vm15, %v1414
  %1417 = vst [vmem:[#allocation1] ss:$4 sm:$0xff] %v1346
  %v1418 = vld.sshfl [vmem:[#allocation1] sm:$0xff pattern:$0x73625140]
  %1419 = vrot.lane.b32.xlu0 %v1418, 32
  %v1420 = vpop.permute.xlu0 %1419
  %1422 = vst.msk [vmem:[%s424] sm:$0x3] %vm15, %v1420
  %1423 = vst [vmem:[#allocation1] ss:$4 sm:$0xff] %v1388
  %v1424 = vld.sshfl [vmem:[#allocation1] sm:$0xff pattern:$0x73625140]
  %1425 = vrot.lane.b32.xlu0 %v1424, 64
  %v1426 = vpop.permute.xlu0 %1425
  %1428 = vst.msk [vmem:[%s417] sm:$0x3] %vm221, %v1426
  %v1429 = vld [vmem:[%s21] sm:$0xf]
  %v1430 = vld [vmem:[%s0] sm:$0xf]
  %v1431 = vld [vmem:[#allocation2] sm:$0x3]
  %v1432 = vpack.c.bf16 %v1431, %v1431
  %v1433 = vld [vmem:[%s1] sm:$0xf]
  %v1434 = vld [vmem:[%s1 + $0x4] sm:$0xf]
  %v1435 = vld [vmem:[%s1 + $0x8] sm:$0xf]
  %v1436 = vld [vmem:[%s1 + $0xc] sm:$0xf]
  %v1441 = vunpack.c.l.b16 %v1433
  %v1442 = vunpack.c.l.b16 %v1434
  %v1443 = vunpack.c.l.b16 %v1435
  %v1444 = vunpack.c.l.b16 %v1436
  %v1445 = vpack.c.b16 %v1442, %v1441
  %v1446 = vpack.c.b16 %v1444, %v1443
  %v1450 = vsel %vm41, %v1432, 0
  %1452 = vmatpush.bf16.msra.mxu0 0
  %1453 = vmatpush.bf16.msra.mxu0 0
  %1454 = vmatpush.bf16.msra.mxu0 0
  %1455 = vmatpush.bf16.msra.mxu0 0
  %1456 = vmatpush.bf16.msra.mxu0 0
  %1457 = vmatpush.bf16.msra.mxu0 0
  %1458 = vmatpush.bf16.msra.mxu0 %v1446
  %1459 = vmatpush.bf16.msra.mxu0 %v1445
  %1460 = vmatmul.bf16.gmra.mxu0 %v1450
  %v1461 = vpop.f32.mrf.mxu0
  %v1462 = vadd.f32 0.0, %v1461
  %v1463 = vpop.f32.mrf.mxu0
  %1464 = vdwg.mxu0
  %v1465 = vadd.f32 %v1429, %v1462
  %v1466 = vld [vmem:[#allocation4] sm:$0x3]
  %v1467 = vpack.c.bf16 %v1466, %v1466
  %v1468 = vld [vmem:[%s2] sm:$0xf]
  %v1469 = vld [vmem:[%s2 + $0x4] sm:$0xf]
  %v1470 = vld [vmem:[%s2 + $0x8] sm:$0xf]
  %v1471 = vld [vmem:[%s2 + $0xc] sm:$0xf]
  %v1476 = vunpack.c.l.b16 %v1468
  %v1477 = vunpack.c.l.b16 %v1469
  %v1478 = vunpack.c.l.b16 %v1470
  %v1479 = vunpack.c.l.b16 %v1471
  %v1480 = vpack.c.b16 %v1477, %v1476
  %v1481 = vpack.c.b16 %v1479, %v1478
  %v1485 = vsel %vm41, %v1467, 0
  %1487 = vmatpush.bf16.msra.mxu0 0
  %1488 = vmatpush.bf16.msra.mxu0 0
  %1489 = vmatpush.bf16.msra.mxu0 0
  %1490 = vmatpush.bf16.msra.mxu0 0
  %1491 = vmatpush.bf16.msra.mxu0 0
  %1492 = vmatpush.bf16.msra.mxu0 0
  %1493 = vmatpush.bf16.msra.mxu0 %v1481
  %1494 = vmatpush.bf16.msra.mxu0 %v1480
  %1495 = vmatmul.bf16.gmra.mxu0 %v1485
  %v1496 = vpop.f32.mrf.mxu0
  %v1497 = vadd.f32 0.0, %v1496
  %v1498 = vpop.f32.mrf.mxu0
  %1499 = vdwg.mxu0
  %v1501 = vrot.slane %v1430, 2
  %v1503 = vadd.f32 %v1501, %v1497
  %v1504 = vld [vmem:[#allocation3] sm:$0x3]
  %v1505 = vxor.u32 %v1465, 2147483648
  %v1506 = vmul.f32 %v1505, 1.442695
  %v1507 = vpow.pop %v1506
  %v1508 = vadd.f32 %v1507, 1.0
  %v1509 = vrcp.pop %v1508
  %v1510 = vmul.f32 %v1508, %v1509
  %v1511 = vsub.f32 1.0, %v1510
  %v1512 = vmul.f32 %v1509, %v1511
  %v1513 = vadd.f32 %v1509, %v1512
  %vm1514 = vweird.f32 %v1508
  %vm1515 = vweird.f32 %v1509
  %vm1516 = vmor %vm1514, %vm1515
  %v1517 = vsel %vm1516, %v1509, %v1513
  %v1518 = vand.u32 2147483647, %v1508
  %vm1519 = vcmp.eq.f32.partialorder %v1518, 8.507059e+37
  %v1520 = vand.u32 %v1508, 2147483648
  %v1521 = vor.u32 1.1754944e-38, %v1520
  %v1522 = vsel %vm1519, %v1521, %v1517
  %v1523 = vmul.f32 1.0, %v1522
  %v1524 = vtanh.pop %v1465
  %1526 = vrot.lane.b32.xlu0 %v1504, 32
  %v1527 = vpop.permute.xlu0 %1526
  %v1529 = vmul.f32 %v1523, %v1527
  %1531 = vrot.lane.b32.xlu0 %v1524, 64
  %v1532 = vpop.permute.xlu0 %1531
  %v1534 = vmul.f32 %v1523, %v1532
  %1536 = vrot.lane.b32.xlu0 %v1534, 32
  %v1537 = vpop.permute.xlu0 %1536
  %v1539 = vadd.f32 %v1529, %v1537
  %v1540 = vtanh.pop %v1539
  %1542 = vrot.lane.b32.xlu0 %v1540, 64
  %v1543 = vpop.permute.xlu0 %1542
  %v1545 = vmul.f32 %v1523, %v1543
  %v1546 = vld [vmem:[#allocation5] sm:$0x3]
  %v1547 = vxor.u32 %v1503, 2147483648
  %v1548 = vmul.f32 %v1547, 1.442695
  %v1549 = vpow.pop %v1548
  %v1550 = vadd.f32 %v1549, 1.0
  %v1551 = vrcp.pop %v1550
  %v1552 = vmul.f32 %v1550, %v1551
  %v1553 = vsub.f32 1.0, %v1552
  %v1554 = vmul.f32 %v1551, %v1553
  %v1555 = vadd.f32 %v1551, %v1554
  %vm1556 = vweird.f32 %v1550
  %vm1557 = vweird.f32 %v1551
  %vm1558 = vmor %vm1556, %vm1557
  %v1559 = vsel %vm1558, %v1551, %v1555
  %v1560 = vand.u32 2147483647, %v1550
  %vm1561 = vcmp.eq.f32.partialorder %v1560, 8.507059e+37
  %v1562 = vand.u32 %v1550, 2147483648
  %v1563 = vor.u32 1.1754944e-38, %v1562
  %v1564 = vsel %vm1561, %v1563, %v1559
  %v1565 = vmul.f32 1.0, %v1564
  %v1566 = vtanh.pop %v1503
  %1568 = vrot.lane.b32.xlu0 %v1546, 32
  %v1569 = vpop.permute.xlu0 %1568
  %v1571 = vmul.f32 %v1565, %v1569
  %1573 = vrot.lane.b32.xlu0 %v1566, 64
  %v1574 = vpop.permute.xlu0 %1573
  %v1576 = vmul.f32 %v1565, %v1574
  %1578 = vrot.lane.b32.xlu0 %v1576, 32
  %v1579 = vpop.permute.xlu0 %1578
  %v1581 = vadd.f32 %v1571, %v1579
  %v1582 = vtanh.pop %v1581
  %1584 = vrot.lane.b32.xlu0 %v1582, 64
  %v1585 = vpop.permute.xlu0 %1584
  %v1587 = vmul.f32 %v1565, %v1585
  %1589 = vst [vmem:[#allocation1] ss:$4 sm:$0xff] %v1545
  %v1590 = vld.sshfl [vmem:[#allocation1] sm:$0xff pattern:$0x73625140]
  %1591 = vrot.lane.b32.xlu0 %v1590, 32
  %v1592 = vpop.permute.xlu0 %1591
  %1594 = vst.msk [vmem:[#allocation2] sm:$0x3] %vm15, %v1592
  %1596 = vst [vmem:[#allocation1] ss:$4 sm:$0xff] %v1539
  %v1597 = vld.sshfl [vmem:[#allocation1] sm:$0xff pattern:$0x73625140]
  %1598 = vrot.lane.b32.xlu0 %v1597, 96
  %v1599 = vpop.permute.xlu0 %1598
  %1601 = vst.msk [vmem:[#allocation3] sm:$0x3] %vm15, %v1599
  %1603 = vst [vmem:[#allocation1] ss:$4 sm:$0xff] %v1587
  %v1604 = vld.sshfl [vmem:[#allocation1] sm:$0xff pattern:$0x73625140]
  %1605 = vrot.lane.b32.xlu0 %v1604, 32
  %v1606 = vpop.permute.xlu0 %1605
  %1608 = vst.msk [vmem:[#allocation4] sm:$0x3] %vm15, %v1606
  %1610 = vst [vmem:[#allocation1] ss:$4 sm:$0xff] %v1581
  %v1611 = vld.sshfl [vmem:[#allocation1] sm:$0xff pattern:$0x73625140]
  %1612 = vrot.lane.b32.xlu0 %v1611, 96
  %v1613 = vpop.permute.xlu0 %1612
  %1615 = vst.msk [vmem:[#allocation5] sm:$0x3] %vm15, %v1613
  %1616 = vst [vmem:[#allocation1] ss:$4 sm:$0xff] %v1545
  %v1617 = vld.sshfl [vmem:[#allocation1] sm:$0xff pattern:$0x73625140]
  %1618 = vrot.lane.b32.xlu0 %v1617, 32
  %v1619 = vpop.permute.xlu0 %1618
  %1621 = vst.msk [vmem:[%s220] sm:$0x3] %vm15, %v1619
  %1622 = vst [vmem:[#allocation1] ss:$4 sm:$0xff] %v1587
  %v1623 = vld.sshfl [vmem:[#allocation1] sm:$0xff pattern:$0x73625140]
  %1624 = vrot.lane.b32.xlu0 %v1623, 64
  %v1625 = vpop.permute.xlu0 %1624
  %1627 = vst.msk [vmem:[%s3] sm:$0x3] %vm221, %v1625
  // Predicated region
  $region14: #{stacked_brnn_forward.6} parent=0 // pred_check
    _
  $region15: #{stacked_brnn_forward.6} parent=0 // pred_check_branch
    %1629 = sbr.rel (0) target = $region17
  $region16: #{stacked_brnn_forward.6} parent=0 // pred_region
    _
  $region17: #{stacked_brnn_forward.6} parent=0 // pred_fallthru
    _
  // Predicated region
  $region18: #{stacked_brnn_forward.6} parent=0 // pred_check
    _
  $region19: #{stacked_brnn_forward.6} parent=0 // pred_check_branch
    %1631 = sbr.rel (0) target = $region21
  $region20: #{stacked_brnn_forward.6} parent=0 // pred_region
    _
  $region21: #{stacked_brnn_forward.6} parent=0 // pred_fallthru
    _

</llo_original>
